<compile_context>
chip_gen: v7x
topology: tpu7x:2x2x1
jax: 0.10.0
libtpu: 0.0.40
codegen_flags: <defaults>
</compile_context>

<pallas_src>
import functools

import jax
import jax.numpy as jnp
from jax.experimental import pallas as pl
from jax.experimental.pallas import tpu as pltpu

NEG_BIG = -9.0e15          # matches -9000000000000000.0 in the reference


def _vmem():
    return pl.BlockSpec(memory_space=pltpu.MemorySpace.VMEM)


def _pick_row_tile(n, cap):
    """Largest row tile (multiple of 32 -> int8-sublane safe) dividing n, else full n."""
    for t in (1024, 512, 256, 128, 64, 32):
        if t <= cap and n % t == 0:
            return t
    return n


def _leaky(x, slope):
    return jnp.where(x > 0, x, slope * x)


# ----------------------------------------------------------------------------
# Per-ConvLayer projection: one matmul for all heads + attention vectors.
#   w_aug = [W_0 | .. | W_{nh-1} | W_0 a1_0 | .. | W_{nh-1} a1_{nh-1}
#                                | W_0 a2_0 | .. | W_{nh-1} a2_{nh-1}]
# so a single x @ w_aug yields every head's h, Wh1 and Wh2 at once.
# ----------------------------------------------------------------------------
def project_heads_kernel(x_ref, w_aug_ref, h_ref, wh1_ref, wh2_ref,
                         *, num_heads, h_dim):
    haug = jnp.dot(x_ref[...], w_aug_ref[...], preferred_element_type=jnp.float32)
    base = num_heads * h_dim
    for k in range(num_heads):
        # h_k stored in bf16: it is only consumed by the att @ h MXU matmul.
        h_ref[k, :, :] = haug[:, k * h_dim:(k + 1) * h_dim].astype(jnp.bfloat16)
    wh1_ref[...] = haug[:, base:base + num_heads]          # Wh1 column per head
    wh2_ref[...] = haug[:, base + num_heads:]              # Wh2 column per head


def project_heads(x, w_aug, *, num_heads, h_dim):
    n = x.shape[0]
    # TODO(synk): for very large N / input_dim this projection should also be row-tiled;
    # it is tiny relative to the [N, N] attention work so it stays fully VMEM-resident here.
    return pl.pallas_call(
        functools.partial(project_heads_kernel, num_heads=num_heads, h_dim=h_dim),
        out_shape=(
            jax.ShapeDtypeStruct((num_heads, n, h_dim), jnp.bfloat16),
            jax.ShapeDtypeStruct((n, num_heads), jnp.float32),
            jax.ShapeDtypeStruct((n, num_heads), jnp.float32),
        ),
        in_specs=[_vmem(), _vmem()],
        out_specs=(_vmem(), _vmem(), _vmem()),
    )(x, w_aug)


# ----------------------------------------------------------------------------
# Row-tiled fused attention layer: both heads + masked softmax + att@h +
# leaky_relu + L2 normalize + bias + mean over heads (+ optional elu).
# ----------------------------------------------------------------------------
def attention_layer_kernel(adj_ref, h_ref, wh1_ref, wh2_ref, b_ref, out_ref,
                           *, alpha, num_heads, apply_elu):
    # int8 adjacency tile -> f32 then compare (keeps mask in the f32 layout).
    mask = adj_ref[...].astype(jnp.float32) > 0.0          # [T, N]
    wh1_all = wh1_ref[...]                                  # [T, nh]
    wh2_all = wh2_ref[...]                                  # [nh, N]

    acc = None
    for k in range(num_heads):
        hk = h_ref[k]                                       # [N, H] bf16
        wh1 = wh1_all[:, k:k + 1]                           # [T, 1]
        wh2 = wh2_all[k:k + 1, :]                           # [1, N]
        e = _leaky(wh1 + wh2, alpha)                        # [T, N]
        att = jnp.where(mask, e, NEG_BIG)
        m = jnp.max(att, axis=1, keepdims=True)
        p = jnp.exp(att - m)
        s = jnp.sum(p, axis=1, keepdims=True)
        att = p * pl.reciprocal(s, approx=True)             # softmax (EUP reciprocal)
        # TODO(synk): F.dropout on the attention matrix skipped (eval semantics)
        hp = jnp.dot(att.astype(jnp.bfloat16), hk,
                     preferred_element_type=jnp.float32)    # [T, H]
        o = _leaky(hp, alpha)
        nrm = jnp.sqrt(jnp.sum(o * o, axis=1, keepdims=True))
        o = o * pl.reciprocal(jnp.maximum(nrm, 1e-12), approx=True)   # F.normalize p=2
        acc = o if acc is None else acc + o

    out = acc * (1.0 / num_heads) + b_ref[...]              # mean over heads + bias
    if apply_elu:
        out = jnp.where(out > 0, out, jnp.exp(jnp.minimum(out, 0.0)) - 1.0)
    out_ref[...] = out


def attention_conv_layer(adj_i8, x, w_aug, b_mean, *, alpha, num_heads, h_dim,
                         apply_elu, max_tile_rows):
    n = x.shape[0]
    h_all, wh1, wh2_cols = project_heads(x, w_aug, num_heads=num_heads, h_dim=h_dim)
    wh2_rows = wh2_cols.T                                   # [nh, N] tiny XLA transpose

    tile = _pick_row_tile(n, max_tile_rows)
    grid = (n // tile,)

    # VMEM budget: double-buffered int8 adj tile + resident h / Wh2 + softmax temps.
    est = (2 * tile * n                                     # adj int8 (2 bufs)
           + 2 * num_heads * n * h_dim * 2                  # h bf16
           + 2 * (tile * num_heads + num_heads * n) * 4     # Wh1 tile + Wh2 rows
           + 2 * tile * h_dim * 4                           # out tile
           + 6 * tile * n * 4)                              # softmax intermediates
    vmem_limit = int(min(max(2 * est, 32 << 20), 48 << 20))

    cost = pl.CostEstimate(
        flops=int(num_heads * (2 * n * n * h_dim + 12 * n * n)),
        transcendentals=int(num_heads * n * n),
        bytes_accessed=int(n * n + num_heads * n * h_dim * 2 + n * h_dim * 4),
    )

    return pl.pallas_call(
        functools.partial(attention_layer_kernel, alpha=alpha,
                          num_heads=num_heads, apply_elu=apply_elu),
        out_shape=jax.ShapeDtypeStruct((n, h_dim), jnp.float32),
        grid=grid,
        in_specs=[
            pl.BlockSpec((tile, n), lambda i: (i, 0)),                  # adj row tile (int8)
            pl.BlockSpec((num_heads, n, h_dim), lambda i: (0, 0, 0)),   # h (resident)
            pl.BlockSpec((tile, num_heads), lambda i: (i, 0)),          # Wh1 row tile
            pl.BlockSpec((num_heads, n), lambda i: (0, 0)),             # Wh2 rows (resident)
            pl.BlockSpec((1, h_dim), lambda i: (0, 0)),                 # mean bias
        ],
        out_specs=pl.BlockSpec((tile, h_dim), lambda i: (i, 0)),
        compiler_params=pltpu.CompilerParams(
            dimension_semantics=("parallel",),       # v7x: split row tiles across both TCs
            vmem_limit_bytes=vmem_limit),
        cost_estimate=cost,
    )(adj_i8, h_all, wh1, wh2_rows, b_mean)


# ----------------------------------------------------------------------------
# Fused tf/target MLP tail: (linear -> leaky_relu) x2 for BOTH branches in one
# kernel, via concatenated first-layer and block-diagonal second-layer weights.
# ----------------------------------------------------------------------------
def mlp_heads_kernel(x_ref, w1_ref, b1_ref, w2_ref, b2_ref, out_ref, *, slope):
    y = jnp.dot(x_ref[...], w1_ref[...], preferred_element_type=jnp.float32) + b1_ref[...]
    y = _leaky(y, slope)
    # TODO(synk): F.dropout(p=0.01) between the linears skipped (deterministic forward)
    z = jnp.dot(y, w2_ref[...], preferred_element_type=jnp.float32) + b2_ref[...]
    out_ref[...] = _leaky(z, slope)


def mlp_heads(embed, w1, b1, w2, b2, *, slope, max_tile_rows):
    n, d_in = embed.shape
    d_mid = w1.shape[1]
    d_out = w2.shape[1]
    tile = _pick_row_tile(n, max_tile_rows)
    grid = (n // tile,)
    return pl.pallas_call(
        functools.partial(mlp_heads_kernel, slope=slope),
        out_shape=jax.ShapeDtypeStruct((n, d_out), jnp.float32),
        grid=grid,
        in_specs=[
            pl.BlockSpec((tile, d_in), lambda i: (i, 0)),
            pl.BlockSpec((d_in, d_mid), lambda i: (0, 0)),
            pl.BlockSpec((1, d_mid), lambda i: (0, 0)),
            pl.BlockSpec((d_mid, d_out), lambda i: (0, 0)),
            pl.BlockSpec((1, d_out), lambda i: (0, 0)),
        ],
        out_specs=pl.BlockSpec((tile, d_out), lambda i: (i, 0)),
        compiler_params=pltpu.CompilerParams(dimension_semantics=("parallel",)),
    )(embed, w1, b1, w2, b2)


# ----------------------------------------------------------------------------
# Parameter init (shapes/init per the torch module) and packing for the kernels.
# ----------------------------------------------------------------------------
def xavier_uniform(key, shape, gain=1.414):
    bound = gain * (6.0 / (shape[0] + shape[1])) ** 0.5
    return jax.random.uniform(key, shape, jnp.float32, -bound, bound)


def init_attention_head(key, in_dim, out_dim):
    k_w, k_a = jax.random.split(key)
    w = xavier_uniform(k_w, (in_dim, out_dim))                 # stored [in, out]
    a_bound = 1.414 * (6.0 / (1 + 2 * out_dim)) ** 0.5          # a: (2*out_dim, 1)
    a = jax.random.uniform(k_a, (2 * out_dim,), jnp.float32, -a_bound, a_bound)
    a1 = a[:out_dim].reshape(out_dim, 1)
    a2 = a[out_dim:].reshape(out_dim, 1)
    b = jnp.zeros((1, out_dim), jnp.float32)                   # bias.data.fill_(0)
    # note: weight_interact is initialized in torch but unused in forward -> skipped
    return w, a1, a2, b


def init_linear(key, in_dim, out_dim):
    k_w, k_b = jax.random.split(key)
    w = xavier_uniform(k_w, (in_dim, out_dim))                 # stored [in, out]
    bb = 1.0 / (in_dim ** 0.5)
    b = jax.random.uniform(k_b, (1, out_dim), jnp.float32, -bb, bb)
    return w, b


def pack_conv_heads(heads):
    """Fold every head's W, W@a1, W@a2 into one augmented matmul weight + mean bias."""
    ws = [w for (w, a1, a2, b) in heads]
    wa1 = [w @ a1 for (w, a1, a2, b) in heads]                 # [in, 1] each
    wa2 = [w @ a2 for (w, a1, a2, b) in heads]
    w_aug = jnp.concatenate(ws + wa1 + wa2, axis=1)
    b_mean = jnp.mean(jnp.stack([b for (w, a1, a2, b) in heads], 0), axis=0)
    return w_aug, b_mean


def init_genelink_params(key, input_dim, h1, h2, h3, out_dim, nh1, nh2):
    keys = jax.random.split(key, nh1 + nh2 + 4)
    ki = iter(keys)
    conv1 = [init_attention_head(next(ki), input_dim, h1) for _ in range(nh1)]
    conv2 = [init_attention_head(next(ki), h1, h2) for _ in range(nh2)]  # reduction='mean'
    w_tf1, b_tf1 = init_linear(next(ki), h2, h3)
    w_tg1, b_tg1 = init_linear(next(ki), h2, h3)
    w_tf2, b_tf2 = init_linear(next(ki), h3, out_dim)
    w_tg2, b_tg2 = init_linear(next(ki), h3, out_dim)

    c1_w, c1_b = pack_conv_heads(conv1)
    c2_w, c2_b = pack_conv_heads(conv2)

    mlp_w1 = jnp.concatenate([w_tf1, w_tg1], axis=1)           # [h2, 2*h3]
    mlp_b1 = jnp.concatenate([b_tf1, b_tg1], axis=1)           # [1, 2*h3]
    mlp_w2 = jnp.zeros((2 * h3, 2 * out_dim), jnp.float32)     # block-diag second layer
    mlp_w2 = mlp_w2.at[:h3, :out_dim].set(w_tf2)
    mlp_w2 = mlp_w2.at[h3:, out_dim:].set(w_tg2)
    mlp_b2 = jnp.concatenate([b_tf2, b_tg2], axis=1)           # [1, 2*out_dim]

    return dict(conv1_w_aug=c1_w, conv1_bias=c1_b,
                conv2_w_aug=c2_w, conv2_bias=c2_b,
                mlp_w1=mlp_w1, mlp_b1=mlp_b1, mlp_w2=mlp_w2, mlp_b2=mlp_b2)


# ----------------------------------------------------------------------------
# GENELink.forward  (reduction='mean', type='dot')
# ----------------------------------------------------------------------------
def make_genelink_forward(config):
    nh1, nh2 = config["num_head1"], config["num_head2"]
    h1d, h2d = config["hidden1"], config["hidden2"]
    out_dim = config["output_dim"]
    alpha = config["alpha"]
    cap = config["max_tile_rows"]

    def forward(params, x, adj, train_sample):
        # only `adj > 0` is ever used -> int8 mask (4x less HBM/VMEM traffic), shared by both layers
        adj_i8 = (adj > 0).astype(jnp.int8)

        h1 = attention_conv_layer(adj_i8, x, params["conv1_w_aug"], params["conv1_bias"],
                                  alpha=alpha, num_heads=nh1, h_dim=h1d,
                                  apply_elu=True, max_tile_rows=cap)
        embed = attention_conv_layer(adj_i8, h1, params["conv2_w_aug"], params["conv2_bias"],
                                     alpha=alpha, num_heads=nh2, h_dim=h2d,
                                     apply_elu=False, max_tile_rows=cap)

        both = mlp_heads(embed, params["mlp_w1"], params["mlp_b1"],
                         params["mlp_w2"], params["mlp_b2"],
                         slope=0.01, max_tile_rows=cap)
        tf = both[:, :out_dim]
        tg = both[:, out_dim:]

        # train-pair gather + dot decode (type='dot'): trivial data-dependent glue in XLA
        train_tf = jnp.take(tf, train_sample[:, 0], axis=0)
        train_tg = jnp.take(tg, train_sample[:, 1], axis=0)
        pred = jnp.sum(train_tf * train_tg, axis=1, keepdims=True)
        return pred, tf, tg

    return forward


# ----------------------------------------------------------------------------
if __name__ == "__main__":
    key = jax.random.PRNGKey(0)
    k_param, k_x, k_adj, k_pairs = jax.random.split(key, 4)

    # Small shapes consistent with the module (genes x features)
    N = 256
    INPUT_DIM = 64
    H1, H2, H3, OUT = 16, 16, 16, 8
    NUM_HEAD1 = NUM_HEAD2 = 2
    E = 64

    config = dict(num_head1=NUM_HEAD1, num_head2=NUM_HEAD2,
                  hidden1=H1, hidden2=H2, hidden3=H3, output_dim=OUT,
                  alpha=0.2, max_tile_rows=64)   # 64-row tiles -> grid of 4, exercises tiling

    params = init_genelink_params(k_param, INPUT_DIM, H1, H2, H3, OUT,
                                  NUM_HEAD1, NUM_HEAD2)

    x = jax.random.normal(k_x, (N, INPUT_DIM), jnp.float32)
    adj = (jax.random.uniform(k_adj, (N, N)) < 0.05).astype(jnp.float32)
    adj = adj + jnp.eye(N, dtype=jnp.float32)   # self-loops so every row has an edge
    train_sample = jax.random.randint(k_pairs, (E, 2), 0, N, dtype=jnp.int32)

    forward = jax.jit(make_genelink_forward(config))
    pred, tf_out, tg_out = forward(params, x, adj, train_sample)
    pred = jax.block_until_ready(pred)
    jax.block_until_ready(tf_out)
    jax.block_until_ready(tg_out)

    assert pred.shape == (E, 1)
    assert tf_out.shape == (N, OUT) and tg_out.shape == (N, OUT)
    assert bool(jnp.all(jnp.isfinite(pred)))
    assert bool(jnp.all(jnp.isfinite(tf_out)))
    assert bool(jnp.all(jnp.isfinite(tg_out)))

    print("KERNEL_OK")
</pallas_src>

<mosaic_0001>
module attributes {stable_mosaic.version = 11 : i64} {
  func.func @project_heads_kernel(%arg0: memref<256x64xf32, #tpu.memory_space<vmem>>, %arg1: memref<64x36xf32, #tpu.memory_space<vmem>>, %arg2: memref<2x256x16xbf16, #tpu.memory_space<vmem>>, %arg3: memref<256x2xf32, #tpu.memory_space<vmem>>, %arg4: memref<256x2xf32, #tpu.memory_space<vmem>>) attributes {dimension_semantics = [], scalar_prefetch = 0 : i64, scratch_operands = 0 : i64, tpu.core_type = #tpu.core_type<tc>} {
    %c0 = arith.constant 0 : index
    %c0_0 = arith.constant 0 : index
    %0 = vector.load %arg0[%c0, %c0_0] : memref<256x64xf32, #tpu.memory_space<vmem>>, vector<256x64xf32>
    %c0_1 = arith.constant 0 : index
    %c0_2 = arith.constant 0 : index
    %1 = vector.load %arg1[%c0_1, %c0_2] : memref<64x36xf32, #tpu.memory_space<vmem>>, vector<64x36xf32>
    %cst = arith.constant dense<0.000000e+00> : vector<256x36xf32>
    %2 = tpu.matmul %0, %1, %cst {dimension_numbers = #tpu.dot_dimension_numbers<[1], [0], [0], [1], [0, 0, 1, 1], [], []>} : vector<256x64xf32>, vector<64x36xf32>, vector<256x36xf32> -> vector<256x36xf32>
    %3 = vector.extract_strided_slice %2 {offsets = [0, 0], sizes = [256, 16], strides = [1, 1]} : vector<256x36xf32> to vector<256x16xf32>
    %4 = arith.truncf %3 : vector<256x16xf32> to vector<256x16xbf16>
    %c0_3 = arith.constant 0 : index
    %c0_4 = arith.constant 0 : index
    %c0_5 = arith.constant 0 : index
    %5 = vector.load %arg2[%c0_3, %c0_4, %c0_5] : memref<2x256x16xbf16, #tpu.memory_space<vmem>>, vector<1x256x16xbf16>
    %6 = vector.shape_cast %5 : vector<1x256x16xbf16> to vector<256x16xbf16>
    %7 = vector.shape_cast %4 : vector<256x16xbf16> to vector<1x256x16xbf16>
    tpu.vector_store %arg2[%c0_3, %c0_4, %c0_5], %7 {strides = array<i32>} : memref<2x256x16xbf16, #tpu.memory_space<vmem>>, vector<1x256x16xbf16>,
    %8 = vector.extract_strided_slice %2 {offsets = [0, 16], sizes = [256, 16], strides = [1, 1]} : vector<256x36xf32> to vector<256x16xf32>
    %9 = arith.truncf %8 : vector<256x16xf32> to vector<256x16xbf16>
    %c1 = arith.constant 1 : index
    %c0_6 = arith.constant 0 : index
    %c0_7 = arith.constant 0 : index
    %10 = vector.load %arg2[%c1, %c0_6, %c0_7] : memref<2x256x16xbf16, #tpu.memory_space<vmem>>, vector<1x256x16xbf16>
    %11 = vector.shape_cast %10 : vector<1x256x16xbf16> to vector<256x16xbf16>
    %12 = vector.shape_cast %9 : vector<256x16xbf16> to vector<1x256x16xbf16>
    tpu.vector_store %arg2[%c1, %c0_6, %c0_7], %12 {strides = array<i32>} : memref<2x256x16xbf16, #tpu.memory_space<vmem>>, vector<1x256x16xbf16>,
    %13 = vector.extract_strided_slice %2 {offsets = [0, 32], sizes = [256, 2], strides = [1, 1]} : vector<256x36xf32> to vector<256x2xf32>
    %c0_8 = arith.constant 0 : index
    %c0_9 = arith.constant 0 : index
    %14 = vector.load %arg3[%c0_8, %c0_9] : memref<256x2xf32, #tpu.memory_space<vmem>>, vector<256x2xf32>
    tpu.vector_store %arg3[%c0_8, %c0_9], %13 {strides = array<i32>} : memref<256x2xf32, #tpu.memory_space<vmem>>, vector<256x2xf32>,
    %15 = vector.extract_strided_slice %2 {offsets = [0, 34], sizes = [256, 2], strides = [1, 1]} : vector<256x36xf32> to vector<256x2xf32>
    %c0_10 = arith.constant 0 : index
    %c0_11 = arith.constant 0 : index
    %16 = vector.load %arg4[%c0_10, %c0_11] : memref<256x2xf32, #tpu.memory_space<vmem>>, vector<256x2xf32>
    tpu.vector_store %arg4[%c0_10, %c0_11], %15 {strides = array<i32>} : memref<256x2xf32, #tpu.memory_space<vmem>>, vector<256x2xf32>,
    return
  }
}

module attributes {stable_mosaic.version = 11 : i64} {
  func.func @project_heads_kernel(%arg0: memref<256x16xf32, #tpu.memory_space<vmem>>, %arg1: memref<16x36xf32, #tpu.memory_space<vmem>>, %arg2: memref<2x256x16xbf16, #tpu.memory_space<vmem>>, %arg3: memref<256x2xf32, #tpu.memory_space<vmem>>, %arg4: memref<256x2xf32, #tpu.memory_space<vmem>>) attributes {dimension_semantics = [], scalar_prefetch = 0 : i64, scratch_operands = 0 : i64, tpu.core_type = #tpu.core_type<tc>} {
    %c0 = arith.constant 0 : index
    %c0_0 = arith.constant 0 : index
    %0 = vector.load %arg0[%c0, %c0_0] : memref<256x16xf32, #tpu.memory_space<vmem>>, vector<256x16xf32>
    %c0_1 = arith.constant 0 : index
    %c0_2 = arith.constant 0 : index
    %1 = vector.load %arg1[%c0_1, %c0_2] : memref<16x36xf32, #tpu.memory_space<vmem>>, vector<16x36xf32>
    %cst = arith.constant dense<0.000000e+00> : vector<256x36xf32>
    %2 = tpu.matmul %0, %1, %cst {dimension_numbers = #tpu.dot_dimension_numbers<[1], [0], [0], [1], [0, 0, 1, 1], [], []>} : vector<256x16xf32>, vector<16x36xf32>, vector<256x36xf32> -> vector<256x36xf32>
    %3 = vector.extract_strided_slice %2 {offsets = [0, 0], sizes = [256, 16], strides = [1, 1]} : vector<256x36xf32> to vector<256x16xf32>
    %4 = arith.truncf %3 : vector<256x16xf32> to vector<256x16xbf16>
    %c0_3 = arith.constant 0 : index
    %c0_4 = arith.constant 0 : index
    %c0_5 = arith.constant 0 : index
    %5 = vector.load %arg2[%c0_3, %c0_4, %c0_5] : memref<2x256x16xbf16, #tpu.memory_space<vmem>>, vector<1x256x16xbf16>
    %6 = vector.shape_cast %5 : vector<1x256x16xbf16> to vector<256x16xbf16>
    %7 = vector.shape_cast %4 : vector<256x16xbf16> to vector<1x256x16xbf16>
    tpu.vector_store %arg2[%c0_3, %c0_4, %c0_5], %7 {strides = array<i32>} : memref<2x256x16xbf16, #tpu.memory_space<vmem>>, vector<1x256x16xbf16>,
    %8 = vector.extract_strided_slice %2 {offsets = [0, 16], sizes = [256, 16], strides = [1, 1]} : vector<256x36xf32> to vector<256x16xf32>
    %9 = arith.truncf %8 : vector<256x16xf32> to vector<256x16xbf16>
    %c1 = arith.constant 1 : index
    %c0_6 = arith.constant 0 : index
    %c0_7 = arith.constant 0 : index
    %10 = vector.load %arg2[%c1, %c0_6, %c0_7] : memref<2x256x16xbf16, #tpu.memory_space<vmem>>, vector<1x256x16xbf16>
    %11 = vector.shape_cast %10 : vector<1x256x16xbf16> to vector<256x16xbf16>
    %12 = vector.shape_cast %9 : vector<256x16xbf16> to vector<1x256x16xbf16>
    tpu.vector_store %arg2[%c1, %c0_6, %c0_7], %12 {strides = array<i32>} : memref<2x256x16xbf16, #tpu.memory_space<vmem>>, vector<1x256x16xbf16>,
    %13 = vector.extract_strided_slice %2 {offsets = [0, 32], sizes = [256, 2], strides = [1, 1]} : vector<256x36xf32> to vector<256x2xf32>
    %c0_8 = arith.constant 0 : index
    %c0_9 = arith.constant 0 : index
    %14 = vector.load %arg3[%c0_8, %c0_9] : memref<256x2xf32, #tpu.memory_space<vmem>>, vector<256x2xf32>
    tpu.vector_store %arg3[%c0_8, %c0_9], %13 {strides = array<i32>} : memref<256x2xf32, #tpu.memory_space<vmem>>, vector<256x2xf32>,
    %15 = vector.extract_strided_slice %2 {offsets = [0, 34], sizes = [256, 2], strides = [1, 1]} : vector<256x36xf32> to vector<256x2xf32>
    %c0_10 = arith.constant 0 : index
    %c0_11 = arith.constant 0 : index
    %16 = vector.load %arg4[%c0_10, %c0_11] : memref<256x2xf32, #tpu.memory_space<vmem>>, vector<256x2xf32>
    tpu.vector_store %arg4[%c0_10, %c0_11], %15 {strides = array<i32>} : memref<256x2xf32, #tpu.memory_space<vmem>>, vector<256x2xf32>,
    return
  }
}

module attributes {stable_mosaic.version = 11 : i64} {
  func.func @attention_layer_kernel(%arg0: i32, %arg1: memref<64x256xi8, #tpu.memory_space<vmem>>, %arg2: memref<2x256x16xbf16, #tpu.memory_space<vmem>>, %arg3: memref<64x2xf32, #tpu.memory_space<vmem>>, %arg4: memref<2x256xf32, #tpu.memory_space<vmem>>, %arg5: memref<1x16xf32, #tpu.memory_space<vmem>>, %arg6: memref<64x16xf32, #tpu.memory_space<vmem>>) attributes {dimension_semantics = [#tpu.dimension_semantics<parallel>], iteration_bounds = array<i64: 4>, scalar_prefetch = 0 : i64, scratch_operands = 0 : i64, tpu.core_type = #tpu.core_type<tc>, window_params = [{transform_indices = @transform_0, window_bounds = array<i64: 64, 256>}, {pipeline_mode = #tpu.pipeline_mode<synchronous>, transform_indices = @transform_1, window_bounds = array<i64: 2, 256, 16>}, {transform_indices = @transform_2, window_bounds = array<i64: 64, 2>}, {pipeline_mode = #tpu.pipeline_mode<synchronous>, transform_indices = @transform_3, window_bounds = array<i64: 2, 256>}, {pipeline_mode = #tpu.pipeline_mode<synchronous>, transform_indices = @transform_4, window_bounds = array<i64: 1, 16>}, {transform_indices = @transform_5, window_bounds = array<i64: 64, 16>}]} {
    %c0 = arith.constant 0 : index
    %c0_0 = arith.constant 0 : index
    %0 = vector.load %arg1[%c0, %c0_0] : memref<64x256xi8, #tpu.memory_space<vmem>>, vector<64x256xi8>
    %1 = arith.sitofp %0 : vector<64x256xi8> to vector<64x256xf32>
    %cst = arith.constant 0.000000e+00 : f32
    %2 = vector.broadcast %cst : f32 to vector<64x256xf32>
    %3 = arith.cmpf ogt, %1, %2 : vector<64x256xf32>
    %c0_1 = arith.constant 0 : index
    %c0_2 = arith.constant 0 : index
    %4 = vector.load %arg3[%c0_1, %c0_2] : memref<64x2xf32, #tpu.memory_space<vmem>>, vector<64x2xf32>
    %c0_3 = arith.constant 0 : index
    %c0_4 = arith.constant 0 : index
    %5 = vector.load %arg4[%c0_3, %c0_4] : memref<2x256xf32, #tpu.memory_space<vmem>>, vector<2x256xf32>
    %c0_5 = arith.constant 0 : index
    %c0_6 = arith.constant 0 : index
    %c0_7 = arith.constant 0 : index
    %6 = vector.load %arg2[%c0_5, %c0_6, %c0_7] : memref<2x256x16xbf16, #tpu.memory_space<vmem>>, vector<1x256x16xbf16>
    %7 = vector.shape_cast %6 : vector<1x256x16xbf16> to vector<256x16xbf16>
    %8 = vector.extract_strided_slice %4 {offsets = [0, 0], sizes = [64, 1], strides = [1, 1]} : vector<64x2xf32> to vector<64x1xf32>
    %9 = vector.extract_strided_slice %5 {offsets = [0, 0], sizes = [1, 256], strides = [1, 1]} : vector<2x256xf32> to vector<1x256xf32>
    %10 = vector.broadcast %8 : vector<64x1xf32> to vector<64x256xf32>
    %11 = vector.broadcast %9 : vector<1x256xf32> to vector<64x256xf32>
    %12 = arith.addf %10, %11 : vector<64x256xf32>
    %cst_8 = arith.constant 0.000000e+00 : f32
    %13 = vector.broadcast %cst_8 : f32 to vector<64x256xf32>
    %14 = arith.cmpf ogt, %12, %13 : vector<64x256xf32>
    %cst_9 = arith.constant 2.000000e-01 : f32
    %15 = vector.broadcast %cst_9 : f32 to vector<64x256xf32>
    %16 = arith.mulf %15, %12 : vector<64x256xf32>
    %17 = arith.select %14, %12, %16 : vector<64x256xi1>, vector<64x256xf32>
    %cst_10 = arith.constant -9.000000e+15 : f32
    %18 = vector.broadcast %cst_10 : f32 to vector<64x256xf32>
    %19 = arith.select %3, %17, %18 : vector<64x256xi1>, vector<64x256xf32>
    %cst_11 = arith.constant dense<0xFF800000> : vector<64xf32>
    %20 = vector.multi_reduction <maximumf>, %19, %cst_11 [1] : vector<64x256xf32> to vector<64xf32>
    %21 = vector.shape_cast %20 : vector<64xf32> to vector<64x1xf32>
    %22 = vector.broadcast %21 : vector<64x1xf32> to vector<64x256xf32>
    %23 = arith.subf %19, %22 : vector<64x256xf32>
    %24 = math.exp %23 : vector<64x256xf32>
    %cst_12 = arith.constant dense<0.000000e+00> : vector<64xf32>
    %25 = vector.multi_reduction <add>, %24, %cst_12 [1] : vector<64x256xf32> to vector<64xf32>
    %26 = vector.shape_cast %25 : vector<64xf32> to vector<64x1xf32>
    %27 = tpu.reciprocal %26 {approx = true} : vector<64x1xf32> -> vector<64x1xf32>
    %28 = vector.broadcast %27 : vector<64x1xf32> to vector<64x256xf32>
    %29 = arith.mulf %24, %28 : vector<64x256xf32>
    %30 = arith.truncf %29 : vector<64x256xf32> to vector<64x256xbf16>
    %cst_13 = arith.constant dense<0.000000e+00> : vector<64x16xf32>
    %31 = tpu.matmul %30, %7, %cst_13 {dimension_numbers = #tpu.dot_dimension_numbers<[1], [0], [0], [1], [0, 0, 1, 1], [], []>} : vector<64x256xbf16>, vector<256x16xbf16>, vector<64x16xf32> -> vector<64x16xf32>
    %cst_14 = arith.constant 0.000000e+00 : f32
    %32 = vector.broadcast %cst_14 : f32 to vector<64x16xf32>
    %33 = arith.cmpf ogt, %31, %32 : vector<64x16xf32>
    %cst_15 = arith.constant 2.000000e-01 : f32
    %34 = vector.broadcast %cst_15 : f32 to vector<64x16xf32>
    %35 = arith.mulf %34, %31 : vector<64x16xf32>
    %36 = arith.select %33, %31, %35 : vector<64x16xi1>, vector<64x16xf32>
    %37 = arith.mulf %36, %36 : vector<64x16xf32>
    %cst_16 = arith.constant dense<0.000000e+00> : vector<64xf32>
    %38 = vector.multi_reduction <add>, %37, %cst_16 [1] : vector<64x16xf32> to vector<64xf32>
    %39 = vector.shape_cast %38 : vector<64xf32> to vector<64x1xf32>
    %40 = math.sqrt %39 : vector<64x1xf32>
    %cst_17 = arith.constant 9.99999996E-13 : f32
    %41 = vector.broadcast %cst_17 : f32 to vector<64x1xf32>
    %42 = arith.maximumf %40, %41 : vector<64x1xf32>
    %43 = tpu.reciprocal %42 {approx = true} : vector<64x1xf32> -> vector<64x1xf32>
    %44 = vector.broadcast %43 : vector<64x1xf32> to vector<64x16xf32>
    %45 = arith.mulf %36, %44 : vector<64x16xf32>
    %c1 = arith.constant 1 : index
    %c0_18 = arith.constant 0 : index
    %c0_19 = arith.constant 0 : index
    %46 = vector.load %arg2[%c1, %c0_18, %c0_19] : memref<2x256x16xbf16, #tpu.memory_space<vmem>>, vector<1x256x16xbf16>
    %47 = vector.shape_cast %46 : vector<1x256x16xbf16> to vector<256x16xbf16>
    %48 = vector.extract_strided_slice %4 {offsets = [0, 1], sizes = [64, 1], strides = [1, 1]} : vector<64x2xf32> to vector<64x1xf32>
    %49 = vector.extract_strided_slice %5 {offsets = [1, 0], sizes = [1, 256], strides = [1, 1]} : vector<2x256xf32> to vector<1x256xf32>
    %50 = vector.broadcast %48 : vector<64x1xf32> to vector<64x256xf32>
    %51 = vector.broadcast %49 : vector<1x256xf32> to vector<64x256xf32>
    %52 = arith.addf %50, %51 : vector<64x256xf32>
    %cst_20 = arith.constant 0.000000e+00 : f32
    %53 = vector.broadcast %cst_20 : f32 to vector<64x256xf32>
    %54 = arith.cmpf ogt, %52, %53 : vector<64x256xf32>
    %cst_21 = arith.constant 2.000000e-01 : f32
    %55 = vector.broadcast %cst_21 : f32 to vector<64x256xf32>
    %56 = arith.mulf %55, %52 : vector<64x256xf32>
    %57 = arith.select %54, %52, %56 : vector<64x256xi1>, vector<64x256xf32>
    %cst_22 = arith.constant -9.000000e+15 : f32
    %58 = vector.broadcast %cst_22 : f32 to vector<64x256xf32>
    %59 = arith.select %3, %57, %58 : vector<64x256xi1>, vector<64x256xf32>
    %cst_23 = arith.constant dense<0xFF800000> : vector<64xf32>
    %60 = vector.multi_reduction <maximumf>, %59, %cst_23 [1] : vector<64x256xf32> to vector<64xf32>
    %61 = vector.shape_cast %60 : vector<64xf32> to vector<64x1xf32>
    %62 = vector.broadcast %61 : vector<64x1xf32> to vector<64x256xf32>
    %63 = arith.subf %59, %62 : vector<64x256xf32>
    %64 = math.exp %63 : vector<64x256xf32>
    %cst_24 = arith.constant dense<0.000000e+00> : vector<64xf32>
    %65 = vector.multi_reduction <add>, %64, %cst_24 [1] : vector<64x256xf32> to vector<64xf32>
    %66 = vector.shape_cast %65 : vector<64xf32> to vector<64x1xf32>
    %67 = tpu.reciprocal %66 {approx = true} : vector<64x1xf32> -> vector<64x1xf32>
    %68 = vector.broadcast %67 : vector<64x1xf32> to vector<64x256xf32>
    %69 = arith.mulf %64, %68 : vector<64x256xf32>
    %70 = arith.truncf %69 : vector<64x256xf32> to vector<64x256xbf16>
    %cst_25 = arith.constant dense<0.000000e+00> : vector<64x16xf32>
    %71 = tpu.matmul %70, %47, %cst_25 {dimension_numbers = #tpu.dot_dimension_numbers<[1], [0], [0], [1], [0, 0, 1, 1], [], []>} : vector<64x256xbf16>, vector<256x16xbf16>, vector<64x16xf32> -> vector<64x16xf32>
    %cst_26 = arith.constant 0.000000e+00 : f32
    %72 = vector.broadcast %cst_26 : f32 to vector<64x16xf32>
    %73 = arith.cmpf ogt, %71, %72 : vector<64x16xf32>
    %cst_27 = arith.constant 2.000000e-01 : f32
    %74 = vector.broadcast %cst_27 : f32 to vector<64x16xf32>
    %75 = arith.mulf %74, %71 : vector<64x16xf32>
    %76 = arith.select %73, %71, %75 : vector<64x16xi1>, vector<64x16xf32>
    %77 = arith.mulf %76, %76 : vector<64x16xf32>
    %cst_28 = arith.constant dense<0.000000e+00> : vector<64xf32>
    %78 = vector.multi_reduction <add>, %77, %cst_28 [1] : vector<64x16xf32> to vector<64xf32>
    %79 = vector.shape_cast %78 : vector<64xf32> to vector<64x1xf32>
    %80 = math.sqrt %79 : vector<64x1xf32>
    %cst_29 = arith.constant 9.99999996E-13 : f32
    %81 = vector.broadcast %cst_29 : f32 to vector<64x1xf32>
    %82 = arith.maximumf %80, %81 : vector<64x1xf32>
    %83 = tpu.reciprocal %82 {approx = true} : vector<64x1xf32> -> vector<64x1xf32>
    %84 = vector.broadcast %83 : vector<64x1xf32> to vector<64x16xf32>
    %85 = arith.mulf %76, %84 : vector<64x16xf32>
    %86 = arith.addf %45, %85 : vector<64x16xf32>
    %cst_30 = arith.constant 5.000000e-01 : f32
    %87 = vector.broadcast %cst_30 : f32 to vector<64x16xf32>
    %88 = arith.mulf %86, %87 : vector<64x16xf32>
    %c0_31 = arith.constant 0 : index
    %c0_32 = arith.constant 0 : index
    %89 = vector.load %arg5[%c0_31, %c0_32] : memref<1x16xf32, #tpu.memory_space<vmem>>, vector<1x16xf32>
    %90 = vector.broadcast %89 : vector<1x16xf32> to vector<64x16xf32>
    %91 = arith.addf %88, %90 : vector<64x16xf32>
    %cst_33 = arith.constant 0.000000e+00 : f32
    %92 = vector.broadcast %cst_33 : f32 to vector<64x16xf32>
    %93 = arith.cmpf ogt, %91, %92 : vector<64x16xf32>
    %cst_34 = arith.constant 0.000000e+00 : f32
    %94 = vector.broadcast %cst_34 : f32 to vector<64x16xf32>
    %95 = arith.minimumf %91, %94 : vector<64x16xf32>
    %96 = math.exp %95 : vector<64x16xf32>
    %cst_35 = arith.constant 1.000000e+00 : f32
    %97 = vector.broadcast %cst_35 : f32 to vector<64x16xf32>
    %98 = arith.subf %96, %97 : vector<64x16xf32>
    %99 = arith.select %93, %91, %98 : vector<64x16xi1>, vector<64x16xf32>
    %c0_36 = arith.constant 0 : index
    %c0_37 = arith.constant 0 : index
    %100 = vector.load %arg6[%c0_36, %c0_37] : memref<64x16xf32, #tpu.memory_space<vmem>>, vector<64x16xf32>
    tpu.vector_store %arg6[%c0_36, %c0_37], %99 {strides = array<i32>} : memref<64x16xf32, #tpu.memory_space<vmem>>, vector<64x16xf32>,
    return
  }
  func.func @transform_0(%arg0: i32) -> (i32, i32) {
    %c0_i32 = arith.constant 0 : i32
    %c0_i32_0 = arith.constant 0 : i32
    return %arg0, %c0_i32 : i32, i32
  }
  func.func @transform_1(%arg0: i32) -> (i32, i32, i32) {
    %c0_i32 = arith.constant 0 : i32
    %c0_i32_0 = arith.constant 0 : i32
    %c0_i32_1 = arith.constant 0 : i32
    %c0_i32_2 = arith.constant 0 : i32
    return %c0_i32, %c0_i32_0, %c0_i32_1 : i32, i32, i32
  }
  func.func @transform_2(%arg0: i32) -> (i32, i32) {
    %c0_i32 = arith.constant 0 : i32
    %c0_i32_0 = arith.constant 0 : i32
    return %arg0, %c0_i32 : i32, i32
  }
  func.func @transform_3(%arg0: i32) -> (i32, i32) {
    %c0_i32 = arith.constant 0 : i32
    %c0_i32_0 = arith.constant 0 : i32
    %c0_i32_1 = arith.constant 0 : i32
    return %c0_i32, %c0_i32_0 : i32, i32
  }
  func.func @transform_4(%arg0: i32) -> (i32, i32) {
    %c0_i32 = arith.constant 0 : i32
    %c0_i32_0 = arith.constant 0 : i32
    %c0_i32_1 = arith.constant 0 : i32
    return %c0_i32, %c0_i32_0 : i32, i32
  }
  func.func @transform_5(%arg0: i32) -> (i32, i32) {
    %c0_i32 = arith.constant 0 : i32
    %c0_i32_0 = arith.constant 0 : i32
    return %arg0, %c0_i32 : i32, i32
  }
}

module attributes {stable_mosaic.version = 11 : i64} {
  func.func @attention_layer_kernel(%arg0: i32, %arg1: memref<64x256xi8, #tpu.memory_space<vmem>>, %arg2: memref<2x256x16xbf16, #tpu.memory_space<vmem>>, %arg3: memref<64x2xf32, #tpu.memory_space<vmem>>, %arg4: memref<2x256xf32, #tpu.memory_space<vmem>>, %arg5: memref<1x16xf32, #tpu.memory_space<vmem>>, %arg6: memref<64x16xf32, #tpu.memory_space<vmem>>) attributes {dimension_semantics = [#tpu.dimension_semantics<parallel>], iteration_bounds = array<i64: 4>, scalar_prefetch = 0 : i64, scratch_operands = 0 : i64, tpu.core_type = #tpu.core_type<tc>, window_params = [{transform_indices = @transform_0, window_bounds = array<i64: 64, 256>}, {pipeline_mode = #tpu.pipeline_mode<synchronous>, transform_indices = @transform_1, window_bounds = array<i64: 2, 256, 16>}, {transform_indices = @transform_2, window_bounds = array<i64: 64, 2>}, {pipeline_mode = #tpu.pipeline_mode<synchronous>, transform_indices = @transform_3, window_bounds = array<i64: 2, 256>}, {pipeline_mode = #tpu.pipeline_mode<synchronous>, transform_indices = @transform_4, window_bounds = array<i64: 1, 16>}, {transform_indices = @transform_5, window_bounds = array<i64: 64, 16>}]} {
    %c0 = arith.constant 0 : index
    %c0_0 = arith.constant 0 : index
    %0 = vector.load %arg1[%c0, %c0_0] : memref<64x256xi8, #tpu.memory_space<vmem>>, vector<64x256xi8>
    %1 = arith.sitofp %0 : vector<64x256xi8> to vector<64x256xf32>
    %cst = arith.constant 0.000000e+00 : f32
    %2 = vector.broadcast %cst : f32 to vector<64x256xf32>
    %3 = arith.cmpf ogt, %1, %2 : vector<64x256xf32>
    %c0_1 = arith.constant 0 : index
    %c0_2 = arith.constant 0 : index
    %4 = vector.load %arg3[%c0_1, %c0_2] : memref<64x2xf32, #tpu.memory_space<vmem>>, vector<64x2xf32>
    %c0_3 = arith.constant 0 : index
    %c0_4 = arith.constant 0 : index
    %5 = vector.load %arg4[%c0_3, %c0_4] : memref<2x256xf32, #tpu.memory_space<vmem>>, vector<2x256xf32>
    %c0_5 = arith.constant 0 : index
    %c0_6 = arith.constant 0 : index
    %c0_7 = arith.constant 0 : index
    %6 = vector.load %arg2[%c0_5, %c0_6, %c0_7] : memref<2x256x16xbf16, #tpu.memory_space<vmem>>, vector<1x256x16xbf16>
    %7 = vector.shape_cast %6 : vector<1x256x16xbf16> to vector<256x16xbf16>
    %8 = vector.extract_strided_slice %4 {offsets = [0, 0], sizes = [64, 1], strides = [1, 1]} : vector<64x2xf32> to vector<64x1xf32>
    %9 = vector.extract_strided_slice %5 {offsets = [0, 0], sizes = [1, 256], strides = [1, 1]} : vector<2x256xf32> to vector<1x256xf32>
    %10 = vector.broadcast %8 : vector<64x1xf32> to vector<64x256xf32>
    %11 = vector.broadcast %9 : vector<1x256xf32> to vector<64x256xf32>
    %12 = arith.addf %10, %11 : vector<64x256xf32>
    %cst_8 = arith.constant 0.000000e+00 : f32
    %13 = vector.broadcast %cst_8 : f32 to vector<64x256xf32>
    %14 = arith.cmpf ogt, %12, %13 : vector<64x256xf32>
    %cst_9 = arith.constant 2.000000e-01 : f32
    %15 = vector.broadcast %cst_9 : f32 to vector<64x256xf32>
    %16 = arith.mulf %15, %12 : vector<64x256xf32>
    %17 = arith.select %14, %12, %16 : vector<64x256xi1>, vector<64x256xf32>
    %cst_10 = arith.constant -9.000000e+15 : f32
    %18 = vector.broadcast %cst_10 : f32 to vector<64x256xf32>
    %19 = arith.select %3, %17, %18 : vector<64x256xi1>, vector<64x256xf32>
    %cst_11 = arith.constant dense<0xFF800000> : vector<64xf32>
    %20 = vector.multi_reduction <maximumf>, %19, %cst_11 [1] : vector<64x256xf32> to vector<64xf32>
    %21 = vector.shape_cast %20 : vector<64xf32> to vector<64x1xf32>
    %22 = vector.broadcast %21 : vector<64x1xf32> to vector<64x256xf32>
    %23 = arith.subf %19, %22 : vector<64x256xf32>
    %24 = math.exp %23 : vector<64x256xf32>
    %cst_12 = arith.constant dense<0.000000e+00> : vector<64xf32>
    %25 = vector.multi_reduction <add>, %24, %cst_12 [1] : vector<64x256xf32> to vector<64xf32>
    %26 = vector.shape_cast %25 : vector<64xf32> to vector<64x1xf32>
    %27 = tpu.reciprocal %26 {approx = true} : vector<64x1xf32> -> vector<64x1xf32>
    %28 = vector.broadcast %27 : vector<64x1xf32> to vector<64x256xf32>
    %29 = arith.mulf %24, %28 : vector<64x256xf32>
    %30 = arith.truncf %29 : vector<64x256xf32> to vector<64x256xbf16>
    %cst_13 = arith.constant dense<0.000000e+00> : vector<64x16xf32>
    %31 = tpu.matmul %30, %7, %cst_13 {dimension_numbers = #tpu.dot_dimension_numbers<[1], [0], [0], [1], [0, 0, 1, 1], [], []>} : vector<64x256xbf16>, vector<256x16xbf16>, vector<64x16xf32> -> vector<64x16xf32>
    %cst_14 = arith.constant 0.000000e+00 : f32
    %32 = vector.broadcast %cst_14 : f32 to vector<64x16xf32>
    %33 = arith.cmpf ogt, %31, %32 : vector<64x16xf32>
    %cst_15 = arith.constant 2.000000e-01 : f32
    %34 = vector.broadcast %cst_15 : f32 to vector<64x16xf32>
    %35 = arith.mulf %34, %31 : vector<64x16xf32>
    %36 = arith.select %33, %31, %35 : vector<64x16xi1>, vector<64x16xf32>
    %37 = arith.mulf %36, %36 : vector<64x16xf32>
    %cst_16 = arith.constant dense<0.000000e+00> : vector<64xf32>
    %38 = vector.multi_reduction <add>, %37, %cst_16 [1] : vector<64x16xf32> to vector<64xf32>
    %39 = vector.shape_cast %38 : vector<64xf32> to vector<64x1xf32>
    %40 = math.sqrt %39 : vector<64x1xf32>
    %cst_17 = arith.constant 9.99999996E-13 : f32
    %41 = vector.broadcast %cst_17 : f32 to vector<64x1xf32>
    %42 = arith.maximumf %40, %41 : vector<64x1xf32>
    %43 = tpu.reciprocal %42 {approx = true} : vector<64x1xf32> -> vector<64x1xf32>
    %44 = vector.broadcast %43 : vector<64x1xf32> to vector<64x16xf32>
    %45 = arith.mulf %36, %44 : vector<64x16xf32>
    %c1 = arith.constant 1 : index
    %c0_18 = arith.constant 0 : index
    %c0_19 = arith.constant 0 : index
    %46 = vector.load %arg2[%c1, %c0_18, %c0_19] : memref<2x256x16xbf16, #tpu.memory_space<vmem>>, vector<1x256x16xbf16>
    %47 = vector.shape_cast %46 : vector<1x256x16xbf16> to vector<256x16xbf16>
    %48 = vector.extract_strided_slice %4 {offsets = [0, 1], sizes = [64, 1], strides = [1, 1]} : vector<64x2xf32> to vector<64x1xf32>
    %49 = vector.extract_strided_slice %5 {offsets = [1, 0], sizes = [1, 256], strides = [1, 1]} : vector<2x256xf32> to vector<1x256xf32>
    %50 = vector.broadcast %48 : vector<64x1xf32> to vector<64x256xf32>
    %51 = vector.broadcast %49 : vector<1x256xf32> to vector<64x256xf32>
    %52 = arith.addf %50, %51 : vector<64x256xf32>
    %cst_20 = arith.constant 0.000000e+00 : f32
    %53 = vector.broadcast %cst_20 : f32 to vector<64x256xf32>
    %54 = arith.cmpf ogt, %52, %53 : vector<64x256xf32>
    %cst_21 = arith.constant 2.000000e-01 : f32
    %55 = vector.broadcast %cst_21 : f32 to vector<64x256xf32>
    %56 = arith.mulf %55, %52 : vector<64x256xf32>
    %57 = arith.select %54, %52, %56 : vector<64x256xi1>, vector<64x256xf32>
    %cst_22 = arith.constant -9.000000e+15 : f32
    %58 = vector.broadcast %cst_22 : f32 to vector<64x256xf32>
    %59 = arith.select %3, %57, %58 : vector<64x256xi1>, vector<64x256xf32>
    %cst_23 = arith.constant dense<0xFF800000> : vector<64xf32>
    %60 = vector.multi_reduction <maximumf>, %59, %cst_23 [1] : vector<64x256xf32> to vector<64xf32>
    %61 = vector.shape_cast %60 : vector<64xf32> to vector<64x1xf32>
    %62 = vector.broadcast %61 : vector<64x1xf32> to vector<64x256xf32>
    %63 = arith.subf %59, %62 : vector<64x256xf32>
    %64 = math.exp %63 : vector<64x256xf32>
    %cst_24 = arith.constant dense<0.000000e+00> : vector<64xf32>
    %65 = vector.multi_reduction <add>, %64, %cst_24 [1] : vector<64x256xf32> to vector<64xf32>
    %66 = vector.shape_cast %65 : vector<64xf32> to vector<64x1xf32>
    %67 = tpu.reciprocal %66 {approx = true} : vector<64x1xf32> -> vector<64x1xf32>
    %68 = vector.broadcast %67 : vector<64x1xf32> to vector<64x256xf32>
    %69 = arith.mulf %64, %68 : vector<64x256xf32>
    %70 = arith.truncf %69 : vector<64x256xf32> to vector<64x256xbf16>
    %cst_25 = arith.constant dense<0.000000e+00> : vector<64x16xf32>
    %71 = tpu.matmul %70, %47, %cst_25 {dimension_numbers = #tpu.dot_dimension_numbers<[1], [0], [0], [1], [0, 0, 1, 1], [], []>} : vector<64x256xbf16>, vector<256x16xbf16>, vector<64x16xf32> -> vector<64x16xf32>
    %cst_26 = arith.constant 0.000000e+00 : f32
    %72 = vector.broadcast %cst_26 : f32 to vector<64x16xf32>
    %73 = arith.cmpf ogt, %71, %72 : vector<64x16xf32>
    %cst_27 = arith.constant 2.000000e-01 : f32
    %74 = vector.broadcast %cst_27 : f32 to vector<64x16xf32>
    %75 = arith.mulf %74, %71 : vector<64x16xf32>
    %76 = arith.select %73, %71, %75 : vector<64x16xi1>, vector<64x16xf32>
    %77 = arith.mulf %76, %76 : vector<64x16xf32>
    %cst_28 = arith.constant dense<0.000000e+00> : vector<64xf32>
    %78 = vector.multi_reduction <add>, %77, %cst_28 [1] : vector<64x16xf32> to vector<64xf32>
    %79 = vector.shape_cast %78 : vector<64xf32> to vector<64x1xf32>
    %80 = math.sqrt %79 : vector<64x1xf32>
    %cst_29 = arith.constant 9.99999996E-13 : f32
    %81 = vector.broadcast %cst_29 : f32 to vector<64x1xf32>
    %82 = arith.maximumf %80, %81 : vector<64x1xf32>
    %83 = tpu.reciprocal %82 {approx = true} : vector<64x1xf32> -> vector<64x1xf32>
    %84 = vector.broadcast %83 : vector<64x1xf32> to vector<64x16xf32>
    %85 = arith.mulf %76, %84 : vector<64x16xf32>
    %86 = arith.addf %45, %85 : vector<64x16xf32>
    %cst_30 = arith.constant 5.000000e-01 : f32
    %87 = vector.broadcast %cst_30 : f32 to vector<64x16xf32>
    %88 = arith.mulf %86, %87 : vector<64x16xf32>
    %c0_31 = arith.constant 0 : index
    %c0_32 = arith.constant 0 : index
    %89 = vector.load %arg5[%c0_31, %c0_32] : memref<1x16xf32, #tpu.memory_space<vmem>>, vector<1x16xf32>
    %90 = vector.broadcast %89 : vector<1x16xf32> to vector<64x16xf32>
    %91 = arith.addf %88, %90 : vector<64x16xf32>
    %c0_33 = arith.constant 0 : index
    %c0_34 = arith.constant 0 : index
    %92 = vector.load %arg6[%c0_33, %c0_34] : memref<64x16xf32, #tpu.memory_space<vmem>>, vector<64x16xf32>
    tpu.vector_store %arg6[%c0_33, %c0_34], %91 {strides = array<i32>} : memref<64x16xf32, #tpu.memory_space<vmem>>, vector<64x16xf32>,
    return
  }
  func.func @transform_0(%arg0: i32) -> (i32, i32) {
    %c0_i32 = arith.constant 0 : i32
    %c0_i32_0 = arith.constant 0 : i32
    return %arg0, %c0_i32 : i32, i32
  }
  func.func @transform_1(%arg0: i32) -> (i32, i32, i32) {
    %c0_i32 = arith.constant 0 : i32
    %c0_i32_0 = arith.constant 0 : i32
    %c0_i32_1 = arith.constant 0 : i32
    %c0_i32_2 = arith.constant 0 : i32
    return %c0_i32, %c0_i32_0, %c0_i32_1 : i32, i32, i32
  }
  func.func @transform_2(%arg0: i32) -> (i32, i32) {
    %c0_i32 = arith.constant 0 : i32
    %c0_i32_0 = arith.constant 0 : i32
    return %arg0, %c0_i32 : i32, i32
  }
  func.func @transform_3(%arg0: i32) -> (i32, i32) {
    %c0_i32 = arith.constant 0 : i32
    %c0_i32_0 = arith.constant 0 : i32
    %c0_i32_1 = arith.constant 0 : i32
    return %c0_i32, %c0_i32_0 : i32, i32
  }
  func.func @transform_4(%arg0: i32) -> (i32, i32) {
    %c0_i32 = arith.constant 0 : i32
    %c0_i32_0 = arith.constant 0 : i32
    %c0_i32_1 = arith.constant 0 : i32
    return %c0_i32, %c0_i32_0 : i32, i32
  }
  func.func @transform_5(%arg0: i32) -> (i32, i32) {
    %c0_i32 = arith.constant 0 : i32
    %c0_i32_0 = arith.constant 0 : i32
    return %arg0, %c0_i32 : i32, i32
  }
}

module attributes {stable_mosaic.version = 11 : i64} {
  func.func @mlp_heads_kernel(%arg0: i32, %arg1: memref<64x16xf32, #tpu.memory_space<vmem>>, %arg2: memref<16x32xf32, #tpu.memory_space<vmem>>, %arg3: memref<1x32xf32, #tpu.memory_space<vmem>>, %arg4: memref<32x16xf32, #tpu.memory_space<vmem>>, %arg5: memref<1x16xf32, #tpu.memory_space<vmem>>, %arg6: memref<64x16xf32, #tpu.memory_space<vmem>>) attributes {dimension_semantics = [#tpu.dimension_semantics<parallel>], iteration_bounds = array<i64: 4>, scalar_prefetch = 0 : i64, scratch_operands = 0 : i64, tpu.core_type = #tpu.core_type<tc>, window_params = [{transform_indices = @transform_0, window_bounds = array<i64: 64, 16>}, {pipeline_mode = #tpu.pipeline_mode<synchronous>, transform_indices = @transform_1, window_bounds = array<i64: 16, 32>}, {pipeline_mode = #tpu.pipeline_mode<synchronous>, transform_indices = @transform_2, window_bounds = array<i64: 1, 32>}, {pipeline_mode = #tpu.pipeline_mode<synchronous>, transform_indices = @transform_3, window_bounds = array<i64: 32, 16>}, {pipeline_mode = #tpu.pipeline_mode<synchronous>, transform_indices = @transform_4, window_bounds = array<i64: 1, 16>}, {transform_indices = @transform_5, window_bounds = array<i64: 64, 16>}]} {
    %c0 = arith.constant 0 : index
    %c0_0 = arith.constant 0 : index
    %0 = vector.load %arg1[%c0, %c0_0] : memref<64x16xf32, #tpu.memory_space<vmem>>, vector<64x16xf32>
    %c0_1 = arith.constant 0 : index
    %c0_2 = arith.constant 0 : index
    %1 = vector.load %arg2[%c0_1, %c0_2] : memref<16x32xf32, #tpu.memory_space<vmem>>, vector<16x32xf32>
    %cst = arith.constant dense<0.000000e+00> : vector<64x32xf32>
    %2 = tpu.matmul %0, %1, %cst {dimension_numbers = #tpu.dot_dimension_numbers<[1], [0], [0], [1], [0, 0, 1, 1], [], []>} : vector<64x16xf32>, vector<16x32xf32>, vector<64x32xf32> -> vector<64x32xf32>
    %c0_3 = arith.constant 0 : index
    %c0_4 = arith.constant 0 : index
    %3 = vector.load %arg3[%c0_3, %c0_4] : memref<1x32xf32, #tpu.memory_space<vmem>>, vector<1x32xf32>
    %4 = vector.broadcast %3 : vector<1x32xf32> to vector<64x32xf32>
    %5 = arith.addf %2, %4 : vector<64x32xf32>
    %cst_5 = arith.constant 0.000000e+00 : f32
    %6 = vector.broadcast %cst_5 : f32 to vector<64x32xf32>
    %7 = arith.cmpf ogt, %5, %6 : vector<64x32xf32>
    %cst_6 = arith.constant 0.00999999977 : f32
    %8 = vector.broadcast %cst_6 : f32 to vector<64x32xf32>
    %9 = arith.mulf %8, %5 : vector<64x32xf32>
    %10 = arith.select %7, %5, %9 : vector<64x32xi1>, vector<64x32xf32>
    %c0_7 = arith.constant 0 : index
    %c0_8 = arith.constant 0 : index
    %11 = vector.load %arg4[%c0_7, %c0_8] : memref<32x16xf32, #tpu.memory_space<vmem>>, vector<32x16xf32>
    %cst_9 = arith.constant dense<0.000000e+00> : vector<64x16xf32>
    %12 = tpu.matmul %10, %11, %cst_9 {dimension_numbers = #tpu.dot_dimension_numbers<[1], [0], [0], [1], [0, 0, 1, 1], [], []>} : vector<64x32xf32>, vector<32x16xf32>, vector<64x16xf32> -> vector<64x16xf32>
    %c0_10 = arith.constant 0 : index
    %c0_11 = arith.constant 0 : index
    %13 = vector.load %arg5[%c0_10, %c0_11] : memref<1x16xf32, #tpu.memory_space<vmem>>, vector<1x16xf32>
    %14 = vector.broadcast %13 : vector<1x16xf32> to vector<64x16xf32>
    %15 = arith.addf %12, %14 : vector<64x16xf32>
    %cst_12 = arith.constant 0.000000e+00 : f32
    %16 = vector.broadcast %cst_12 : f32 to vector<64x16xf32>
    %17 = arith.cmpf ogt, %15, %16 : vector<64x16xf32>
    %cst_13 = arith.constant 0.00999999977 : f32
    %18 = vector.broadcast %cst_13 : f32 to vector<64x16xf32>
    %19 = arith.mulf %18, %15 : vector<64x16xf32>
    %20 = arith.select %17, %15, %19 : vector<64x16xi1>, vector<64x16xf32>
    %c0_14 = arith.constant 0 : index
    %c0_15 = arith.constant 0 : index
    %21 = vector.load %arg6[%c0_14, %c0_15] : memref<64x16xf32, #tpu.memory_space<vmem>>, vector<64x16xf32>
    tpu.vector_store %arg6[%c0_14, %c0_15], %20 {strides = array<i32>} : memref<64x16xf32, #tpu.memory_space<vmem>>, vector<64x16xf32>,
    return
  }
  func.func @transform_0(%arg0: i32) -> (i32, i32) {
    %c0_i32 = arith.constant 0 : i32
    %c0_i32_0 = arith.constant 0 : i32
    return %arg0, %c0_i32 : i32, i32
  }
  func.func @transform_1(%arg0: i32) -> (i32, i32) {
    %c0_i32 = arith.constant 0 : i32
    %c0_i32_0 = arith.constant 0 : i32
    %c0_i32_1 = arith.constant 0 : i32
    return %c0_i32, %c0_i32_0 : i32, i32
  }
  func.func @transform_2(%arg0: i32) -> (i32, i32) {
    %c0_i32 = arith.constant 0 : i32
    %c0_i32_0 = arith.constant 0 : i32
    %c0_i32_1 = arith.constant 0 : i32
    return %c0_i32, %c0_i32_0 : i32, i32
  }
  func.func @transform_3(%arg0: i32) -> (i32, i32) {
    %c0_i32 = arith.constant 0 : i32
    %c0_i32_0 = arith.constant 0 : i32
    %c0_i32_1 = arith.constant 0 : i32
    return %c0_i32, %c0_i32_0 : i32, i32
  }
  func.func @transform_4(%arg0: i32) -> (i32, i32) {
    %c0_i32 = arith.constant 0 : i32
    %c0_i32_0 = arith.constant 0 : i32
    %c0_i32_1 = arith.constant 0 : i32
    return %c0_i32, %c0_i32_0 : i32, i32
  }
  func.func @transform_5(%arg0: i32) -> (i32, i32) {
    %c0_i32 = arith.constant 0 : i32
    %c0_i32_0 = arith.constant 0 : i32
    return %arg0, %c0_i32 : i32, i32
  }
}

</mosaic_0001>

<llo_original>
// kernel: forward.5
$region0: #{forward.5}
  #allocation0 [shape = 'u32[]', space=smem, size = 0x4, offset = 0x4, fixed_abs, tag = 'smem constant byte address 0x4 - core index']
  #allocation1 [shape = 'u32[144,128]{1,0:T(1,128)}', space=vmem, size = 0x12000, scoped, tag = 'internal scratch']
  %s0 = inlined_call_operand.vmem [shape: f32[256,64], index: 0, kind: input, shape index: {}]
  %s1 = inlined_call_operand.vmem [shape: f32[64,36], index: 1, kind: input, shape index: {}]
  %s2 = inlined_call_operand.vmem [shape: bf16[2,256,16], index: 2, kind: output, shape index: {0}]
  %s3 = inlined_call_operand.vmem [shape: f32[256,2], index: 3, kind: output, shape index: {1}]
  %s4 = inlined_call_operand.vmem [shape: f32[256,2], index: 4, kind: output, shape index: {2}]
  %5 = xla_tuple %s2, %s3, %s4
  %s6 = sld [smem:[#allocation0]]
  $region34: #{forward.5} parent=0
    _
  %s8 = ssub.s32 1, %s6
  %s9 = scalar_select 0, %s8, %s6
  // Predicated region
  $region2: #{forward.5} parent=0 // pred_check
    _
  $region3: #{forward.5} parent=0 // pred_check_branch
    %11 = sbr.rel (0) target = $region5
  $region4: #{forward.5} parent=0 // pred_region
    _
  $region5: #{forward.5} parent=0 // pred_fallthru
    _
  // Predicated region
  $region6: #{forward.5} parent=0 // pred_check
    _
  $region7: #{forward.5} parent=0 // pred_check_branch
    %13 = sbr.rel (0) target = $region9
  $region8: #{forward.5} parent=0 // pred_region
    _
  $region9: #{forward.5} parent=0 // pred_fallthru
    _
  %v14 = vld [vmem:[%s0] sm:$0xff]
  %v15 = vld [vmem:[%s0 + $0x8] sm:$0xff]
  %v16 = vld [vmem:[%s0 + $0x10] sm:$0xff]
  %v17 = vld [vmem:[%s0 + $0x18] sm:$0xff]
  %v18 = vld [vmem:[%s0 + $0x20] sm:$0xff]
  %v19 = vld [vmem:[%s0 + $0x28] sm:$0xff]
  %v20 = vld [vmem:[%s0 + $0x30] sm:$0xff]
  %v21 = vld [vmem:[%s0 + $0x38] sm:$0xff]
  %v22 = vld [vmem:[%s0 + $0x40] sm:$0xff]
  %v23 = vld [vmem:[%s0 + $0x48] sm:$0xff]
  %v24 = vld [vmem:[%s0 + $0x50] sm:$0xff]
  %v25 = vld [vmem:[%s0 + $0x58] sm:$0xff]
  %v26 = vld [vmem:[%s0 + $0x60] sm:$0xff]
  %v27 = vld [vmem:[%s0 + $0x68] sm:$0xff]
  %v28 = vld [vmem:[%s0 + $0x70] sm:$0xff]
  %v29 = vld [vmem:[%s0 + $0x78] sm:$0xff]
  %v30 = vld [vmem:[%s0 + $0x80] sm:$0xff]
  %v31 = vld [vmem:[%s0 + $0x88] sm:$0xff]
  %v32 = vld [vmem:[%s0 + $0x90] sm:$0xff]
  %v33 = vld [vmem:[%s0 + $0x98] sm:$0xff]
  %v34 = vld [vmem:[%s0 + $0xa0] sm:$0xff]
  %v35 = vld [vmem:[%s0 + $0xa8] sm:$0xff]
  %v36 = vld [vmem:[%s0 + $0xb0] sm:$0xff]
  %v37 = vld [vmem:[%s0 + $0xb8] sm:$0xff]
  %v38 = vld [vmem:[%s0 + $0xc0] sm:$0xff]
  %v39 = vld [vmem:[%s0 + $0xc8] sm:$0xff]
  %v40 = vld [vmem:[%s0 + $0xd0] sm:$0xff]
  %v41 = vld [vmem:[%s0 + $0xd8] sm:$0xff]
  %v42 = vld [vmem:[%s0 + $0xe0] sm:$0xff]
  %v43 = vld [vmem:[%s0 + $0xe8] sm:$0xff]
  %v44 = vld [vmem:[%s0 + $0xf0] sm:$0xff]
  %v45 = vld [vmem:[%s0 + $0xf8] sm:$0xff]
  %v46 = vld [vmem:[%s1] sm:$0xff]
  %v47 = vld [vmem:[%s1 + $0x8] sm:$0xff]
  %v48 = vld [vmem:[%s1 + $0x10] sm:$0xff]
  %v49 = vld [vmem:[%s1 + $0x18] sm:$0xff]
  %v50 = vld [vmem:[%s1 + $0x20] sm:$0xff]
  %v51 = vld [vmem:[%s1 + $0x28] sm:$0xff]
  %v52 = vld [vmem:[%s1 + $0x30] sm:$0xff]
  %v53 = vld [vmem:[%s1 + $0x38] sm:$0xff]
  %vm54 = vcmask 523264
  %v56 = vsel %vm54, %v14, 0
  %v59 = vsel %vm54, %v15, 0
  %v62 = vsel %vm54, %v16, 0
  %v65 = vsel %vm54, %v17, 0
  %v68 = vsel %vm54, %v18, 0
  %v71 = vsel %vm54, %v19, 0
  %v74 = vsel %vm54, %v20, 0
  %v77 = vsel %vm54, %v21, 0
  %v80 = vsel %vm54, %v22, 0
  %v83 = vsel %vm54, %v23, 0
  %v86 = vsel %vm54, %v24, 0
  %v89 = vsel %vm54, %v25, 0
  %v92 = vsel %vm54, %v26, 0
  %v95 = vsel %vm54, %v27, 0
  %v98 = vsel %vm54, %v28, 0
  %v101 = vsel %vm54, %v29, 0
  %v104 = vsel %vm54, %v30, 0
  %v107 = vsel %vm54, %v31, 0
  %v110 = vsel %vm54, %v32, 0
  %v113 = vsel %vm54, %v33, 0
  %v116 = vsel %vm54, %v34, 0
  %v119 = vsel %vm54, %v35, 0
  %v122 = vsel %vm54, %v36, 0
  %v125 = vsel %vm54, %v37, 0
  %v128 = vsel %vm54, %v38, 0
  %v131 = vsel %vm54, %v39, 0
  %v134 = vsel %vm54, %v40, 0
  %v137 = vsel %vm54, %v41, 0
  %v140 = vsel %vm54, %v42, 0
  %v143 = vsel %vm54, %v43, 0
  %v146 = vsel %vm54, %v44, 0
  %v149 = vsel %vm54, %v45, 0
  %151 = vmatprep.subr.mxu0 0.0
  %152 = vmatpush1.msra.mxu0 %v46
  %153 = vmatprep.subr.mxu0 0.0
  %154 = vmatpush1.msra.mxu0 %v47
  %155 = vmatprep.subr.mxu0 0.0
  %156 = vmatpush1.msra.mxu0 %v48
  %157 = vmatprep.subr.mxu0 0.0
  %158 = vmatpush1.msra.mxu0 %v49
  %159 = vmatprep.subr.mxu0 0.0
  %160 = vmatpush1.msra.mxu0 %v50
  %161 = vmatprep.subr.mxu0 0.0
  %162 = vmatpush1.msra.mxu0 %v51
  %163 = vmatprep.subr.mxu0 0.0
  %164 = vmatpush1.msra.mxu0 %v52
  %165 = vmatprep.subr.mxu0 0.0
  %166 = vmatpush1.msra.mxu0 %v53
  %167 = vmatprep.subr.mxu0 0.0
  %168 = vmatpush1.msra.mxu0 0.0
  %169 = vmatprep.subr.mxu0 0.0
  %170 = vmatpush1.msra.mxu0 0.0
  %171 = vmatprep.subr.mxu0 0.0
  %172 = vmatpush1.msra.mxu0 0.0
  %173 = vmatprep.subr.mxu0 0.0
  %174 = vmatpush1.msra.mxu0 0.0
  %175 = vmatprep.subr.mxu0 0.0
  %176 = vmatpush1.msra.mxu0 0.0
  %177 = vmatprep.subr.mxu0 0.0
  %178 = vmatpush1.msra.mxu0 0.0
  %179 = vmatprep.subr.mxu0 0.0
  %180 = vmatpush1.msra.mxu0 0.0
  %181 = vmatprep.subr.mxu0 0.0
  %182 = vmatpush1.msra.mxu0 0.0
  %183 = vmatprep.subr.mxu0 0.0
  %184 = vmatpush1.msra.mxu0 0.0
  %185 = vmatprep.subr.mxu0 0.0
  %186 = vmatpush1.msra.mxu0 0.0
  %187 = vmatprep.subr.mxu0 0.0
  %188 = vmatpush1.msra.mxu0 0.0
  %189 = vmatprep.subr.mxu0 0.0
  %190 = vmatpush1.msra.mxu0 0.0
  %191 = vmatprep.subr.mxu0 0.0
  %192 = vmatpush1.msra.mxu0 0.0
  %193 = vmatprep.subr.mxu0 0.0
  %194 = vmatpush1.msra.mxu0 0.0
  %195 = vmatprep.subr.mxu0 0.0
  %196 = vmatpush1.msra.mxu0 0.0
  %197 = vmatprep.subr.mxu0 0.0
  %198 = vmatpush1.msra.mxu0 0.0
  %199 = vmatprep.subr.mxu0 0.0
  %200 = vmatpush1.msra.mxu0 0.0
  %201 = vmatprep.subr.mxu0 0.0
  %202 = vmatpush1.msra.mxu0 0.0
  %203 = vmatprep.subr.mxu0 0.0
  %204 = vmatpush1.msra.mxu0 0.0
  %205 = vmatprep.subr.mxu0 0.0
  %206 = vmatpush1.msra.mxu0 0.0
  %207 = vmatprep.subr.mxu0 0.0
  %208 = vmatpush1.msra.mxu0 0.0
  %209 = vmatprep.subr.mxu0 0.0
  %210 = vmatpush1.msra.mxu0 0.0
  %211 = vmatprep.subr.mxu0 0.0
  %212 = vmatpush1.msra.mxu0 0.0
  %213 = vmatprep.subr.mxu0 0.0
  %214 = vmatpush1.msra.mxu0 0.0
  %215 = vmatprep.mubr.f32.mxu0 0.0
  %216 = vmatmul.mubr.f32.gmra.mrb[0].mxu0 %v56
  %v217 = vpop.f32.mrb[0].mxu0
  %v218 = vadd.f32 0.0, %v217
  %v219 = vpop.f32.mrb[0].mxu0
  %220 = vmatprep.mubr.f32.mxu0 0.0
  %221 = vmatmul.mubr.f32.gmra.mrb[0].mxu0 %v59
  %v222 = vpop.f32.mrb[0].mxu0
  %v223 = vadd.f32 0.0, %v222
  %v224 = vpop.f32.mrb[0].mxu0
  %225 = vmatprep.mubr.f32.mxu0 0.0
  %226 = vmatmul.mubr.f32.gmra.mrb[0].mxu0 %v62
  %v227 = vpop.f32.mrb[0].mxu0
  %v228 = vadd.f32 0.0, %v227
  %v229 = vpop.f32.mrb[0].mxu0
  %230 = vmatprep.mubr.f32.mxu0 0.0
  %231 = vmatmul.mubr.f32.gmra.mrb[0].mxu0 %v65
  %v232 = vpop.f32.mrb[0].mxu0
  %v233 = vadd.f32 0.0, %v232
  %v234 = vpop.f32.mrb[0].mxu0
  %235 = vmatprep.mubr.f32.mxu0 0.0
  %236 = vmatmul.mubr.f32.gmra.mrb[0].mxu0 %v68
  %v237 = vpop.f32.mrb[0].mxu0
  %v238 = vadd.f32 0.0, %v237
  %v239 = vpop.f32.mrb[0].mxu0
  %240 = vmatprep.mubr.f32.mxu0 0.0
  %241 = vmatmul.mubr.f32.gmra.mrb[0].mxu0 %v71
  %v242 = vpop.f32.mrb[0].mxu0
  %v243 = vadd.f32 0.0, %v242
  %v244 = vpop.f32.mrb[0].mxu0
  %245 = vmatprep.mubr.f32.mxu0 0.0
  %246 = vmatmul.mubr.f32.gmra.mrb[0].mxu0 %v74
  %v247 = vpop.f32.mrb[0].mxu0
  %v248 = vadd.f32 0.0, %v247
  %v249 = vpop.f32.mrb[0].mxu0
  %250 = vmatprep.mubr.f32.mxu0 0.0
  %251 = vmatmul.mubr.f32.gmra.mrb[0].mxu0 %v77
  %v252 = vpop.f32.mrb[0].mxu0
  %v253 = vadd.f32 0.0, %v252
  %v254 = vpop.f32.mrb[0].mxu0
  %255 = vmatprep.mubr.f32.mxu0 0.0
  %256 = vmatmul.mubr.f32.gmra.mrb[0].mxu0 %v80
  %v257 = vpop.f32.mrb[0].mxu0
  %v258 = vadd.f32 0.0, %v257
  %v259 = vpop.f32.mrb[0].mxu0
  %260 = vmatprep.mubr.f32.mxu0 0.0
  %261 = vmatmul.mubr.f32.gmra.mrb[0].mxu0 %v83
  %v262 = vpop.f32.mrb[0].mxu0
  %v263 = vadd.f32 0.0, %v262
  %v264 = vpop.f32.mrb[0].mxu0
  %265 = vmatprep.mubr.f32.mxu0 0.0
  %266 = vmatmul.mubr.f32.gmra.mrb[0].mxu0 %v86
  %v267 = vpop.f32.mrb[0].mxu0
  %v268 = vadd.f32 0.0, %v267
  %v269 = vpop.f32.mrb[0].mxu0
  %270 = vmatprep.mubr.f32.mxu0 0.0
  %271 = vmatmul.mubr.f32.gmra.mrb[0].mxu0 %v89
  %v272 = vpop.f32.mrb[0].mxu0
  %v273 = vadd.f32 0.0, %v272
  %v274 = vpop.f32.mrb[0].mxu0
  %275 = vmatprep.mubr.f32.mxu0 0.0
  %276 = vmatmul.mubr.f32.gmra.mrb[0].mxu0 %v92
  %v277 = vpop.f32.mrb[0].mxu0
  %v278 = vadd.f32 0.0, %v277
  %v279 = vpop.f32.mrb[0].mxu0
  %280 = vmatprep.mubr.f32.mxu0 0.0
  %281 = vmatmul.mubr.f32.gmra.mrb[0].mxu0 %v95
  %v282 = vpop.f32.mrb[0].mxu0
  %v283 = vadd.f32 0.0, %v282
  %v284 = vpop.f32.mrb[0].mxu0
  %285 = vmatprep.mubr.f32.mxu0 0.0
  %286 = vmatmul.mubr.f32.gmra.mrb[0].mxu0 %v98
  %v287 = vpop.f32.mrb[0].mxu0
  %v288 = vadd.f32 0.0, %v287
  %v289 = vpop.f32.mrb[0].mxu0
  %290 = vmatprep.mubr.f32.mxu0 0.0
  %291 = vmatmul.mubr.f32.gmra.mrb[0].mxu0 %v101
  %v292 = vpop.f32.mrb[0].mxu0
  %v293 = vadd.f32 0.0, %v292
  %v294 = vpop.f32.mrb[0].mxu0
  %295 = vmatprep.mubr.f32.mxu0 0.0
  %296 = vmatmul.mubr.f32.gmra.mrb[0].mxu0 %v104
  %v297 = vpop.f32.mrb[0].mxu0
  %v298 = vadd.f32 0.0, %v297
  %v299 = vpop.f32.mrb[0].mxu0
  %300 = vmatprep.mubr.f32.mxu0 0.0
  %301 = vmatmul.mubr.f32.gmra.mrb[0].mxu0 %v107
  %v302 = vpop.f32.mrb[0].mxu0
  %v303 = vadd.f32 0.0, %v302
  %v304 = vpop.f32.mrb[0].mxu0
  %305 = vmatprep.mubr.f32.mxu0 0.0
  %306 = vmatmul.mubr.f32.gmra.mrb[0].mxu0 %v110
  %v307 = vpop.f32.mrb[0].mxu0
  %v308 = vadd.f32 0.0, %v307
  %v309 = vpop.f32.mrb[0].mxu0
  %310 = vmatprep.mubr.f32.mxu0 0.0
  %311 = vmatmul.mubr.f32.gmra.mrb[0].mxu0 %v113
  %v312 = vpop.f32.mrb[0].mxu0
  %v313 = vadd.f32 0.0, %v312
  %v314 = vpop.f32.mrb[0].mxu0
  %315 = vmatprep.mubr.f32.mxu0 0.0
  %316 = vmatmul.mubr.f32.gmra.mrb[0].mxu0 %v116
  %v317 = vpop.f32.mrb[0].mxu0
  %v318 = vadd.f32 0.0, %v317
  %v319 = vpop.f32.mrb[0].mxu0
  %320 = vmatprep.mubr.f32.mxu0 0.0
  %321 = vmatmul.mubr.f32.gmra.mrb[0].mxu0 %v119
  %v322 = vpop.f32.mrb[0].mxu0
  %v323 = vadd.f32 0.0, %v322
  %v324 = vpop.f32.mrb[0].mxu0
  %325 = vmatprep.mubr.f32.mxu0 0.0
  %326 = vmatmul.mubr.f32.gmra.mrb[0].mxu0 %v122
  %v327 = vpop.f32.mrb[0].mxu0
  %v328 = vadd.f32 0.0, %v327
  %v329 = vpop.f32.mrb[0].mxu0
  %330 = vmatprep.mubr.f32.mxu0 0.0
  %331 = vmatmul.mubr.f32.gmra.mrb[0].mxu0 %v125
  %v332 = vpop.f32.mrb[0].mxu0
  %v333 = vadd.f32 0.0, %v332
  %v334 = vpop.f32.mrb[0].mxu0
  %335 = vmatprep.mubr.f32.mxu0 0.0
  %336 = vmatmul.mubr.f32.gmra.mrb[0].mxu0 %v128
  %v337 = vpop.f32.mrb[0].mxu0
  %v338 = vadd.f32 0.0, %v337
  %v339 = vpop.f32.mrb[0].mxu0
  %340 = vmatprep.mubr.f32.mxu0 0.0
  %341 = vmatmul.mubr.f32.gmra.mrb[0].mxu0 %v131
  %v342 = vpop.f32.mrb[0].mxu0
  %v343 = vadd.f32 0.0, %v342
  %v344 = vpop.f32.mrb[0].mxu0
  %345 = vmatprep.mubr.f32.mxu0 0.0
  %346 = vmatmul.mubr.f32.gmra.mrb[0].mxu0 %v134
  %v347 = vpop.f32.mrb[0].mxu0
  %v348 = vadd.f32 0.0, %v347
  %v349 = vpop.f32.mrb[0].mxu0
  %350 = vmatprep.mubr.f32.mxu0 0.0
  %351 = vmatmul.mubr.f32.gmra.mrb[0].mxu0 %v137
  %v352 = vpop.f32.mrb[0].mxu0
  %v353 = vadd.f32 0.0, %v352
  %v354 = vpop.f32.mrb[0].mxu0
  %355 = vmatprep.mubr.f32.mxu0 0.0
  %356 = vmatmul.mubr.f32.gmra.mrb[0].mxu0 %v140
  %v357 = vpop.f32.mrb[0].mxu0
  %v358 = vadd.f32 0.0, %v357
  %v359 = vpop.f32.mrb[0].mxu0
  %360 = vmatprep.mubr.f32.mxu0 0.0
  %361 = vmatmul.mubr.f32.gmra.mrb[0].mxu0 %v143
  %v362 = vpop.f32.mrb[0].mxu0
  %v363 = vadd.f32 0.0, %v362
  %v364 = vpop.f32.mrb[0].mxu0
  %365 = vmatprep.mubr.f32.mxu0 0.0
  %366 = vmatmul.mubr.f32.gmra.mrb[0].mxu0 %v146
  %v367 = vpop.f32.mrb[0].mxu0
  %v368 = vadd.f32 0.0, %v367
  %v369 = vpop.f32.mrb[0].mxu0
  %370 = vmatprep.mubr.f32.mxu0 0.0
  %371 = vmatmul.mubr.f32.gmra.mrb[0].mxu0 %v149
  %v372 = vpop.f32.mrb[0].mxu0
  %v373 = vadd.f32 0.0, %v372
  %v374 = vpop.f32.mrb[0].mxu0
  %375 = vdwg.mxu0
  %v376 = vpack.c.bf16 %v223, %v218
  %v377 = vpack.c.bf16 %v233, %v228
  %v378 = vpack.c.bf16 %v243, %v238
  %v379 = vpack.c.bf16 %v253, %v248
  %v380 = vpack.c.bf16 %v263, %v258
  %v381 = vpack.c.bf16 %v273, %v268
  %v382 = vpack.c.bf16 %v283, %v278
  %v383 = vpack.c.bf16 %v293, %v288
  %v384 = vpack.c.bf16 %v303, %v298
  %v385 = vpack.c.bf16 %v313, %v308
  %v386 = vpack.c.bf16 %v323, %v318
  %v387 = vpack.c.bf16 %v333, %v328
  %v388 = vpack.c.bf16 %v343, %v338
  %v389 = vpack.c.bf16 %v353, %v348
  %v390 = vpack.c.bf16 %v363, %v358
  %v391 = vpack.c.bf16 %v373, %v368
  %v408 = vunpack.c.l.b16 %v376
  %v409 = vunpack.c.h.b16 %v376
  %v410 = vunpack.c.l.b16 %v377
  %v411 = vunpack.c.h.b16 %v377
  %v412 = vunpack.c.l.b16 %v378
  %v413 = vunpack.c.h.b16 %v378
  %v414 = vunpack.c.l.b16 %v379
  %v415 = vunpack.c.h.b16 %v379
  %v416 = vunpack.c.l.b16 %v380
  %v417 = vunpack.c.h.b16 %v380
  %v418 = vunpack.c.l.b16 %v381
  %v419 = vunpack.c.h.b16 %v381
  %v420 = vunpack.c.l.b16 %v382
  %v421 = vunpack.c.h.b16 %v382
  %v422 = vunpack.c.l.b16 %v383
  %v423 = vunpack.c.h.b16 %v383
  %v424 = vunpack.c.l.b16 %v384
  %v425 = vunpack.c.h.b16 %v384
  %v426 = vunpack.c.l.b16 %v385
  %v427 = vunpack.c.h.b16 %v385
  %v428 = vunpack.c.l.b16 %v386
  %v429 = vunpack.c.h.b16 %v386
  %v430 = vunpack.c.l.b16 %v387
  %v431 = vunpack.c.h.b16 %v387
  %v432 = vunpack.c.l.b16 %v388
  %v433 = vunpack.c.h.b16 %v388
  %v434 = vunpack.c.l.b16 %v389
  %v435 = vunpack.c.h.b16 %v389
  %v436 = vunpack.c.l.b16 %v390
  %v437 = vunpack.c.h.b16 %v390
  %v438 = vunpack.c.l.b16 %v391
  %v439 = vunpack.c.h.b16 %v391
  %v440 = vpack.c.b16 %v408, %v408
  %v441 = vpack.c.b16 %v409, %v409
  %v442 = vpack.c.b16 %v410, %v410
  %v443 = vpack.c.b16 %v411, %v411
  %v444 = vpack.c.b16 %v412, %v412
  %v445 = vpack.c.b16 %v413, %v413
  %v446 = vpack.c.b16 %v414, %v414
  %v447 = vpack.c.b16 %v415, %v415
  %v448 = vpack.c.b16 %v416, %v416
  %v449 = vpack.c.b16 %v417, %v417
  %v450 = vpack.c.b16 %v418, %v418
  %v451 = vpack.c.b16 %v419, %v419
  %v452 = vpack.c.b16 %v420, %v420
  %v453 = vpack.c.b16 %v421, %v421
  %v454 = vpack.c.b16 %v422, %v422
  %v455 = vpack.c.b16 %v423, %v423
  %v456 = vpack.c.b16 %v424, %v424
  %v457 = vpack.c.b16 %v425, %v425
  %v458 = vpack.c.b16 %v426, %v426
  %v459 = vpack.c.b16 %v427, %v427
  %v460 = vpack.c.b16 %v428, %v428
  %v461 = vpack.c.b16 %v429, %v429
  %v462 = vpack.c.b16 %v430, %v430
  %v463 = vpack.c.b16 %v431, %v431
  %v464 = vpack.c.b16 %v432, %v432
  %v465 = vpack.c.b16 %v433, %v433
  %v466 = vpack.c.b16 %v434, %v434
  %v467 = vpack.c.b16 %v435, %v435
  %v468 = vpack.c.b16 %v436, %v436
  %v469 = vpack.c.b16 %v437, %v437
  %v470 = vpack.c.b16 %v438, %v438
  %v471 = vpack.c.b16 %v439, %v439
  %vm504 = vcmask 125952
  %505 = vst.msk [vmem:[%s2] sm:$0xf] %vm504, %v440
  %506 = vst.msk [vmem:[%s2 + $0x4] sm:$0xf] %vm504, %v441
  %507 = vst.msk [vmem:[%s2 + $0x8] sm:$0xf] %vm504, %v442
  %508 = vst.msk [vmem:[%s2 + $0xc] sm:$0xf] %vm504, %v443
  %509 = vst.msk [vmem:[%s2 + $0x10] sm:$0xf] %vm504, %v444
  %510 = vst.msk [vmem:[%s2 + $0x14] sm:$0xf] %vm504, %v445
  %511 = vst.msk [vmem:[%s2 + $0x18] sm:$0xf] %vm504, %v446
  %512 = vst.msk [vmem:[%s2 + $0x1c] sm:$0xf] %vm504, %v447
  %513 = vst.msk [vmem:[%s2 + $0x20] sm:$0xf] %vm504, %v448
  %514 = vst.msk [vmem:[%s2 + $0x24] sm:$0xf] %vm504, %v449
  %515 = vst.msk [vmem:[%s2 + $0x28] sm:$0xf] %vm504, %v450
  %516 = vst.msk [vmem:[%s2 + $0x2c] sm:$0xf] %vm504, %v451
  %517 = vst.msk [vmem:[%s2 + $0x30] sm:$0xf] %vm504, %v452
  %518 = vst.msk [vmem:[%s2 + $0x34] sm:$0xf] %vm504, %v453
  %519 = vst.msk [vmem:[%s2 + $0x38] sm:$0xf] %vm504, %v454
  %520 = vst.msk [vmem:[%s2 + $0x3c] sm:$0xf] %vm504, %v455
  %521 = vst.msk [vmem:[%s2 + $0x40] sm:$0xf] %vm504, %v456
  %522 = vst.msk [vmem:[%s2 + $0x44] sm:$0xf] %vm504, %v457
  %523 = vst.msk [vmem:[%s2 + $0x48] sm:$0xf] %vm504, %v458
  %524 = vst.msk [vmem:[%s2 + $0x4c] sm:$0xf] %vm504, %v459
  %525 = vst.msk [vmem:[%s2 + $0x50] sm:$0xf] %vm504, %v460
  %526 = vst.msk [vmem:[%s2 + $0x54] sm:$0xf] %vm504, %v461
  %527 = vst.msk [vmem:[%s2 + $0x58] sm:$0xf] %vm504, %v462
  %528 = vst.msk [vmem:[%s2 + $0x5c] sm:$0xf] %vm504, %v463
  %529 = vst.msk [vmem:[%s2 + $0x60] sm:$0xf] %vm504, %v464
  %530 = vst.msk [vmem:[%s2 + $0x64] sm:$0xf] %vm504, %v465
  %531 = vst.msk [vmem:[%s2 + $0x68] sm:$0xf] %vm504, %v466
  %532 = vst.msk [vmem:[%s2 + $0x6c] sm:$0xf] %vm504, %v467
  %533 = vst.msk [vmem:[%s2 + $0x70] sm:$0xf] %vm504, %v468
  %534 = vst.msk [vmem:[%s2 + $0x74] sm:$0xf] %vm504, %v469
  %535 = vst.msk [vmem:[%s2 + $0x78] sm:$0xf] %vm504, %v470
  %536 = vst.msk [vmem:[%s2 + $0x7c] sm:$0xf] %vm504, %v471
  %537 = vrot.lane.b32.xlu0 %v440, 112
  %v538 = vpop.permute.xlu0 %537
  %539 = vrot.lane.b32.xlu0 %v441, 112
  %v540 = vpop.permute.xlu0 %539
  %541 = vrot.lane.b32.xlu0 %v442, 112
  %v542 = vpop.permute.xlu0 %541
  %543 = vrot.lane.b32.xlu0 %v443, 112
  %v544 = vpop.permute.xlu0 %543
  %545 = vrot.lane.b32.xlu0 %v444, 112
  %v546 = vpop.permute.xlu0 %545
  %547 = vrot.lane.b32.xlu0 %v445, 112
  %v548 = vpop.permute.xlu0 %547
  %549 = vrot.lane.b32.xlu0 %v446, 112
  %v550 = vpop.permute.xlu0 %549
  %551 = vrot.lane.b32.xlu0 %v447, 112
  %v552 = vpop.permute.xlu0 %551
  %553 = vrot.lane.b32.xlu0 %v448, 112
  %v554 = vpop.permute.xlu0 %553
  %555 = vrot.lane.b32.xlu0 %v449, 112
  %v556 = vpop.permute.xlu0 %555
  %557 = vrot.lane.b32.xlu0 %v450, 112
  %v558 = vpop.permute.xlu0 %557
  %559 = vrot.lane.b32.xlu0 %v451, 112
  %v560 = vpop.permute.xlu0 %559
  %561 = vrot.lane.b32.xlu0 %v452, 112
  %v562 = vpop.permute.xlu0 %561
  %563 = vrot.lane.b32.xlu0 %v453, 112
  %v564 = vpop.permute.xlu0 %563
  %565 = vrot.lane.b32.xlu0 %v454, 112
  %v566 = vpop.permute.xlu0 %565
  %567 = vrot.lane.b32.xlu0 %v455, 112
  %v568 = vpop.permute.xlu0 %567
  %569 = vrot.lane.b32.xlu0 %v456, 112
  %v570 = vpop.permute.xlu0 %569
  %571 = vrot.lane.b32.xlu0 %v457, 112
  %v572 = vpop.permute.xlu0 %571
  %573 = vrot.lane.b32.xlu0 %v458, 112
  %v574 = vpop.permute.xlu0 %573
  %575 = vrot.lane.b32.xlu0 %v459, 112
  %v576 = vpop.permute.xlu0 %575
  %577 = vrot.lane.b32.xlu0 %v460, 112
  %v578 = vpop.permute.xlu0 %577
  %579 = vrot.lane.b32.xlu0 %v461, 112
  %v580 = vpop.permute.xlu0 %579
  %581 = vrot.lane.b32.xlu0 %v462, 112
  %v582 = vpop.permute.xlu0 %581
  %583 = vrot.lane.b32.xlu0 %v463, 112
  %v584 = vpop.permute.xlu0 %583
  %585 = vrot.lane.b32.xlu0 %v464, 112
  %v586 = vpop.permute.xlu0 %585
  %587 = vrot.lane.b32.xlu0 %v465, 112
  %v588 = vpop.permute.xlu0 %587
  %589 = vrot.lane.b32.xlu0 %v466, 112
  %v590 = vpop.permute.xlu0 %589
  %591 = vrot.lane.b32.xlu0 %v467, 112
  %v592 = vpop.permute.xlu0 %591
  %593 = vrot.lane.b32.xlu0 %v468, 112
  %v594 = vpop.permute.xlu0 %593
  %595 = vrot.lane.b32.xlu0 %v469, 112
  %v596 = vpop.permute.xlu0 %595
  %597 = vrot.lane.b32.xlu0 %v470, 112
  %v598 = vpop.permute.xlu0 %597
  %599 = vrot.lane.b32.xlu0 %v471, 112
  %v600 = vpop.permute.xlu0 %599
  %s633 = scalar_lea.vmem %s2, 128
  %634 = vst.msk [vmem:[%s633] sm:$0xf] %vm504, %v538
  %635 = vst.msk [vmem:[%s633 + $0x4] sm:$0xf] %vm504, %v540
  %636 = vst.msk [vmem:[%s633 + $0x8] sm:$0xf] %vm504, %v542
  %637 = vst.msk [vmem:[%s633 + $0xc] sm:$0xf] %vm504, %v544
  %638 = vst.msk [vmem:[%s633 + $0x10] sm:$0xf] %vm504, %v546
  %639 = vst.msk [vmem:[%s633 + $0x14] sm:$0xf] %vm504, %v548
  %640 = vst.msk [vmem:[%s633 + $0x18] sm:$0xf] %vm504, %v550
  %641 = vst.msk [vmem:[%s633 + $0x1c] sm:$0xf] %vm504, %v552
  %642 = vst.msk [vmem:[%s633 + $0x20] sm:$0xf] %vm504, %v554
  %643 = vst.msk [vmem:[%s633 + $0x24] sm:$0xf] %vm504, %v556
  %644 = vst.msk [vmem:[%s633 + $0x28] sm:$0xf] %vm504, %v558
  %645 = vst.msk [vmem:[%s633 + $0x2c] sm:$0xf] %vm504, %v560
  %646 = vst.msk [vmem:[%s633 + $0x30] sm:$0xf] %vm504, %v562
  %647 = vst.msk [vmem:[%s633 + $0x34] sm:$0xf] %vm504, %v564
  %648 = vst.msk [vmem:[%s633 + $0x38] sm:$0xf] %vm504, %v566
  %649 = vst.msk [vmem:[%s633 + $0x3c] sm:$0xf] %vm504, %v568
  %650 = vst.msk [vmem:[%s633 + $0x40] sm:$0xf] %vm504, %v570
  %651 = vst.msk [vmem:[%s633 + $0x44] sm:$0xf] %vm504, %v572
  %652 = vst.msk [vmem:[%s633 + $0x48] sm:$0xf] %vm504, %v574
  %653 = vst.msk [vmem:[%s633 + $0x4c] sm:$0xf] %vm504, %v576
  %654 = vst.msk [vmem:[%s633 + $0x50] sm:$0xf] %vm504, %v578
  %655 = vst.msk [vmem:[%s633 + $0x54] sm:$0xf] %vm504, %v580
  %656 = vst.msk [vmem:[%s633 + $0x58] sm:$0xf] %vm504, %v582
  %657 = vst.msk [vmem:[%s633 + $0x5c] sm:$0xf] %vm504, %v584
  %658 = vst.msk [vmem:[%s633 + $0x60] sm:$0xf] %vm504, %v586
  %659 = vst.msk [vmem:[%s633 + $0x64] sm:$0xf] %vm504, %v588
  %660 = vst.msk [vmem:[%s633 + $0x68] sm:$0xf] %vm504, %v590
  %661 = vst.msk [vmem:[%s633 + $0x6c] sm:$0xf] %vm504, %v592
  %662 = vst.msk [vmem:[%s633 + $0x70] sm:$0xf] %vm504, %v594
  %663 = vst.msk [vmem:[%s633 + $0x74] sm:$0xf] %vm504, %v596
  %664 = vst.msk [vmem:[%s633 + $0x78] sm:$0xf] %vm504, %v598
  %665 = vst.msk [vmem:[%s633 + $0x7c] sm:$0xf] %vm504, %v600
  %698 = vrot.lane.b32.xlu0 %v218, 96
  %v699 = vpop.permute.xlu0 %698
  %700 = vrot.lane.b32.xlu0 %v223, 96
  %v701 = vpop.permute.xlu0 %700
  %702 = vrot.lane.b32.xlu0 %v228, 96
  %v703 = vpop.permute.xlu0 %702
  %704 = vrot.lane.b32.xlu0 %v233, 96
  %v705 = vpop.permute.xlu0 %704
  %706 = vrot.lane.b32.xlu0 %v238, 96
  %v707 = vpop.permute.xlu0 %706
  %708 = vrot.lane.b32.xlu0 %v243, 96
  %v709 = vpop.permute.xlu0 %708
  %710 = vrot.lane.b32.xlu0 %v248, 96
  %v711 = vpop.permute.xlu0 %710
  %712 = vrot.lane.b32.xlu0 %v253, 96
  %v713 = vpop.permute.xlu0 %712
  %714 = vrot.lane.b32.xlu0 %v258, 96
  %v715 = vpop.permute.xlu0 %714
  %716 = vrot.lane.b32.xlu0 %v263, 96
  %v717 = vpop.permute.xlu0 %716
  %718 = vrot.lane.b32.xlu0 %v268, 96
  %v719 = vpop.permute.xlu0 %718
  %720 = vrot.lane.b32.xlu0 %v273, 96
  %v721 = vpop.permute.xlu0 %720
  %722 = vrot.lane.b32.xlu0 %v278, 96
  %v723 = vpop.permute.xlu0 %722
  %724 = vrot.lane.b32.xlu0 %v283, 96
  %v725 = vpop.permute.xlu0 %724
  %726 = vrot.lane.b32.xlu0 %v288, 96
  %v727 = vpop.permute.xlu0 %726
  %728 = vrot.lane.b32.xlu0 %v293, 96
  %v729 = vpop.permute.xlu0 %728
  %730 = vrot.lane.b32.xlu0 %v298, 96
  %v731 = vpop.permute.xlu0 %730
  %732 = vrot.lane.b32.xlu0 %v303, 96
  %v733 = vpop.permute.xlu0 %732
  %734 = vrot.lane.b32.xlu0 %v308, 96
  %v735 = vpop.permute.xlu0 %734
  %736 = vrot.lane.b32.xlu0 %v313, 96
  %v737 = vpop.permute.xlu0 %736
  %738 = vrot.lane.b32.xlu0 %v318, 96
  %v739 = vpop.permute.xlu0 %738
  %740 = vrot.lane.b32.xlu0 %v323, 96
  %v741 = vpop.permute.xlu0 %740
  %742 = vrot.lane.b32.xlu0 %v328, 96
  %v743 = vpop.permute.xlu0 %742
  %744 = vrot.lane.b32.xlu0 %v333, 96
  %v745 = vpop.permute.xlu0 %744
  %746 = vrot.lane.b32.xlu0 %v338, 96
  %v747 = vpop.permute.xlu0 %746
  %748 = vrot.lane.b32.xlu0 %v343, 96
  %v749 = vpop.permute.xlu0 %748
  %750 = vrot.lane.b32.xlu0 %v348, 96
  %v751 = vpop.permute.xlu0 %750
  %752 = vrot.lane.b32.xlu0 %v353, 96
  %v753 = vpop.permute.xlu0 %752
  %754 = vrot.lane.b32.xlu0 %v358, 96
  %v755 = vpop.permute.xlu0 %754
  %756 = vrot.lane.b32.xlu0 %v363, 96
  %v757 = vpop.permute.xlu0 %756
  %758 = vrot.lane.b32.xlu0 %v368, 96
  %v759 = vpop.permute.xlu0 %758
  %760 = vrot.lane.b32.xlu0 %v373, 96
  %v761 = vpop.permute.xlu0 %760
  %vm794 = vcmask 15360
  %795 = vst.msk [vmem:[%s3] sm:$0xff] %vm794, %v699
  %796 = vst.msk [vmem:[%s3 + $0x8] sm:$0xff] %vm794, %v701
  %797 = vst.msk [vmem:[%s3 + $0x10] sm:$0xff] %vm794, %v703
  %798 = vst.msk [vmem:[%s3 + $0x18] sm:$0xff] %vm794, %v705
  %799 = vst.msk [vmem:[%s3 + $0x20] sm:$0xff] %vm794, %v707
  %800 = vst.msk [vmem:[%s3 + $0x28] sm:$0xff] %vm794, %v709
  %801 = vst.msk [vmem:[%s3 + $0x30] sm:$0xff] %vm794, %v711
  %802 = vst.msk [vmem:[%s3 + $0x38] sm:$0xff] %vm794, %v713
  %803 = vst.msk [vmem:[%s3 + $0x40] sm:$0xff] %vm794, %v715
  %804 = vst.msk [vmem:[%s3 + $0x48] sm:$0xff] %vm794, %v717
  %805 = vst.msk [vmem:[%s3 + $0x50] sm:$0xff] %vm794, %v719
  %806 = vst.msk [vmem:[%s3 + $0x58] sm:$0xff] %vm794, %v721
  %807 = vst.msk [vmem:[%s3 + $0x60] sm:$0xff] %vm794, %v723
  %808 = vst.msk [vmem:[%s3 + $0x68] sm:$0xff] %vm794, %v725
  %809 = vst.msk [vmem:[%s3 + $0x70] sm:$0xff] %vm794, %v727
  %810 = vst.msk [vmem:[%s3 + $0x78] sm:$0xff] %vm794, %v729
  %811 = vst.msk [vmem:[%s3 + $0x80] sm:$0xff] %vm794, %v731
  %812 = vst.msk [vmem:[%s3 + $0x88] sm:$0xff] %vm794, %v733
  %813 = vst.msk [vmem:[%s3 + $0x90] sm:$0xff] %vm794, %v735
  %814 = vst.msk [vmem:[%s3 + $0x98] sm:$0xff] %vm794, %v737
  %815 = vst.msk [vmem:[%s3 + $0xa0] sm:$0xff] %vm794, %v739
  %816 = vst.msk [vmem:[%s3 + $0xa8] sm:$0xff] %vm794, %v741
  %817 = vst.msk [vmem:[%s3 + $0xb0] sm:$0xff] %vm794, %v743
  %818 = vst.msk [vmem:[%s3 + $0xb8] sm:$0xff] %vm794, %v745
  %819 = vst.msk [vmem:[%s3 + $0xc0] sm:$0xff] %vm794, %v747
  %820 = vst.msk [vmem:[%s3 + $0xc8] sm:$0xff] %vm794, %v749
  %821 = vst.msk [vmem:[%s3 + $0xd0] sm:$0xff] %vm794, %v751
  %822 = vst.msk [vmem:[%s3 + $0xd8] sm:$0xff] %vm794, %v753
  %823 = vst.msk [vmem:[%s3 + $0xe0] sm:$0xff] %vm794, %v755
  %824 = vst.msk [vmem:[%s3 + $0xe8] sm:$0xff] %vm794, %v757
  %825 = vst.msk [vmem:[%s3 + $0xf0] sm:$0xff] %vm794, %v759
  %826 = vst.msk [vmem:[%s3 + $0xf8] sm:$0xff] %vm794, %v761
  %827 = vrot.lane.b32.xlu0 %v218, 94
  %v828 = vpop.permute.xlu0 %827
  %829 = vrot.lane.b32.xlu0 %v223, 94
  %v830 = vpop.permute.xlu0 %829
  %831 = vrot.lane.b32.xlu0 %v228, 94
  %v832 = vpop.permute.xlu0 %831
  %833 = vrot.lane.b32.xlu0 %v233, 94
  %v834 = vpop.permute.xlu0 %833
  %835 = vrot.lane.b32.xlu0 %v238, 94
  %v836 = vpop.permute.xlu0 %835
  %837 = vrot.lane.b32.xlu0 %v243, 94
  %v838 = vpop.permute.xlu0 %837
  %839 = vrot.lane.b32.xlu0 %v248, 94
  %v840 = vpop.permute.xlu0 %839
  %841 = vrot.lane.b32.xlu0 %v253, 94
  %v842 = vpop.permute.xlu0 %841
  %843 = vrot.lane.b32.xlu0 %v258, 94
  %v844 = vpop.permute.xlu0 %843
  %845 = vrot.lane.b32.xlu0 %v263, 94
  %v846 = vpop.permute.xlu0 %845
  %847 = vrot.lane.b32.xlu0 %v268, 94
  %v848 = vpop.permute.xlu0 %847
  %849 = vrot.lane.b32.xlu0 %v273, 94
  %v850 = vpop.permute.xlu0 %849
  %851 = vrot.lane.b32.xlu0 %v278, 94
  %v852 = vpop.permute.xlu0 %851
  %853 = vrot.lane.b32.xlu0 %v283, 94
  %v854 = vpop.permute.xlu0 %853
  %855 = vrot.lane.b32.xlu0 %v288, 94
  %v856 = vpop.permute.xlu0 %855
  %857 = vrot.lane.b32.xlu0 %v293, 94
  %v858 = vpop.permute.xlu0 %857
  %859 = vrot.lane.b32.xlu0 %v298, 94
  %v860 = vpop.permute.xlu0 %859
  %861 = vrot.lane.b32.xlu0 %v303, 94
  %v862 = vpop.permute.xlu0 %861
  %863 = vrot.lane.b32.xlu0 %v308, 94
  %v864 = vpop.permute.xlu0 %863
  %865 = vrot.lane.b32.xlu0 %v313, 94
  %v866 = vpop.permute.xlu0 %865
  %867 = vrot.lane.b32.xlu0 %v318, 94
  %v868 = vpop.permute.xlu0 %867
  %869 = vrot.lane.b32.xlu0 %v323, 94
  %v870 = vpop.permute.xlu0 %869
  %871 = vrot.lane.b32.xlu0 %v328, 94
  %v872 = vpop.permute.xlu0 %871
  %873 = vrot.lane.b32.xlu0 %v333, 94
  %v874 = vpop.permute.xlu0 %873
  %875 = vrot.lane.b32.xlu0 %v338, 94
  %v876 = vpop.permute.xlu0 %875
  %877 = vrot.lane.b32.xlu0 %v343, 94
  %v878 = vpop.permute.xlu0 %877
  %879 = vrot.lane.b32.xlu0 %v348, 94
  %v880 = vpop.permute.xlu0 %879
  %881 = vrot.lane.b32.xlu0 %v353, 94
  %v882 = vpop.permute.xlu0 %881
  %883 = vrot.lane.b32.xlu0 %v358, 94
  %v884 = vpop.permute.xlu0 %883
  %885 = vrot.lane.b32.xlu0 %v363, 94
  %v886 = vpop.permute.xlu0 %885
  %887 = vrot.lane.b32.xlu0 %v368, 94
  %v888 = vpop.permute.xlu0 %887
  %889 = vrot.lane.b32.xlu0 %v373, 94
  %v890 = vpop.permute.xlu0 %889
  %923 = vst.msk [vmem:[%s4] sm:$0xff] %vm794, %v828
  %924 = vst.msk [vmem:[%s4 + $0x8] sm:$0xff] %vm794, %v830
  %925 = vst.msk [vmem:[%s4 + $0x10] sm:$0xff] %vm794, %v832
  %926 = vst.msk [vmem:[%s4 + $0x18] sm:$0xff] %vm794, %v834
  %927 = vst.msk [vmem:[%s4 + $0x20] sm:$0xff] %vm794, %v836
  %928 = vst.msk [vmem:[%s4 + $0x28] sm:$0xff] %vm794, %v838
  %929 = vst.msk [vmem:[%s4 + $0x30] sm:$0xff] %vm794, %v840
  %930 = vst.msk [vmem:[%s4 + $0x38] sm:$0xff] %vm794, %v842
  %931 = vst.msk [vmem:[%s4 + $0x40] sm:$0xff] %vm794, %v844
  %932 = vst.msk [vmem:[%s4 + $0x48] sm:$0xff] %vm794, %v846
  %933 = vst.msk [vmem:[%s4 + $0x50] sm:$0xff] %vm794, %v848
  %934 = vst.msk [vmem:[%s4 + $0x58] sm:$0xff] %vm794, %v850
  %935 = vst.msk [vmem:[%s4 + $0x60] sm:$0xff] %vm794, %v852
  %936 = vst.msk [vmem:[%s4 + $0x68] sm:$0xff] %vm794, %v854
  %937 = vst.msk [vmem:[%s4 + $0x70] sm:$0xff] %vm794, %v856
  %938 = vst.msk [vmem:[%s4 + $0x78] sm:$0xff] %vm794, %v858
  %939 = vst.msk [vmem:[%s4 + $0x80] sm:$0xff] %vm794, %v860
  %940 = vst.msk [vmem:[%s4 + $0x88] sm:$0xff] %vm794, %v862
  %941 = vst.msk [vmem:[%s4 + $0x90] sm:$0xff] %vm794, %v864
  %942 = vst.msk [vmem:[%s4 + $0x98] sm:$0xff] %vm794, %v866
  %943 = vst.msk [vmem:[%s4 + $0xa0] sm:$0xff] %vm794, %v868
  %944 = vst.msk [vmem:[%s4 + $0xa8] sm:$0xff] %vm794, %v870
  %945 = vst.msk [vmem:[%s4 + $0xb0] sm:$0xff] %vm794, %v872
  %946 = vst.msk [vmem:[%s4 + $0xb8] sm:$0xff] %vm794, %v874
  %947 = vst.msk [vmem:[%s4 + $0xc0] sm:$0xff] %vm794, %v876
  %948 = vst.msk [vmem:[%s4 + $0xc8] sm:$0xff] %vm794, %v878
  %949 = vst.msk [vmem:[%s4 + $0xd0] sm:$0xff] %vm794, %v880
  %950 = vst.msk [vmem:[%s4 + $0xd8] sm:$0xff] %vm794, %v882
  %951 = vst.msk [vmem:[%s4 + $0xe0] sm:$0xff] %vm794, %v884
  %952 = vst.msk [vmem:[%s4 + $0xe8] sm:$0xff] %vm794, %v886
  %953 = vst.msk [vmem:[%s4 + $0xf0] sm:$0xff] %vm794, %v888
  %954 = vst.msk [vmem:[%s4 + $0xf8] sm:$0xff] %vm794, %v890
  // Predicated region
  $region10: #{forward.5} parent=0 // pred_check
    _
  $region11: #{forward.5} parent=0 // pred_check_branch
    %956 = sbr.rel (0) target = $region13
  $region12: #{forward.5} parent=0 // pred_region
    _
  $region13: #{forward.5} parent=0 // pred_fallthru
    _
  // Predicated region
  $region14: #{forward.5} parent=0 // pred_check
    _
  $region15: #{forward.5} parent=0 // pred_check_branch
    %958 = sbr.rel (0) target = $region17
  $region16: #{forward.5} parent=0 // pred_region
    _
  $region17: #{forward.5} parent=0 // pred_fallthru
    _
  // Predicated region
  $region18: #{forward.5} parent=0 // pred_check
    _
  $region19: #{forward.5} parent=0 // pred_check_branch
    %960 = sbr.rel (0) target = $region21
  $region20: #{forward.5} parent=0 // pred_region
    _
  $region21: #{forward.5} parent=0 // pred_fallthru
    _
  // Predicated region
  $region22: #{forward.5} parent=0 // pred_check
    _
  $region23: #{forward.5} parent=0 // pred_check_branch
    %962 = sbr.rel (0) target = $region25
  $region24: #{forward.5} parent=0 // pred_region
    _
  $region25: #{forward.5} parent=0 // pred_fallthru
    _
  // Predicated region
  $region26: #{forward.5} parent=0 // pred_check
    _
  $region27: #{forward.5} parent=0 // pred_check_branch
    %964 = sbr.rel (0) target = $region29
  $region28: #{forward.5} parent=0 // pred_region
    _
  $region29: #{forward.5} parent=0 // pred_fallthru
    _
  // Predicated region
  $region30: #{forward.5} parent=0 // pred_check
    _
  $region31: #{forward.5} parent=0 // pred_check_branch
    %966 = sbr.rel (0) target = $region33
  $region32: #{forward.5} parent=0 // pred_region
    _
  $region33: #{forward.5} parent=0 // pred_fallthru
    _

// kernel: forward.7
$region0: #{forward.7}
  #allocation0 [shape = 'u32[]', space=smem, size = 0x4, offset = 0x4, fixed_abs, tag = 'smem constant byte address 0x4 - core index']
  #allocation1 [shape = 'u32[144,128]{1,0:T(1,128)}', space=vmem, size = 0x12000, scoped, tag = 'internal scratch']
  %s0 = inlined_call_operand.vmem [shape: f32[256,16], index: 0, kind: input, shape index: {}]
  %s1 = inlined_call_operand.vmem [shape: f32[16,36], index: 1, kind: input, shape index: {}]
  %s2 = inlined_call_operand.vmem [shape: bf16[2,256,16], index: 2, kind: output, shape index: {0}]
  %s3 = inlined_call_operand.vmem [shape: f32[256,2], index: 3, kind: output, shape index: {1}]
  %s4 = inlined_call_operand.vmem [shape: f32[256,2], index: 4, kind: output, shape index: {2}]
  %5 = xla_tuple %s2, %s3, %s4
  %s6 = sld [smem:[#allocation0]]
  $region34: #{forward.7} parent=0
    _
  %s8 = ssub.s32 1, %s6
  %s9 = scalar_select 0, %s8, %s6
  // Predicated region
  $region2: #{forward.7} parent=0 // pred_check
    _
  $region3: #{forward.7} parent=0 // pred_check_branch
    %11 = sbr.rel (0) target = $region5
  $region4: #{forward.7} parent=0 // pred_region
    _
  $region5: #{forward.7} parent=0 // pred_fallthru
    _
  // Predicated region
  $region6: #{forward.7} parent=0 // pred_check
    _
  $region7: #{forward.7} parent=0 // pred_check_branch
    %13 = sbr.rel (0) target = $region9
  $region8: #{forward.7} parent=0 // pred_region
    _
  $region9: #{forward.7} parent=0 // pred_fallthru
    _
  %v14 = vld [vmem:[%s0] sm:$0xff]
  %v15 = vld [vmem:[%s0 + $0x8] sm:$0xff]
  %v16 = vld [vmem:[%s0 + $0x10] sm:$0xff]
  %v17 = vld [vmem:[%s0 + $0x18] sm:$0xff]
  %v18 = vld [vmem:[%s0 + $0x20] sm:$0xff]
  %v19 = vld [vmem:[%s0 + $0x28] sm:$0xff]
  %v20 = vld [vmem:[%s0 + $0x30] sm:$0xff]
  %v21 = vld [vmem:[%s0 + $0x38] sm:$0xff]
  %v22 = vld [vmem:[%s0 + $0x40] sm:$0xff]
  %v23 = vld [vmem:[%s0 + $0x48] sm:$0xff]
  %v24 = vld [vmem:[%s0 + $0x50] sm:$0xff]
  %v25 = vld [vmem:[%s0 + $0x58] sm:$0xff]
  %v26 = vld [vmem:[%s0 + $0x60] sm:$0xff]
  %v27 = vld [vmem:[%s0 + $0x68] sm:$0xff]
  %v28 = vld [vmem:[%s0 + $0x70] sm:$0xff]
  %v29 = vld [vmem:[%s0 + $0x78] sm:$0xff]
  %v30 = vld [vmem:[%s0 + $0x80] sm:$0xff]
  %v31 = vld [vmem:[%s0 + $0x88] sm:$0xff]
  %v32 = vld [vmem:[%s0 + $0x90] sm:$0xff]
  %v33 = vld [vmem:[%s0 + $0x98] sm:$0xff]
  %v34 = vld [vmem:[%s0 + $0xa0] sm:$0xff]
  %v35 = vld [vmem:[%s0 + $0xa8] sm:$0xff]
  %v36 = vld [vmem:[%s0 + $0xb0] sm:$0xff]
  %v37 = vld [vmem:[%s0 + $0xb8] sm:$0xff]
  %v38 = vld [vmem:[%s0 + $0xc0] sm:$0xff]
  %v39 = vld [vmem:[%s0 + $0xc8] sm:$0xff]
  %v40 = vld [vmem:[%s0 + $0xd0] sm:$0xff]
  %v41 = vld [vmem:[%s0 + $0xd8] sm:$0xff]
  %v42 = vld [vmem:[%s0 + $0xe0] sm:$0xff]
  %v43 = vld [vmem:[%s0 + $0xe8] sm:$0xff]
  %v44 = vld [vmem:[%s0 + $0xf0] sm:$0xff]
  %v45 = vld [vmem:[%s0 + $0xf8] sm:$0xff]
  %v46 = vld [vmem:[%s1] sm:$0xff]
  %v47 = vld [vmem:[%s1 + $0x8] sm:$0xff]
  %vm48 = vcmask 130048
  %v50 = vsel %vm48, %v14, 0
  %v53 = vsel %vm48, %v15, 0
  %v56 = vsel %vm48, %v16, 0
  %v59 = vsel %vm48, %v17, 0
  %v62 = vsel %vm48, %v18, 0
  %v65 = vsel %vm48, %v19, 0
  %v68 = vsel %vm48, %v20, 0
  %v71 = vsel %vm48, %v21, 0
  %v74 = vsel %vm48, %v22, 0
  %v77 = vsel %vm48, %v23, 0
  %v80 = vsel %vm48, %v24, 0
  %v83 = vsel %vm48, %v25, 0
  %v86 = vsel %vm48, %v26, 0
  %v89 = vsel %vm48, %v27, 0
  %v92 = vsel %vm48, %v28, 0
  %v95 = vsel %vm48, %v29, 0
  %v98 = vsel %vm48, %v30, 0
  %v101 = vsel %vm48, %v31, 0
  %v104 = vsel %vm48, %v32, 0
  %v107 = vsel %vm48, %v33, 0
  %v110 = vsel %vm48, %v34, 0
  %v113 = vsel %vm48, %v35, 0
  %v116 = vsel %vm48, %v36, 0
  %v119 = vsel %vm48, %v37, 0
  %v122 = vsel %vm48, %v38, 0
  %v125 = vsel %vm48, %v39, 0
  %v128 = vsel %vm48, %v40, 0
  %v131 = vsel %vm48, %v41, 0
  %v134 = vsel %vm48, %v42, 0
  %v137 = vsel %vm48, %v43, 0
  %v140 = vsel %vm48, %v44, 0
  %v143 = vsel %vm48, %v45, 0
  %145 = vmatprep.subr.mxu0 0.0
  %146 = vmatpush1.msra.mxu0 %v46
  %147 = vmatprep.subr.mxu0 0.0
  %148 = vmatpush1.msra.mxu0 %v47
  %149 = vmatprep.subr.mxu0 0.0
  %150 = vmatpush1.msra.mxu0 0.0
  %151 = vmatprep.subr.mxu0 0.0
  %152 = vmatpush1.msra.mxu0 0.0
  %153 = vmatprep.subr.mxu0 0.0
  %154 = vmatpush1.msra.mxu0 0.0
  %155 = vmatprep.subr.mxu0 0.0
  %156 = vmatpush1.msra.mxu0 0.0
  %157 = vmatprep.subr.mxu0 0.0
  %158 = vmatpush1.msra.mxu0 0.0
  %159 = vmatprep.subr.mxu0 0.0
  %160 = vmatpush1.msra.mxu0 0.0
  %161 = vmatprep.subr.mxu0 0.0
  %162 = vmatpush1.msra.mxu0 0.0
  %163 = vmatprep.subr.mxu0 0.0
  %164 = vmatpush1.msra.mxu0 0.0
  %165 = vmatprep.subr.mxu0 0.0
  %166 = vmatpush1.msra.mxu0 0.0
  %167 = vmatprep.subr.mxu0 0.0
  %168 = vmatpush1.msra.mxu0 0.0
  %169 = vmatprep.subr.mxu0 0.0
  %170 = vmatpush1.msra.mxu0 0.0
  %171 = vmatprep.subr.mxu0 0.0
  %172 = vmatpush1.msra.mxu0 0.0
  %173 = vmatprep.subr.mxu0 0.0
  %174 = vmatpush1.msra.mxu0 0.0
  %175 = vmatprep.subr.mxu0 0.0
  %176 = vmatpush1.msra.mxu0 0.0
  %177 = vmatprep.subr.mxu0 0.0
  %178 = vmatpush1.msra.mxu0 0.0
  %179 = vmatprep.subr.mxu0 0.0
  %180 = vmatpush1.msra.mxu0 0.0
  %181 = vmatprep.subr.mxu0 0.0
  %182 = vmatpush1.msra.mxu0 0.0
  %183 = vmatprep.subr.mxu0 0.0
  %184 = vmatpush1.msra.mxu0 0.0
  %185 = vmatprep.subr.mxu0 0.0
  %186 = vmatpush1.msra.mxu0 0.0
  %187 = vmatprep.subr.mxu0 0.0
  %188 = vmatpush1.msra.mxu0 0.0
  %189 = vmatprep.subr.mxu0 0.0
  %190 = vmatpush1.msra.mxu0 0.0
  %191 = vmatprep.subr.mxu0 0.0
  %192 = vmatpush1.msra.mxu0 0.0
  %193 = vmatprep.subr.mxu0 0.0
  %194 = vmatpush1.msra.mxu0 0.0
  %195 = vmatprep.subr.mxu0 0.0
  %196 = vmatpush1.msra.mxu0 0.0
  %197 = vmatprep.subr.mxu0 0.0
  %198 = vmatpush1.msra.mxu0 0.0
  %199 = vmatprep.subr.mxu0 0.0
  %200 = vmatpush1.msra.mxu0 0.0
  %201 = vmatprep.subr.mxu0 0.0
  %202 = vmatpush1.msra.mxu0 0.0
  %203 = vmatprep.subr.mxu0 0.0
  %204 = vmatpush1.msra.mxu0 0.0
  %205 = vmatprep.subr.mxu0 0.0
  %206 = vmatpush1.msra.mxu0 0.0
  %207 = vmatprep.subr.mxu0 0.0
  %208 = vmatpush1.msra.mxu0 0.0
  %209 = vmatprep.mubr.f32.mxu0 0.0
  %210 = vmatmul.mubr.f32.gmra.mrb[0].mxu0 %v50
  %v211 = vpop.f32.mrb[0].mxu0
  %v212 = vadd.f32 0.0, %v211
  %v213 = vpop.f32.mrb[0].mxu0
  %214 = vmatprep.mubr.f32.mxu0 0.0
  %215 = vmatmul.mubr.f32.gmra.mrb[0].mxu0 %v53
  %v216 = vpop.f32.mrb[0].mxu0
  %v217 = vadd.f32 0.0, %v216
  %v218 = vpop.f32.mrb[0].mxu0
  %219 = vmatprep.mubr.f32.mxu0 0.0
  %220 = vmatmul.mubr.f32.gmra.mrb[0].mxu0 %v56
  %v221 = vpop.f32.mrb[0].mxu0
  %v222 = vadd.f32 0.0, %v221
  %v223 = vpop.f32.mrb[0].mxu0
  %224 = vmatprep.mubr.f32.mxu0 0.0
  %225 = vmatmul.mubr.f32.gmra.mrb[0].mxu0 %v59
  %v226 = vpop.f32.mrb[0].mxu0
  %v227 = vadd.f32 0.0, %v226
  %v228 = vpop.f32.mrb[0].mxu0
  %229 = vmatprep.mubr.f32.mxu0 0.0
  %230 = vmatmul.mubr.f32.gmra.mrb[0].mxu0 %v62
  %v231 = vpop.f32.mrb[0].mxu0
  %v232 = vadd.f32 0.0, %v231
  %v233 = vpop.f32.mrb[0].mxu0
  %234 = vmatprep.mubr.f32.mxu0 0.0
  %235 = vmatmul.mubr.f32.gmra.mrb[0].mxu0 %v65
  %v236 = vpop.f32.mrb[0].mxu0
  %v237 = vadd.f32 0.0, %v236
  %v238 = vpop.f32.mrb[0].mxu0
  %239 = vmatprep.mubr.f32.mxu0 0.0
  %240 = vmatmul.mubr.f32.gmra.mrb[0].mxu0 %v68
  %v241 = vpop.f32.mrb[0].mxu0
  %v242 = vadd.f32 0.0, %v241
  %v243 = vpop.f32.mrb[0].mxu0
  %244 = vmatprep.mubr.f32.mxu0 0.0
  %245 = vmatmul.mubr.f32.gmra.mrb[0].mxu0 %v71
  %v246 = vpop.f32.mrb[0].mxu0
  %v247 = vadd.f32 0.0, %v246
  %v248 = vpop.f32.mrb[0].mxu0
  %249 = vmatprep.mubr.f32.mxu0 0.0
  %250 = vmatmul.mubr.f32.gmra.mrb[0].mxu0 %v74
  %v251 = vpop.f32.mrb[0].mxu0
  %v252 = vadd.f32 0.0, %v251
  %v253 = vpop.f32.mrb[0].mxu0
  %254 = vmatprep.mubr.f32.mxu0 0.0
  %255 = vmatmul.mubr.f32.gmra.mrb[0].mxu0 %v77
  %v256 = vpop.f32.mrb[0].mxu0
  %v257 = vadd.f32 0.0, %v256
  %v258 = vpop.f32.mrb[0].mxu0
  %259 = vmatprep.mubr.f32.mxu0 0.0
  %260 = vmatmul.mubr.f32.gmra.mrb[0].mxu0 %v80
  %v261 = vpop.f32.mrb[0].mxu0
  %v262 = vadd.f32 0.0, %v261
  %v263 = vpop.f32.mrb[0].mxu0
  %264 = vmatprep.mubr.f32.mxu0 0.0
  %265 = vmatmul.mubr.f32.gmra.mrb[0].mxu0 %v83
  %v266 = vpop.f32.mrb[0].mxu0
  %v267 = vadd.f32 0.0, %v266
  %v268 = vpop.f32.mrb[0].mxu0
  %269 = vmatprep.mubr.f32.mxu0 0.0
  %270 = vmatmul.mubr.f32.gmra.mrb[0].mxu0 %v86
  %v271 = vpop.f32.mrb[0].mxu0
  %v272 = vadd.f32 0.0, %v271
  %v273 = vpop.f32.mrb[0].mxu0
  %274 = vmatprep.mubr.f32.mxu0 0.0
  %275 = vmatmul.mubr.f32.gmra.mrb[0].mxu0 %v89
  %v276 = vpop.f32.mrb[0].mxu0
  %v277 = vadd.f32 0.0, %v276
  %v278 = vpop.f32.mrb[0].mxu0
  %279 = vmatprep.mubr.f32.mxu0 0.0
  %280 = vmatmul.mubr.f32.gmra.mrb[0].mxu0 %v92
  %v281 = vpop.f32.mrb[0].mxu0
  %v282 = vadd.f32 0.0, %v281
  %v283 = vpop.f32.mrb[0].mxu0
  %284 = vmatprep.mubr.f32.mxu0 0.0
  %285 = vmatmul.mubr.f32.gmra.mrb[0].mxu0 %v95
  %v286 = vpop.f32.mrb[0].mxu0
  %v287 = vadd.f32 0.0, %v286
  %v288 = vpop.f32.mrb[0].mxu0
  %289 = vmatprep.mubr.f32.mxu0 0.0
  %290 = vmatmul.mubr.f32.gmra.mrb[0].mxu0 %v98
  %v291 = vpop.f32.mrb[0].mxu0
  %v292 = vadd.f32 0.0, %v291
  %v293 = vpop.f32.mrb[0].mxu0
  %294 = vmatprep.mubr.f32.mxu0 0.0
  %295 = vmatmul.mubr.f32.gmra.mrb[0].mxu0 %v101
  %v296 = vpop.f32.mrb[0].mxu0
  %v297 = vadd.f32 0.0, %v296
  %v298 = vpop.f32.mrb[0].mxu0
  %299 = vmatprep.mubr.f32.mxu0 0.0
  %300 = vmatmul.mubr.f32.gmra.mrb[0].mxu0 %v104
  %v301 = vpop.f32.mrb[0].mxu0
  %v302 = vadd.f32 0.0, %v301
  %v303 = vpop.f32.mrb[0].mxu0
  %304 = vmatprep.mubr.f32.mxu0 0.0
  %305 = vmatmul.mubr.f32.gmra.mrb[0].mxu0 %v107
  %v306 = vpop.f32.mrb[0].mxu0
  %v307 = vadd.f32 0.0, %v306
  %v308 = vpop.f32.mrb[0].mxu0
  %309 = vmatprep.mubr.f32.mxu0 0.0
  %310 = vmatmul.mubr.f32.gmra.mrb[0].mxu0 %v110
  %v311 = vpop.f32.mrb[0].mxu0
  %v312 = vadd.f32 0.0, %v311
  %v313 = vpop.f32.mrb[0].mxu0
  %314 = vmatprep.mubr.f32.mxu0 0.0
  %315 = vmatmul.mubr.f32.gmra.mrb[0].mxu0 %v113
  %v316 = vpop.f32.mrb[0].mxu0
  %v317 = vadd.f32 0.0, %v316
  %v318 = vpop.f32.mrb[0].mxu0
  %319 = vmatprep.mubr.f32.mxu0 0.0
  %320 = vmatmul.mubr.f32.gmra.mrb[0].mxu0 %v116
  %v321 = vpop.f32.mrb[0].mxu0
  %v322 = vadd.f32 0.0, %v321
  %v323 = vpop.f32.mrb[0].mxu0
  %324 = vmatprep.mubr.f32.mxu0 0.0
  %325 = vmatmul.mubr.f32.gmra.mrb[0].mxu0 %v119
  %v326 = vpop.f32.mrb[0].mxu0
  %v327 = vadd.f32 0.0, %v326
  %v328 = vpop.f32.mrb[0].mxu0
  %329 = vmatprep.mubr.f32.mxu0 0.0
  %330 = vmatmul.mubr.f32.gmra.mrb[0].mxu0 %v122
  %v331 = vpop.f32.mrb[0].mxu0
  %v332 = vadd.f32 0.0, %v331
  %v333 = vpop.f32.mrb[0].mxu0
  %334 = vmatprep.mubr.f32.mxu0 0.0
  %335 = vmatmul.mubr.f32.gmra.mrb[0].mxu0 %v125
  %v336 = vpop.f32.mrb[0].mxu0
  %v337 = vadd.f32 0.0, %v336
  %v338 = vpop.f32.mrb[0].mxu0
  %339 = vmatprep.mubr.f32.mxu0 0.0
  %340 = vmatmul.mubr.f32.gmra.mrb[0].mxu0 %v128
  %v341 = vpop.f32.mrb[0].mxu0
  %v342 = vadd.f32 0.0, %v341
  %v343 = vpop.f32.mrb[0].mxu0
  %344 = vmatprep.mubr.f32.mxu0 0.0
  %345 = vmatmul.mubr.f32.gmra.mrb[0].mxu0 %v131
  %v346 = vpop.f32.mrb[0].mxu0
  %v347 = vadd.f32 0.0, %v346
  %v348 = vpop.f32.mrb[0].mxu0
  %349 = vmatprep.mubr.f32.mxu0 0.0
  %350 = vmatmul.mubr.f32.gmra.mrb[0].mxu0 %v134
  %v351 = vpop.f32.mrb[0].mxu0
  %v352 = vadd.f32 0.0, %v351
  %v353 = vpop.f32.mrb[0].mxu0
  %354 = vmatprep.mubr.f32.mxu0 0.0
  %355 = vmatmul.mubr.f32.gmra.mrb[0].mxu0 %v137
  %v356 = vpop.f32.mrb[0].mxu0
  %v357 = vadd.f32 0.0, %v356
  %v358 = vpop.f32.mrb[0].mxu0
  %359 = vmatprep.mubr.f32.mxu0 0.0
  %360 = vmatmul.mubr.f32.gmra.mrb[0].mxu0 %v140
  %v361 = vpop.f32.mrb[0].mxu0
  %v362 = vadd.f32 0.0, %v361
  %v363 = vpop.f32.mrb[0].mxu0
  %364 = vmatprep.mubr.f32.mxu0 0.0
  %365 = vmatmul.mubr.f32.gmra.mrb[0].mxu0 %v143
  %v366 = vpop.f32.mrb[0].mxu0
  %v367 = vadd.f32 0.0, %v366
  %v368 = vpop.f32.mrb[0].mxu0
  %369 = vdwg.mxu0
  %v370 = vpack.c.bf16 %v217, %v212
  %v371 = vpack.c.bf16 %v227, %v222
  %v372 = vpack.c.bf16 %v237, %v232
  %v373 = vpack.c.bf16 %v247, %v242
  %v374 = vpack.c.bf16 %v257, %v252
  %v375 = vpack.c.bf16 %v267, %v262
  %v376 = vpack.c.bf16 %v277, %v272
  %v377 = vpack.c.bf16 %v287, %v282
  %v378 = vpack.c.bf16 %v297, %v292
  %v379 = vpack.c.bf16 %v307, %v302
  %v380 = vpack.c.bf16 %v317, %v312
  %v381 = vpack.c.bf16 %v327, %v322
  %v382 = vpack.c.bf16 %v337, %v332
  %v383 = vpack.c.bf16 %v347, %v342
  %v384 = vpack.c.bf16 %v357, %v352
  %v385 = vpack.c.bf16 %v367, %v362
  %v402 = vunpack.c.l.b16 %v370
  %v403 = vunpack.c.h.b16 %v370
  %v404 = vunpack.c.l.b16 %v371
  %v405 = vunpack.c.h.b16 %v371
  %v406 = vunpack.c.l.b16 %v372
  %v407 = vunpack.c.h.b16 %v372
  %v408 = vunpack.c.l.b16 %v373
  %v409 = vunpack.c.h.b16 %v373
  %v410 = vunpack.c.l.b16 %v374
  %v411 = vunpack.c.h.b16 %v374
  %v412 = vunpack.c.l.b16 %v375
  %v413 = vunpack.c.h.b16 %v375
  %v414 = vunpack.c.l.b16 %v376
  %v415 = vunpack.c.h.b16 %v376
  %v416 = vunpack.c.l.b16 %v377
  %v417 = vunpack.c.h.b16 %v377
  %v418 = vunpack.c.l.b16 %v378
  %v419 = vunpack.c.h.b16 %v378
  %v420 = vunpack.c.l.b16 %v379
  %v421 = vunpack.c.h.b16 %v379
  %v422 = vunpack.c.l.b16 %v380
  %v423 = vunpack.c.h.b16 %v380
  %v424 = vunpack.c.l.b16 %v381
  %v425 = vunpack.c.h.b16 %v381
  %v426 = vunpack.c.l.b16 %v382
  %v427 = vunpack.c.h.b16 %v382
  %v428 = vunpack.c.l.b16 %v383
  %v429 = vunpack.c.h.b16 %v383
  %v430 = vunpack.c.l.b16 %v384
  %v431 = vunpack.c.h.b16 %v384
  %v432 = vunpack.c.l.b16 %v385
  %v433 = vunpack.c.h.b16 %v385
  %v434 = vpack.c.b16 %v402, %v402
  %v435 = vpack.c.b16 %v403, %v403
  %v436 = vpack.c.b16 %v404, %v404
  %v437 = vpack.c.b16 %v405, %v405
  %v438 = vpack.c.b16 %v406, %v406
  %v439 = vpack.c.b16 %v407, %v407
  %v440 = vpack.c.b16 %v408, %v408
  %v441 = vpack.c.b16 %v409, %v409
  %v442 = vpack.c.b16 %v410, %v410
  %v443 = vpack.c.b16 %v411, %v411
  %v444 = vpack.c.b16 %v412, %v412
  %v445 = vpack.c.b16 %v413, %v413
  %v446 = vpack.c.b16 %v414, %v414
  %v447 = vpack.c.b16 %v415, %v415
  %v448 = vpack.c.b16 %v416, %v416
  %v449 = vpack.c.b16 %v417, %v417
  %v450 = vpack.c.b16 %v418, %v418
  %v451 = vpack.c.b16 %v419, %v419
  %v452 = vpack.c.b16 %v420, %v420
  %v453 = vpack.c.b16 %v421, %v421
  %v454 = vpack.c.b16 %v422, %v422
  %v455 = vpack.c.b16 %v423, %v423
  %v456 = vpack.c.b16 %v424, %v424
  %v457 = vpack.c.b16 %v425, %v425
  %v458 = vpack.c.b16 %v426, %v426
  %v459 = vpack.c.b16 %v427, %v427
  %v460 = vpack.c.b16 %v428, %v428
  %v461 = vpack.c.b16 %v429, %v429
  %v462 = vpack.c.b16 %v430, %v430
  %v463 = vpack.c.b16 %v431, %v431
  %v464 = vpack.c.b16 %v432, %v432
  %v465 = vpack.c.b16 %v433, %v433
  %vm498 = vcmask 125952
  %499 = vst.msk [vmem:[%s2] sm:$0xf] %vm498, %v434
  %500 = vst.msk [vmem:[%s2 + $0x4] sm:$0xf] %vm498, %v435
  %501 = vst.msk [vmem:[%s2 + $0x8] sm:$0xf] %vm498, %v436
  %502 = vst.msk [vmem:[%s2 + $0xc] sm:$0xf] %vm498, %v437
  %503 = vst.msk [vmem:[%s2 + $0x10] sm:$0xf] %vm498, %v438
  %504 = vst.msk [vmem:[%s2 + $0x14] sm:$0xf] %vm498, %v439
  %505 = vst.msk [vmem:[%s2 + $0x18] sm:$0xf] %vm498, %v440
  %506 = vst.msk [vmem:[%s2 + $0x1c] sm:$0xf] %vm498, %v441
  %507 = vst.msk [vmem:[%s2 + $0x20] sm:$0xf] %vm498, %v442
  %508 = vst.msk [vmem:[%s2 + $0x24] sm:$0xf] %vm498, %v443
  %509 = vst.msk [vmem:[%s2 + $0x28] sm:$0xf] %vm498, %v444
  %510 = vst.msk [vmem:[%s2 + $0x2c] sm:$0xf] %vm498, %v445
  %511 = vst.msk [vmem:[%s2 + $0x30] sm:$0xf] %vm498, %v446
  %512 = vst.msk [vmem:[%s2 + $0x34] sm:$0xf] %vm498, %v447
  %513 = vst.msk [vmem:[%s2 + $0x38] sm:$0xf] %vm498, %v448
  %514 = vst.msk [vmem:[%s2 + $0x3c] sm:$0xf] %vm498, %v449
  %515 = vst.msk [vmem:[%s2 + $0x40] sm:$0xf] %vm498, %v450
  %516 = vst.msk [vmem:[%s2 + $0x44] sm:$0xf] %vm498, %v451
  %517 = vst.msk [vmem:[%s2 + $0x48] sm:$0xf] %vm498, %v452
  %518 = vst.msk [vmem:[%s2 + $0x4c] sm:$0xf] %vm498, %v453
  %519 = vst.msk [vmem:[%s2 + $0x50] sm:$0xf] %vm498, %v454
  %520 = vst.msk [vmem:[%s2 + $0x54] sm:$0xf] %vm498, %v455
  %521 = vst.msk [vmem:[%s2 + $0x58] sm:$0xf] %vm498, %v456
  %522 = vst.msk [vmem:[%s2 + $0x5c] sm:$0xf] %vm498, %v457
  %523 = vst.msk [vmem:[%s2 + $0x60] sm:$0xf] %vm498, %v458
  %524 = vst.msk [vmem:[%s2 + $0x64] sm:$0xf] %vm498, %v459
  %525 = vst.msk [vmem:[%s2 + $0x68] sm:$0xf] %vm498, %v460
  %526 = vst.msk [vmem:[%s2 + $0x6c] sm:$0xf] %vm498, %v461
  %527 = vst.msk [vmem:[%s2 + $0x70] sm:$0xf] %vm498, %v462
  %528 = vst.msk [vmem:[%s2 + $0x74] sm:$0xf] %vm498, %v463
  %529 = vst.msk [vmem:[%s2 + $0x78] sm:$0xf] %vm498, %v464
  %530 = vst.msk [vmem:[%s2 + $0x7c] sm:$0xf] %vm498, %v465
  %531 = vrot.lane.b32.xlu0 %v434, 112
  %v532 = vpop.permute.xlu0 %531
  %533 = vrot.lane.b32.xlu0 %v435, 112
  %v534 = vpop.permute.xlu0 %533
  %535 = vrot.lane.b32.xlu0 %v436, 112
  %v536 = vpop.permute.xlu0 %535
  %537 = vrot.lane.b32.xlu0 %v437, 112
  %v538 = vpop.permute.xlu0 %537
  %539 = vrot.lane.b32.xlu0 %v438, 112
  %v540 = vpop.permute.xlu0 %539
  %541 = vrot.lane.b32.xlu0 %v439, 112
  %v542 = vpop.permute.xlu0 %541
  %543 = vrot.lane.b32.xlu0 %v440, 112
  %v544 = vpop.permute.xlu0 %543
  %545 = vrot.lane.b32.xlu0 %v441, 112
  %v546 = vpop.permute.xlu0 %545
  %547 = vrot.lane.b32.xlu0 %v442, 112
  %v548 = vpop.permute.xlu0 %547
  %549 = vrot.lane.b32.xlu0 %v443, 112
  %v550 = vpop.permute.xlu0 %549
  %551 = vrot.lane.b32.xlu0 %v444, 112
  %v552 = vpop.permute.xlu0 %551
  %553 = vrot.lane.b32.xlu0 %v445, 112
  %v554 = vpop.permute.xlu0 %553
  %555 = vrot.lane.b32.xlu0 %v446, 112
  %v556 = vpop.permute.xlu0 %555
  %557 = vrot.lane.b32.xlu0 %v447, 112
  %v558 = vpop.permute.xlu0 %557
  %559 = vrot.lane.b32.xlu0 %v448, 112
  %v560 = vpop.permute.xlu0 %559
  %561 = vrot.lane.b32.xlu0 %v449, 112
  %v562 = vpop.permute.xlu0 %561
  %563 = vrot.lane.b32.xlu0 %v450, 112
  %v564 = vpop.permute.xlu0 %563
  %565 = vrot.lane.b32.xlu0 %v451, 112
  %v566 = vpop.permute.xlu0 %565
  %567 = vrot.lane.b32.xlu0 %v452, 112
  %v568 = vpop.permute.xlu0 %567
  %569 = vrot.lane.b32.xlu0 %v453, 112
  %v570 = vpop.permute.xlu0 %569
  %571 = vrot.lane.b32.xlu0 %v454, 112
  %v572 = vpop.permute.xlu0 %571
  %573 = vrot.lane.b32.xlu0 %v455, 112
  %v574 = vpop.permute.xlu0 %573
  %575 = vrot.lane.b32.xlu0 %v456, 112
  %v576 = vpop.permute.xlu0 %575
  %577 = vrot.lane.b32.xlu0 %v457, 112
  %v578 = vpop.permute.xlu0 %577
  %579 = vrot.lane.b32.xlu0 %v458, 112
  %v580 = vpop.permute.xlu0 %579
  %581 = vrot.lane.b32.xlu0 %v459, 112
  %v582 = vpop.permute.xlu0 %581
  %583 = vrot.lane.b32.xlu0 %v460, 112
  %v584 = vpop.permute.xlu0 %583
  %585 = vrot.lane.b32.xlu0 %v461, 112
  %v586 = vpop.permute.xlu0 %585
  %587 = vrot.lane.b32.xlu0 %v462, 112
  %v588 = vpop.permute.xlu0 %587
  %589 = vrot.lane.b32.xlu0 %v463, 112
  %v590 = vpop.permute.xlu0 %589
  %591 = vrot.lane.b32.xlu0 %v464, 112
  %v592 = vpop.permute.xlu0 %591
  %593 = vrot.lane.b32.xlu0 %v465, 112
  %v594 = vpop.permute.xlu0 %593
  %s627 = scalar_lea.vmem %s2, 128
  %628 = vst.msk [vmem:[%s627] sm:$0xf] %vm498, %v532
  %629 = vst.msk [vmem:[%s627 + $0x4] sm:$0xf] %vm498, %v534
  %630 = vst.msk [vmem:[%s627 + $0x8] sm:$0xf] %vm498, %v536
  %631 = vst.msk [vmem:[%s627 + $0xc] sm:$0xf] %vm498, %v538
  %632 = vst.msk [vmem:[%s627 + $0x10] sm:$0xf] %vm498, %v540
  %633 = vst.msk [vmem:[%s627 + $0x14] sm:$0xf] %vm498, %v542
  %634 = vst.msk [vmem:[%s627 + $0x18] sm:$0xf] %vm498, %v544
  %635 = vst.msk [vmem:[%s627 + $0x1c] sm:$0xf] %vm498, %v546
  %636 = vst.msk [vmem:[%s627 + $0x20] sm:$0xf] %vm498, %v548
  %637 = vst.msk [vmem:[%s627 + $0x24] sm:$0xf] %vm498, %v550
  %638 = vst.msk [vmem:[%s627 + $0x28] sm:$0xf] %vm498, %v552
  %639 = vst.msk [vmem:[%s627 + $0x2c] sm:$0xf] %vm498, %v554
  %640 = vst.msk [vmem:[%s627 + $0x30] sm:$0xf] %vm498, %v556
  %641 = vst.msk [vmem:[%s627 + $0x34] sm:$0xf] %vm498, %v558
  %642 = vst.msk [vmem:[%s627 + $0x38] sm:$0xf] %vm498, %v560
  %643 = vst.msk [vmem:[%s627 + $0x3c] sm:$0xf] %vm498, %v562
  %644 = vst.msk [vmem:[%s627 + $0x40] sm:$0xf] %vm498, %v564
  %645 = vst.msk [vmem:[%s627 + $0x44] sm:$0xf] %vm498, %v566
  %646 = vst.msk [vmem:[%s627 + $0x48] sm:$0xf] %vm498, %v568
  %647 = vst.msk [vmem:[%s627 + $0x4c] sm:$0xf] %vm498, %v570
  %648 = vst.msk [vmem:[%s627 + $0x50] sm:$0xf] %vm498, %v572
  %649 = vst.msk [vmem:[%s627 + $0x54] sm:$0xf] %vm498, %v574
  %650 = vst.msk [vmem:[%s627 + $0x58] sm:$0xf] %vm498, %v576
  %651 = vst.msk [vmem:[%s627 + $0x5c] sm:$0xf] %vm498, %v578
  %652 = vst.msk [vmem:[%s627 + $0x60] sm:$0xf] %vm498, %v580
  %653 = vst.msk [vmem:[%s627 + $0x64] sm:$0xf] %vm498, %v582
  %654 = vst.msk [vmem:[%s627 + $0x68] sm:$0xf] %vm498, %v584
  %655 = vst.msk [vmem:[%s627 + $0x6c] sm:$0xf] %vm498, %v586
  %656 = vst.msk [vmem:[%s627 + $0x70] sm:$0xf] %vm498, %v588
  %657 = vst.msk [vmem:[%s627 + $0x74] sm:$0xf] %vm498, %v590
  %658 = vst.msk [vmem:[%s627 + $0x78] sm:$0xf] %vm498, %v592
  %659 = vst.msk [vmem:[%s627 + $0x7c] sm:$0xf] %vm498, %v594
  %692 = vrot.lane.b32.xlu0 %v212, 96
  %v693 = vpop.permute.xlu0 %692
  %694 = vrot.lane.b32.xlu0 %v217, 96
  %v695 = vpop.permute.xlu0 %694
  %696 = vrot.lane.b32.xlu0 %v222, 96
  %v697 = vpop.permute.xlu0 %696
  %698 = vrot.lane.b32.xlu0 %v227, 96
  %v699 = vpop.permute.xlu0 %698
  %700 = vrot.lane.b32.xlu0 %v232, 96
  %v701 = vpop.permute.xlu0 %700
  %702 = vrot.lane.b32.xlu0 %v237, 96
  %v703 = vpop.permute.xlu0 %702
  %704 = vrot.lane.b32.xlu0 %v242, 96
  %v705 = vpop.permute.xlu0 %704
  %706 = vrot.lane.b32.xlu0 %v247, 96
  %v707 = vpop.permute.xlu0 %706
  %708 = vrot.lane.b32.xlu0 %v252, 96
  %v709 = vpop.permute.xlu0 %708
  %710 = vrot.lane.b32.xlu0 %v257, 96
  %v711 = vpop.permute.xlu0 %710
  %712 = vrot.lane.b32.xlu0 %v262, 96
  %v713 = vpop.permute.xlu0 %712
  %714 = vrot.lane.b32.xlu0 %v267, 96
  %v715 = vpop.permute.xlu0 %714
  %716 = vrot.lane.b32.xlu0 %v272, 96
  %v717 = vpop.permute.xlu0 %716
  %718 = vrot.lane.b32.xlu0 %v277, 96
  %v719 = vpop.permute.xlu0 %718
  %720 = vrot.lane.b32.xlu0 %v282, 96
  %v721 = vpop.permute.xlu0 %720
  %722 = vrot.lane.b32.xlu0 %v287, 96
  %v723 = vpop.permute.xlu0 %722
  %724 = vrot.lane.b32.xlu0 %v292, 96
  %v725 = vpop.permute.xlu0 %724
  %726 = vrot.lane.b32.xlu0 %v297, 96
  %v727 = vpop.permute.xlu0 %726
  %728 = vrot.lane.b32.xlu0 %v302, 96
  %v729 = vpop.permute.xlu0 %728
  %730 = vrot.lane.b32.xlu0 %v307, 96
  %v731 = vpop.permute.xlu0 %730
  %732 = vrot.lane.b32.xlu0 %v312, 96
  %v733 = vpop.permute.xlu0 %732
  %734 = vrot.lane.b32.xlu0 %v317, 96
  %v735 = vpop.permute.xlu0 %734
  %736 = vrot.lane.b32.xlu0 %v322, 96
  %v737 = vpop.permute.xlu0 %736
  %738 = vrot.lane.b32.xlu0 %v327, 96
  %v739 = vpop.permute.xlu0 %738
  %740 = vrot.lane.b32.xlu0 %v332, 96
  %v741 = vpop.permute.xlu0 %740
  %742 = vrot.lane.b32.xlu0 %v337, 96
  %v743 = vpop.permute.xlu0 %742
  %744 = vrot.lane.b32.xlu0 %v342, 96
  %v745 = vpop.permute.xlu0 %744
  %746 = vrot.lane.b32.xlu0 %v347, 96
  %v747 = vpop.permute.xlu0 %746
  %748 = vrot.lane.b32.xlu0 %v352, 96
  %v749 = vpop.permute.xlu0 %748
  %750 = vrot.lane.b32.xlu0 %v357, 96
  %v751 = vpop.permute.xlu0 %750
  %752 = vrot.lane.b32.xlu0 %v362, 96
  %v753 = vpop.permute.xlu0 %752
  %754 = vrot.lane.b32.xlu0 %v367, 96
  %v755 = vpop.permute.xlu0 %754
  %vm788 = vcmask 15360
  %789 = vst.msk [vmem:[%s3] sm:$0xff] %vm788, %v693
  %790 = vst.msk [vmem:[%s3 + $0x8] sm:$0xff] %vm788, %v695
  %791 = vst.msk [vmem:[%s3 + $0x10] sm:$0xff] %vm788, %v697
  %792 = vst.msk [vmem:[%s3 + $0x18] sm:$0xff] %vm788, %v699
  %793 = vst.msk [vmem:[%s3 + $0x20] sm:$0xff] %vm788, %v701
  %794 = vst.msk [vmem:[%s3 + $0x28] sm:$0xff] %vm788, %v703
  %795 = vst.msk [vmem:[%s3 + $0x30] sm:$0xff] %vm788, %v705
  %796 = vst.msk [vmem:[%s3 + $0x38] sm:$0xff] %vm788, %v707
  %797 = vst.msk [vmem:[%s3 + $0x40] sm:$0xff] %vm788, %v709
  %798 = vst.msk [vmem:[%s3 + $0x48] sm:$0xff] %vm788, %v711
  %799 = vst.msk [vmem:[%s3 + $0x50] sm:$0xff] %vm788, %v713
  %800 = vst.msk [vmem:[%s3 + $0x58] sm:$0xff] %vm788, %v715
  %801 = vst.msk [vmem:[%s3 + $0x60] sm:$0xff] %vm788, %v717
  %802 = vst.msk [vmem:[%s3 + $0x68] sm:$0xff] %vm788, %v719
  %803 = vst.msk [vmem:[%s3 + $0x70] sm:$0xff] %vm788, %v721
  %804 = vst.msk [vmem:[%s3 + $0x78] sm:$0xff] %vm788, %v723
  %805 = vst.msk [vmem:[%s3 + $0x80] sm:$0xff] %vm788, %v725
  %806 = vst.msk [vmem:[%s3 + $0x88] sm:$0xff] %vm788, %v727
  %807 = vst.msk [vmem:[%s3 + $0x90] sm:$0xff] %vm788, %v729
  %808 = vst.msk [vmem:[%s3 + $0x98] sm:$0xff] %vm788, %v731
  %809 = vst.msk [vmem:[%s3 + $0xa0] sm:$0xff] %vm788, %v733
  %810 = vst.msk [vmem:[%s3 + $0xa8] sm:$0xff] %vm788, %v735
  %811 = vst.msk [vmem:[%s3 + $0xb0] sm:$0xff] %vm788, %v737
  %812 = vst.msk [vmem:[%s3 + $0xb8] sm:$0xff] %vm788, %v739
  %813 = vst.msk [vmem:[%s3 + $0xc0] sm:$0xff] %vm788, %v741
  %814 = vst.msk [vmem:[%s3 + $0xc8] sm:$0xff] %vm788, %v743
  %815 = vst.msk [vmem:[%s3 + $0xd0] sm:$0xff] %vm788, %v745
  %816 = vst.msk [vmem:[%s3 + $0xd8] sm:$0xff] %vm788, %v747
  %817 = vst.msk [vmem:[%s3 + $0xe0] sm:$0xff] %vm788, %v749
  %818 = vst.msk [vmem:[%s3 + $0xe8] sm:$0xff] %vm788, %v751
  %819 = vst.msk [vmem:[%s3 + $0xf0] sm:$0xff] %vm788, %v753
  %820 = vst.msk [vmem:[%s3 + $0xf8] sm:$0xff] %vm788, %v755
  %821 = vrot.lane.b32.xlu0 %v212, 94
  %v822 = vpop.permute.xlu0 %821
  %823 = vrot.lane.b32.xlu0 %v217, 94
  %v824 = vpop.permute.xlu0 %823
  %825 = vrot.lane.b32.xlu0 %v222, 94
  %v826 = vpop.permute.xlu0 %825
  %827 = vrot.lane.b32.xlu0 %v227, 94
  %v828 = vpop.permute.xlu0 %827
  %829 = vrot.lane.b32.xlu0 %v232, 94
  %v830 = vpop.permute.xlu0 %829
  %831 = vrot.lane.b32.xlu0 %v237, 94
  %v832 = vpop.permute.xlu0 %831
  %833 = vrot.lane.b32.xlu0 %v242, 94
  %v834 = vpop.permute.xlu0 %833
  %835 = vrot.lane.b32.xlu0 %v247, 94
  %v836 = vpop.permute.xlu0 %835
  %837 = vrot.lane.b32.xlu0 %v252, 94
  %v838 = vpop.permute.xlu0 %837
  %839 = vrot.lane.b32.xlu0 %v257, 94
  %v840 = vpop.permute.xlu0 %839
  %841 = vrot.lane.b32.xlu0 %v262, 94
  %v842 = vpop.permute.xlu0 %841
  %843 = vrot.lane.b32.xlu0 %v267, 94
  %v844 = vpop.permute.xlu0 %843
  %845 = vrot.lane.b32.xlu0 %v272, 94
  %v846 = vpop.permute.xlu0 %845
  %847 = vrot.lane.b32.xlu0 %v277, 94
  %v848 = vpop.permute.xlu0 %847
  %849 = vrot.lane.b32.xlu0 %v282, 94
  %v850 = vpop.permute.xlu0 %849
  %851 = vrot.lane.b32.xlu0 %v287, 94
  %v852 = vpop.permute.xlu0 %851
  %853 = vrot.lane.b32.xlu0 %v292, 94
  %v854 = vpop.permute.xlu0 %853
  %855 = vrot.lane.b32.xlu0 %v297, 94
  %v856 = vpop.permute.xlu0 %855
  %857 = vrot.lane.b32.xlu0 %v302, 94
  %v858 = vpop.permute.xlu0 %857
  %859 = vrot.lane.b32.xlu0 %v307, 94
  %v860 = vpop.permute.xlu0 %859
  %861 = vrot.lane.b32.xlu0 %v312, 94
  %v862 = vpop.permute.xlu0 %861
  %863 = vrot.lane.b32.xlu0 %v317, 94
  %v864 = vpop.permute.xlu0 %863
  %865 = vrot.lane.b32.xlu0 %v322, 94
  %v866 = vpop.permute.xlu0 %865
  %867 = vrot.lane.b32.xlu0 %v327, 94
  %v868 = vpop.permute.xlu0 %867
  %869 = vrot.lane.b32.xlu0 %v332, 94
  %v870 = vpop.permute.xlu0 %869
  %871 = vrot.lane.b32.xlu0 %v337, 94
  %v872 = vpop.permute.xlu0 %871
  %873 = vrot.lane.b32.xlu0 %v342, 94
  %v874 = vpop.permute.xlu0 %873
  %875 = vrot.lane.b32.xlu0 %v347, 94
  %v876 = vpop.permute.xlu0 %875
  %877 = vrot.lane.b32.xlu0 %v352, 94
  %v878 = vpop.permute.xlu0 %877
  %879 = vrot.lane.b32.xlu0 %v357, 94
  %v880 = vpop.permute.xlu0 %879
  %881 = vrot.lane.b32.xlu0 %v362, 94
  %v882 = vpop.permute.xlu0 %881
  %883 = vrot.lane.b32.xlu0 %v367, 94
  %v884 = vpop.permute.xlu0 %883
  %917 = vst.msk [vmem:[%s4] sm:$0xff] %vm788, %v822
  %918 = vst.msk [vmem:[%s4 + $0x8] sm:$0xff] %vm788, %v824
  %919 = vst.msk [vmem:[%s4 + $0x10] sm:$0xff] %vm788, %v826
  %920 = vst.msk [vmem:[%s4 + $0x18] sm:$0xff] %vm788, %v828
  %921 = vst.msk [vmem:[%s4 + $0x20] sm:$0xff] %vm788, %v830
  %922 = vst.msk [vmem:[%s4 + $0x28] sm:$0xff] %vm788, %v832
  %923 = vst.msk [vmem:[%s4 + $0x30] sm:$0xff] %vm788, %v834
  %924 = vst.msk [vmem:[%s4 + $0x38] sm:$0xff] %vm788, %v836
  %925 = vst.msk [vmem:[%s4 + $0x40] sm:$0xff] %vm788, %v838
  %926 = vst.msk [vmem:[%s4 + $0x48] sm:$0xff] %vm788, %v840
  %927 = vst.msk [vmem:[%s4 + $0x50] sm:$0xff] %vm788, %v842
  %928 = vst.msk [vmem:[%s4 + $0x58] sm:$0xff] %vm788, %v844
  %929 = vst.msk [vmem:[%s4 + $0x60] sm:$0xff] %vm788, %v846
  %930 = vst.msk [vmem:[%s4 + $0x68] sm:$0xff] %vm788, %v848
  %931 = vst.msk [vmem:[%s4 + $0x70] sm:$0xff] %vm788, %v850
  %932 = vst.msk [vmem:[%s4 + $0x78] sm:$0xff] %vm788, %v852
  %933 = vst.msk [vmem:[%s4 + $0x80] sm:$0xff] %vm788, %v854
  %934 = vst.msk [vmem:[%s4 + $0x88] sm:$0xff] %vm788, %v856
  %935 = vst.msk [vmem:[%s4 + $0x90] sm:$0xff] %vm788, %v858
  %936 = vst.msk [vmem:[%s4 + $0x98] sm:$0xff] %vm788, %v860
  %937 = vst.msk [vmem:[%s4 + $0xa0] sm:$0xff] %vm788, %v862
  %938 = vst.msk [vmem:[%s4 + $0xa8] sm:$0xff] %vm788, %v864
  %939 = vst.msk [vmem:[%s4 + $0xb0] sm:$0xff] %vm788, %v866
  %940 = vst.msk [vmem:[%s4 + $0xb8] sm:$0xff] %vm788, %v868
  %941 = vst.msk [vmem:[%s4 + $0xc0] sm:$0xff] %vm788, %v870
  %942 = vst.msk [vmem:[%s4 + $0xc8] sm:$0xff] %vm788, %v872
  %943 = vst.msk [vmem:[%s4 + $0xd0] sm:$0xff] %vm788, %v874
  %944 = vst.msk [vmem:[%s4 + $0xd8] sm:$0xff] %vm788, %v876
  %945 = vst.msk [vmem:[%s4 + $0xe0] sm:$0xff] %vm788, %v878
  %946 = vst.msk [vmem:[%s4 + $0xe8] sm:$0xff] %vm788, %v880
  %947 = vst.msk [vmem:[%s4 + $0xf0] sm:$0xff] %vm788, %v882
  %948 = vst.msk [vmem:[%s4 + $0xf8] sm:$0xff] %vm788, %v884
  // Predicated region
  $region10: #{forward.7} parent=0 // pred_check
    _
  $region11: #{forward.7} parent=0 // pred_check_branch
    %950 = sbr.rel (0) target = $region13
  $region12: #{forward.7} parent=0 // pred_region
    _
  $region13: #{forward.7} parent=0 // pred_fallthru
    _
  // Predicated region
  $region14: #{forward.7} parent=0 // pred_check
    _
  $region15: #{forward.7} parent=0 // pred_check_branch
    %952 = sbr.rel (0) target = $region17
  $region16: #{forward.7} parent=0 // pred_region
    _
  $region17: #{forward.7} parent=0 // pred_fallthru
    _
  // Predicated region
  $region18: #{forward.7} parent=0 // pred_check
    _
  $region19: #{forward.7} parent=0 // pred_check_branch
    %954 = sbr.rel (0) target = $region21
  $region20: #{forward.7} parent=0 // pred_region
    _
  $region21: #{forward.7} parent=0 // pred_fallthru
    _
  // Predicated region
  $region22: #{forward.7} parent=0 // pred_check
    _
  $region23: #{forward.7} parent=0 // pred_check_branch
    %956 = sbr.rel (0) target = $region25
  $region24: #{forward.7} parent=0 // pred_region
    _
  $region25: #{forward.7} parent=0 // pred_fallthru
    _
  // Predicated region
  $region26: #{forward.7} parent=0 // pred_check
    _
  $region27: #{forward.7} parent=0 // pred_check_branch
    %958 = sbr.rel (0) target = $region29
  $region28: #{forward.7} parent=0 // pred_region
    _
  $region29: #{forward.7} parent=0 // pred_fallthru
    _
  // Predicated region
  $region30: #{forward.7} parent=0 // pred_check
    _
  $region31: #{forward.7} parent=0 // pred_check_branch
    %960 = sbr.rel (0) target = $region33
  $region32: #{forward.7} parent=0 // pred_region
    _
  $region33: #{forward.7} parent=0 // pred_fallthru
    _

// kernel: forward.6
$region0: #{forward.6}
  #allocation0 [shape = 'u32[]', space=smem, size = 0x4, offset = 0x4, fixed_abs, tag = 'smem constant byte address 0x4 - core index']
  #allocation1 [shape = 'u32[144,128]{1,0:T(1,128)}', space=vmem, size = 0x12000, scoped, tag = 'internal scratch']
  %s0 = inlined_call_operand.vmem [shape: s8[256,256], index: 0, kind: input, shape index: {}]
  %s1 = inlined_call_operand.vmem [shape: bf16[2,256,16], index: 1, kind: input, shape index: {}]
  %s2 = inlined_call_operand.vmem [shape: f32[256,2], index: 2, kind: input, shape index: {}]
  %s3 = inlined_call_operand.vmem [shape: f32[2,256], index: 3, kind: input, shape index: {}]
  %s4 = inlined_call_operand.vmem [shape: f32[1,16], index: 4, kind: input, shape index: {}]
  %s5 = inlined_call_operand.vmem [shape: f32[256,16], index: 5, kind: output, shape index: {}]
  %s6 = sld [smem:[#allocation0]]
  $region53: #{forward.6} parent=0
    _
  %s8 = ssub.s32 1, %s6
  %s9 = scalar_select 0, %s8, %s6
  loop: start=0, step=1, limit=6
  $region2: #{forward.6} parent=0 // loop_pre_header
    _
  $region3: #{forward.6} parent=0 // loop_header
    %s11 = sphi 0, %s15
    %p12 = scmp.ge.s32.totalorder %s11, 6
    %s21 = sphi 0, %s23
    %s24 = sphi 0, %s21
    %s25 = sphi 0, %s24
    %s41 = sphi 0, %s25
    %s45 = sphi 0, %s45
    %s47 = sphi 0, %s45
    %s48 = sphi 0, %s47
    %s62 = sphi 0, %s48
    %s68 = sphi 0, %s70
    %s71 = sphi 0, %s68
    %s72 = sphi 0, %s71
    %s88 = sphi 0, %s72
    %s92 = sphi 0, %s92
    %s94 = sphi 0, %s92
    %s95 = sphi 0, %s94
    %s109 = sphi 0, %s95
    %s113 = sphi 0, %s113
    %s115 = sphi 0, %s113
    %s116 = sphi 0, %s115
    %s130 = sphi 0, %s116
    %s136 = sphi 0, %s138
    %s139 = sphi 0, %s136
    %s140 = sphi 0, %s139
    %s156 = sphi 0, %s140
  $region4: #{forward.6} parent=0 // loop_header_branch
    %14 = sbr.rel (%p12) target = $region8
  $region5: #{forward.6} parent=0 // loop_body
    %s16 = ssub.s32 %s11, 1
    %s17 = ssub.s32 %s11, 2
    %s18 = sadd.s32 %s11, 1
    %s19 = ssub.s32 %s11, %s18
    %p20 = scmp.eq.s32.totalorder %s19, 0
    %s22 = sadd.s32 %s21, 1
    %s23 = scalar_select %p20, %s21, %s22
    %p26 = pneg %p20
    %p27 = scmp.eq.s32.totalorder %s11, 3
    %p28 = por %p26, %p27
    %p29 = scmp.ne.s32.totalorder %s21, %s24
    %p30 = scmp.eq.s32.totalorder %s11, 0
    %p31 = por %p29, %p30
    %p32 = scmp.ne.s32.totalorder %s21, %s24
    %p33 = scmp.eq.s32.totalorder %s16, 3
    %p34 = por %p32, %p33
    %p35 = scmp.ne.s32.totalorder %s24, %s25
    %p36 = scmp.eq.s32.totalorder %s16, 0
    %p37 = por %p35, %p36
    %p38 = scmp.ne.s32.totalorder %s24, %s25
    %p39 = scmp.eq.s32.totalorder %s17, 3
    %p40 = por %p38, %p39
    %p42 = scmp.ne.s32.totalorder %s25, %s41
    %p43 = scmp.eq.s32.totalorder %s17, 0
    %p44 = por %p42, %p43
    %s46 = sadd.s32 %s45, 1
    %p49 = scmp.eq.s32.totalorder %s11, 3
    %p50 = scmp.ne.s32.totalorder %s45, %s47
    %p51 = scmp.eq.s32.totalorder %s11, 0
    %p52 = por %p50, %p51
    %p53 = scmp.ne.s32.totalorder %s45, %s47
    %p54 = scmp.eq.s32.totalorder %s16, 3
    %p55 = por %p53, %p54
    %p56 = scmp.ne.s32.totalorder %s47, %s48
    %p57 = scmp.eq.s32.totalorder %s16, 0
    %p58 = por %p56, %p57
    %p59 = scmp.ne.s32.totalorder %s47, %s48
    %p60 = scmp.eq.s32.totalorder %s17, 3
    %p61 = por %p59, %p60
    %p63 = scmp.ne.s32.totalorder %s48, %s62
    %p64 = scmp.eq.s32.totalorder %s17, 0
    %p65 = por %p63, %p64
    %s66 = ssub.s32 %s11, %s18
    %p67 = scmp.eq.s32.totalorder %s66, 0
    %s69 = sadd.s32 %s68, 1
    %s70 = scalar_select %p67, %s68, %s69
    %p73 = pneg %p67
    %p74 = scmp.eq.s32.totalorder %s11, 3
    %p75 = por %p73, %p74
    %p76 = scmp.ne.s32.totalorder %s68, %s71
    %p77 = scmp.eq.s32.totalorder %s11, 0
    %p78 = por %p76, %p77
    %p79 = scmp.ne.s32.totalorder %s68, %s71
    %p80 = scmp.eq.s32.totalorder %s16, 3
    %p81 = por %p79, %p80
    %p82 = scmp.ne.s32.totalorder %s71, %s72
    %p83 = scmp.eq.s32.totalorder %s16, 0
    %p84 = por %p82, %p83
    %p85 = scmp.ne.s32.totalorder %s71, %s72
    %p86 = scmp.eq.s32.totalorder %s17, 3
    %p87 = por %p85, %p86
    %p89 = scmp.ne.s32.totalorder %s72, %s88
    %p90 = scmp.eq.s32.totalorder %s17, 0
    %p91 = por %p89, %p90
    %s93 = sadd.s32 %s92, 1
    %p96 = scmp.eq.s32.totalorder %s11, 3
    %p97 = scmp.ne.s32.totalorder %s92, %s94
    %p98 = scmp.eq.s32.totalorder %s11, 0
    %p99 = por %p97, %p98
    %p100 = scmp.ne.s32.totalorder %s92, %s94
    %p101 = scmp.eq.s32.totalorder %s16, 3
    %p102 = por %p100, %p101
    %p103 = scmp.ne.s32.totalorder %s94, %s95
    %p104 = scmp.eq.s32.totalorder %s16, 0
    %p105 = por %p103, %p104
    %p106 = scmp.ne.s32.totalorder %s94, %s95
    %p107 = scmp.eq.s32.totalorder %s17, 3
    %p108 = por %p106, %p107
    %p110 = scmp.ne.s32.totalorder %s95, %s109
    %p111 = scmp.eq.s32.totalorder %s17, 0
    %p112 = por %p110, %p111
    %s114 = sadd.s32 %s113, 1
    %p117 = scmp.eq.s32.totalorder %s11, 3
    %p118 = scmp.ne.s32.totalorder %s113, %s115
    %p119 = scmp.eq.s32.totalorder %s11, 0
    %p120 = por %p118, %p119
    %p121 = scmp.ne.s32.totalorder %s113, %s115
    %p122 = scmp.eq.s32.totalorder %s16, 3
    %p123 = por %p121, %p122
    %p124 = scmp.ne.s32.totalorder %s115, %s116
    %p125 = scmp.eq.s32.totalorder %s16, 0
    %p126 = por %p124, %p125
    %p127 = scmp.ne.s32.totalorder %s115, %s116
    %p128 = scmp.eq.s32.totalorder %s17, 3
    %p129 = por %p127, %p128
    %p131 = scmp.ne.s32.totalorder %s116, %s130
    %p132 = scmp.eq.s32.totalorder %s17, 0
    %p133 = por %p131, %p132
    %s134 = ssub.s32 %s11, %s18
    %p135 = scmp.eq.s32.totalorder %s134, 0
    %s137 = sadd.s32 %s136, 1
    %s138 = scalar_select %p135, %s136, %s137
    %p141 = pneg %p135
    %p142 = scmp.eq.s32.totalorder %s11, 3
    %p143 = por %p141, %p142
    %p144 = scmp.ne.s32.totalorder %s136, %s139
    %p145 = scmp.eq.s32.totalorder %s11, 0
    %p146 = por %p144, %p145
    %p147 = scmp.ne.s32.totalorder %s136, %s139
    %p148 = scmp.eq.s32.totalorder %s16, 3
    %p149 = por %p147, %p148
    %p150 = scmp.ne.s32.totalorder %s139, %s140
    %p151 = scmp.eq.s32.totalorder %s16, 0
    %p152 = por %p150, %p151
    %p153 = scmp.ne.s32.totalorder %s139, %s140
    %p154 = scmp.eq.s32.totalorder %s17, 3
    %p155 = por %p153, %p154
    %p157 = scmp.ne.s32.totalorder %s140, %s156
    %p158 = scmp.eq.s32.totalorder %s17, 0
    %p159 = por %p157, %p158
    %p160 = scmp.le.s32.totalorder 1, %s11
    %p161 = scmp.lt.s32.totalorder %s11, 5
    %p162 = pnand %p160, %p161
    %p163 = pneg %p162
    // Predicated region
    $region9: #{forward.6} parent=5 // pred_check
      _
    $region10: #{forward.6} parent=5 // pred_check_branch
      %165 = sbr.rel (%p162) target = $region12
    $region11: #{forward.6} parent=5 // pred_region
      %s166 = ssub.s32 %s11, 1
      // Predicated region
      $region13: #{forward.6} parent=11 // pred_check
        %p167 = pneg %p58
      $region14: #{forward.6} parent=11 // pred_check_branch
        %169 = sbr.rel (%p167) target = $region16
      $region15: #{forward.6} parent=11 // pred_region
        _
      $region16: #{forward.6} parent=11 // pred_fallthru
        _
      // Predicated region
      $region17: #{forward.6} parent=11 // pred_check
        %p170 = pneg %p105
      $region18: #{forward.6} parent=11 // pred_check_branch
        %172 = sbr.rel (%p170) target = $region20
      $region19: #{forward.6} parent=11 // pred_region
        _
      $region20: #{forward.6} parent=11 // pred_fallthru
        _
      // Predicated region
      $region21: #{forward.6} parent=11 // pred_check
        %p173 = pneg %p126
      $region22: #{forward.6} parent=11 // pred_check_branch
        %175 = sbr.rel (%p173) target = $region24
      $region23: #{forward.6} parent=11 // pred_region
        _
      $region24: #{forward.6} parent=11 // pred_fallthru
        _
    $region12: #{forward.6} parent=5 // pred_fallthru
      _
    %p176 = scmp.lt.s32.totalorder %s11, 4
    // Predicated region
    $region25: #{forward.6} parent=5 // pred_check
      %p177 = pneg %p176
    $region26: #{forward.6} parent=5 // pred_check_branch
      %179 = sbr.rel (%p177) target = $region28
    $region27: #{forward.6} parent=5 // pred_region
      // Predicated region
      $region29: #{forward.6} parent=27 // pred_check
        %p180 = pneg %p31
      $region30: #{forward.6} parent=27 // pred_check_branch
        %182 = sbr.rel (%p180) target = $region32
      $region31: #{forward.6} parent=27 // pred_region
        %s183 = smul.u32 2, %s11
        %p184 = scmp.lt.s32.totalorder %s183, 7
        %s185 = scalar_select %p184, %s183, 7
        %s186 = smul.addr %s185, 2
        %s187 = smul.addr %s186, 8
        %s188 = scalar_lea.vmem %s0, %s187
        %s189 = smul.u32 2, %s11
      $region32: #{forward.6} parent=27 // pred_fallthru
        _
      // Predicated region
      $region33: #{forward.6} parent=27 // pred_check
        %p190 = pneg %p78
      $region34: #{forward.6} parent=27 // pred_check_branch
        %192 = sbr.rel (%p190) target = $region36
      $region35: #{forward.6} parent=27 // pred_region
        %s193 = smul.u32 8, %s11
        %p194 = scmp.lt.s32.totalorder %s193, 31
        %s195 = scalar_select %p194, %s193, 31
        %s196 = smul.addr %s195, 8
        %s197 = scalar_lea.vmem %s2, %s196
        %s198 = smul.u32 8, %s11
      $region36: #{forward.6} parent=27 // pred_fallthru
        _
    $region28: #{forward.6} parent=5 // pred_fallthru
      _
    %p199 = scmp.le.s32.totalorder 1, %s11
    %p200 = scmp.lt.s32.totalorder %s11, 5
    %p201 = pnand %p199, %p200
    %p202 = pneg %p201
    // Predicated region
    $region37: #{forward.6} parent=5 // pred_check
      _
    $region38: #{forward.6} parent=5 // pred_check_branch
      %204 = sbr.rel (%p201) target = $region40
    $region39: #{forward.6} parent=5 // pred_region
      %s205 = ssub.s32 %s11, 1
      %s206 = smul.u32 2, %s16
      %p207 = scmp.lt.s32.totalorder %s206, 7
      %s208 = scalar_select %p207, %s206, 7
      %s209 = smul.addr %s208, 2
      %s210 = smul.addr %s209, 8
      %s211 = scalar_lea.vmem %s0, %s210
      %p212 = pneg %p37
      %p213 = pneg %p34
      %p214 = pneg %p58
      %p215 = pneg %p55
      %s216 = smul.u32 8, %s16
      %p217 = scmp.lt.s32.totalorder %s216, 31
      %s218 = scalar_select %p217, %s216, 31
      %s219 = smul.addr %s218, 8
      %s220 = scalar_lea.vmem %s2, %s219
      %p221 = pneg %p84
      %p222 = pneg %p81
      %p223 = pneg %p105
      %p224 = pneg %p102
      %p225 = pneg %p126
      %p226 = pneg %p123
      %p227 = pneg %p152
      %p228 = pneg %p149
      %s229 = smul.u32 8, %s16
      %p230 = scmp.lt.s32.totalorder %s229, 31
      %s231 = scalar_select %p230, %s229, 31
      %s232 = smul.addr %s231, 8
      %s233 = scalar_lea.vmem %s5, %s232
      %s234 = smul.u32 2, %s16
      %p235 = scmp.lt.s32.totalorder %s234, 7
      %s236 = scalar_select %p235, %s234, 7
      %s237 = smul.addr %s236, 2
      %s238 = smul.addr %s237, 8
      %s239 = scalar_lea.vmem %s0, %s238
      %s240 = smul.u32 2, %s16
      %s241 = smul.u32 8, %s16
      %p242 = scmp.lt.s32.totalorder %s241, 31
      %s243 = scalar_select %p242, %s241, 31
      %s244 = smul.addr %s243, 8
      %s245 = scalar_lea.vmem %s2, %s244
      %s246 = smul.u32 8, %s16
      %s247 = smul.u32 8, %s16
      %p248 = scmp.lt.s32.totalorder %s247, 31
      %s249 = scalar_select %p248, %s247, 31
      %s250 = smul.addr %s249, 8
      %s251 = scalar_lea.vmem %s5, %s250
      %s252 = smul.u32 8, %s16
      %v254 = vld [vmem:[%s239] sm:$0xff]
      %v255 = vld [vmem:[%s239 + $0x8] sm:$0xff]
      %v256 = vld [vmem:[%s239 + $0x10] sm:$0xff]
      %v257 = vld [vmem:[%s239 + $0x18] sm:$0xff]
      %v258 = vunpack.c.0.s8 %v254
      %v259 = vunpack.c.0.s8 %v255
      %v260 = vunpack.c.1.s8 %v254
      %v261 = vunpack.c.1.s8 %v255
      %v262 = vunpack.c.2.s8 %v254
      %v263 = vunpack.c.2.s8 %v255
      %v264 = vunpack.c.3.s8 %v254
      %v265 = vunpack.c.3.s8 %v255
      %v266 = vunpack.c.0.s8 %v256
      %v267 = vunpack.c.0.s8 %v257
      %v268 = vunpack.c.1.s8 %v256
      %v269 = vunpack.c.1.s8 %v257
      %v270 = vunpack.c.2.s8 %v256
      %v271 = vunpack.c.2.s8 %v257
      %v272 = vunpack.c.3.s8 %v256
      %v273 = vunpack.c.3.s8 %v257
      %v274 = vcvt.s32.f32 %v258
      %v275 = vcvt.s32.f32 %v259
      %v276 = vcvt.s32.f32 %v260
      %v277 = vcvt.s32.f32 %v261
      %v278 = vcvt.s32.f32 %v262
      %v279 = vcvt.s32.f32 %v263
      %v280 = vcvt.s32.f32 %v264
      %v281 = vcvt.s32.f32 %v265
      %v282 = vcvt.s32.f32 %v266
      %v283 = vcvt.s32.f32 %v267
      %v284 = vcvt.s32.f32 %v268
      %v285 = vcvt.s32.f32 %v269
      %v286 = vcvt.s32.f32 %v270
      %v287 = vcvt.s32.f32 %v271
      %v288 = vcvt.s32.f32 %v272
      %v289 = vcvt.s32.f32 %v273
      %vm290 = vcmp.gt.f32.partialorder %v274, 0.0
      %vm291 = vcmp.gt.f32.partialorder %v275, 0.0
      %vm292 = vcmp.gt.f32.partialorder %v276, 0.0
      %vm293 = vcmp.gt.f32.partialorder %v277, 0.0
      %vm294 = vcmp.gt.f32.partialorder %v278, 0.0
      %vm295 = vcmp.gt.f32.partialorder %v279, 0.0
      %vm296 = vcmp.gt.f32.partialorder %v280, 0.0
      %vm297 = vcmp.gt.f32.partialorder %v281, 0.0
      %vm298 = vcmp.gt.f32.partialorder %v282, 0.0
      %vm299 = vcmp.gt.f32.partialorder %v283, 0.0
      %vm300 = vcmp.gt.f32.partialorder %v284, 0.0
      %vm301 = vcmp.gt.f32.partialorder %v285, 0.0
      %vm302 = vcmp.gt.f32.partialorder %v286, 0.0
      %vm303 = vcmp.gt.f32.partialorder %v287, 0.0
      %vm304 = vcmp.gt.f32.partialorder %v288, 0.0
      %vm305 = vcmp.gt.f32.partialorder %v289, 0.0
      %v306 = vld [vmem:[%s245] sm:$0xff]
      %v307 = vld [vmem:[%s245 + $0x8] sm:$0xff]
      %v308 = vld [vmem:[%s245 + $0x10] sm:$0xff]
      %v309 = vld [vmem:[%s245 + $0x18] sm:$0xff]
      %v310 = vld [vmem:[%s245 + $0x20] sm:$0xff]
      %v311 = vld [vmem:[%s245 + $0x28] sm:$0xff]
      %v312 = vld [vmem:[%s245 + $0x30] sm:$0xff]
      %v313 = vld [vmem:[%s245 + $0x38] sm:$0xff]
      %v314 = vld [vmem:[%s3] sm:$0xf]
      %v315 = vld [vmem:[%s1] sm:$0xf]
      %v316 = vld [vmem:[%s1 + $0x4] sm:$0xf]
      %v317 = vld [vmem:[%s1 + $0x8] sm:$0xf]
      %v318 = vld [vmem:[%s1 + $0xc] sm:$0xf]
      %v319 = vld [vmem:[%s1 + $0x10] sm:$0xf]
      %v320 = vld [vmem:[%s1 + $0x14] sm:$0xf]
      %v321 = vld [vmem:[%s1 + $0x18] sm:$0xf]
      %v322 = vld [vmem:[%s1 + $0x1c] sm:$0xf]
      %v323 = vld [vmem:[%s1 + $0x20] sm:$0xf]
      %v324 = vld [vmem:[%s1 + $0x24] sm:$0xf]
      %v325 = vld [vmem:[%s1 + $0x28] sm:$0xf]
      %v326 = vld [vmem:[%s1 + $0x2c] sm:$0xf]
      %v327 = vld [vmem:[%s1 + $0x30] sm:$0xf]
      %v328 = vld [vmem:[%s1 + $0x34] sm:$0xf]
      %v329 = vld [vmem:[%s1 + $0x38] sm:$0xf]
      %v330 = vld [vmem:[%s1 + $0x3c] sm:$0xf]
      %v331 = vld [vmem:[%s1 + $0x40] sm:$0xf]
      %v332 = vld [vmem:[%s1 + $0x44] sm:$0xf]
      %v333 = vld [vmem:[%s1 + $0x48] sm:$0xf]
      %v334 = vld [vmem:[%s1 + $0x4c] sm:$0xf]
      %v335 = vld [vmem:[%s1 + $0x50] sm:$0xf]
      %v336 = vld [vmem:[%s1 + $0x54] sm:$0xf]
      %v337 = vld [vmem:[%s1 + $0x58] sm:$0xf]
      %v338 = vld [vmem:[%s1 + $0x5c] sm:$0xf]
      %v339 = vld [vmem:[%s1 + $0x60] sm:$0xf]
      %v340 = vld [vmem:[%s1 + $0x64] sm:$0xf]
      %v341 = vld [vmem:[%s1 + $0x68] sm:$0xf]
      %v342 = vld [vmem:[%s1 + $0x6c] sm:$0xf]
      %v343 = vld [vmem:[%s1 + $0x70] sm:$0xf]
      %v344 = vld [vmem:[%s1 + $0x74] sm:$0xf]
      %v345 = vld [vmem:[%s1 + $0x78] sm:$0xf]
      %v346 = vld [vmem:[%s1 + $0x7c] sm:$0xf]
      %348 = vset.pattern.permute.xlu0 0
      %349 = vperm.xlu0 %348, %v306
      %v350 = vpop.permute.xlu0 %349
      %353 = vset.pattern.permute.xlu0 0
      %354 = vperm.xlu0 %353, %v307
      %v355 = vpop.permute.xlu0 %354
      %358 = vset.pattern.permute.xlu0 0
      %359 = vperm.xlu0 %358, %v308
      %v360 = vpop.permute.xlu0 %359
      %363 = vset.pattern.permute.xlu0 0
      %364 = vperm.xlu0 %363, %v309
      %v365 = vpop.permute.xlu0 %364
      %368 = vset.pattern.permute.xlu0 0
      %369 = vperm.xlu0 %368, %v310
      %v370 = vpop.permute.xlu0 %369
      %373 = vset.pattern.permute.xlu0 0
      %374 = vperm.xlu0 %373, %v311
      %v375 = vpop.permute.xlu0 %374
      %378 = vset.pattern.permute.xlu0 0
      %379 = vperm.xlu0 %378, %v312
      %v380 = vpop.permute.xlu0 %379
      %383 = vset.pattern.permute.xlu0 0
      %384 = vperm.xlu0 %383, %v313
      %v385 = vpop.permute.xlu0 %384
      %v388 = vlaneseq
      %v389 = vshrl.u32 %v388, 7
      %v390 = vsub.s32 0, %v389
      %v391 = vrot.slane %v314, %v390
      %v392 = vlaneseq
      %v393 = vshrl.u32 %v392, 7
      %v394 = vsub.s32 2, %v393
      %v395 = vrot.slane %v314, %v394
      %v398 = vlaneseq
      %v399 = vshrl.u32 %v398, 7
      %v400 = vsub.s32 0, %v399
      %v401 = vrot.slane %v391, %v400
      %v402 = vlaneseq
      %v403 = vshrl.u32 %v402, 7
      %v404 = vsub.s32 0, %v403
      %v405 = vrot.slane %v395, %v404
      %v406 = vadd.f32 %v350, %v401
      %v407 = vadd.f32 %v350, %v405
      %v408 = vadd.f32 %v355, %v401
      %v409 = vadd.f32 %v355, %v405
      %v410 = vadd.f32 %v360, %v401
      %v411 = vadd.f32 %v360, %v405
      %v412 = vadd.f32 %v365, %v401
      %v413 = vadd.f32 %v365, %v405
      %v414 = vadd.f32 %v370, %v401
      %v415 = vadd.f32 %v370, %v405
      %v416 = vadd.f32 %v375, %v401
      %v417 = vadd.f32 %v375, %v405
      %v418 = vadd.f32 %v380, %v401
      %v419 = vadd.f32 %v380, %v405
      %v420 = vadd.f32 %v385, %v401
      %v421 = vadd.f32 %v385, %v405
      %vm422 = vcmp.gt.f32.partialorder %v406, 0.0
      %vm423 = vcmp.gt.f32.partialorder %v407, 0.0
      %vm424 = vcmp.gt.f32.partialorder %v408, 0.0
      %vm425 = vcmp.gt.f32.partialorder %v409, 0.0
      %vm426 = vcmp.gt.f32.partialorder %v410, 0.0
      %vm427 = vcmp.gt.f32.partialorder %v411, 0.0
      %vm428 = vcmp.gt.f32.partialorder %v412, 0.0
      %vm429 = vcmp.gt.f32.partialorder %v413, 0.0
      %vm430 = vcmp.gt.f32.partialorder %v414, 0.0
      %vm431 = vcmp.gt.f32.partialorder %v415, 0.0
      %vm432 = vcmp.gt.f32.partialorder %v416, 0.0
      %vm433 = vcmp.gt.f32.partialorder %v417, 0.0
      %vm434 = vcmp.gt.f32.partialorder %v418, 0.0
      %vm435 = vcmp.gt.f32.partialorder %v419, 0.0
      %vm436 = vcmp.gt.f32.partialorder %v420, 0.0
      %vm437 = vcmp.gt.f32.partialorder %v421, 0.0
      %v438 = vmul.f32 %v406, 0.2
      %v439 = vmul.f32 %v407, 0.2
      %v440 = vmul.f32 %v408, 0.2
      %v441 = vmul.f32 %v409, 0.2
      %v442 = vmul.f32 %v410, 0.2
      %v443 = vmul.f32 %v411, 0.2
      %v444 = vmul.f32 %v412, 0.2
      %v445 = vmul.f32 %v413, 0.2
      %v446 = vmul.f32 %v414, 0.2
      %v447 = vmul.f32 %v415, 0.2
      %v448 = vmul.f32 %v416, 0.2
      %v449 = vmul.f32 %v417, 0.2
      %v450 = vmul.f32 %v418, 0.2
      %v451 = vmul.f32 %v419, 0.2
      %v452 = vmul.f32 %v420, 0.2
      %v453 = vmul.f32 %v421, 0.2
      %v454 = vsel %vm422, %v406, %v438
      %v455 = vsel %vm423, %v407, %v439
      %v456 = vsel %vm424, %v408, %v440
      %v457 = vsel %vm425, %v409, %v441
      %v458 = vsel %vm426, %v410, %v442
      %v459 = vsel %vm427, %v411, %v443
      %v460 = vsel %vm428, %v412, %v444
      %v461 = vsel %vm429, %v413, %v445
      %v462 = vsel %vm430, %v414, %v446
      %v463 = vsel %vm431, %v415, %v447
      %v464 = vsel %vm432, %v416, %v448
      %v465 = vsel %vm433, %v417, %v449
      %v466 = vsel %vm434, %v418, %v450
      %v467 = vsel %vm435, %v419, %v451
      %v468 = vsel %vm436, %v420, %v452
      %v469 = vsel %vm437, %v421, %v453
      %v470 = vsel %vm290, %v454, -9e+15
      %v471 = vsel %vm291, %v455, -9e+15
      %v472 = vsel %vm292, %v456, -9e+15
      %v473 = vsel %vm293, %v457, -9e+15
      %v474 = vsel %vm294, %v458, -9e+15
      %v475 = vsel %vm295, %v459, -9e+15
      %v476 = vsel %vm296, %v460, -9e+15
      %v477 = vsel %vm297, %v461, -9e+15
      %v478 = vsel %vm298, %v462, -9e+15
      %v479 = vsel %vm299, %v463, -9e+15
      %v480 = vsel %vm300, %v464, -9e+15
      %v481 = vsel %vm301, %v465, -9e+15
      %v482 = vsel %vm302, %v466, -9e+15
      %v483 = vsel %vm303, %v467, -9e+15
      %v484 = vsel %vm304, %v468, -9e+15
      %v485 = vsel %vm305, %v469, -9e+15
      %v486 = vmax.f32 %v470, %v471
      %487 = vmax.xlane.f32.xlu0 %v486
      %v488 = vpop.xlane.xlu0 %487
      %v489 = vmax.f32 %v472, %v473
      %490 = vmax.xlane.f32.xlu0 %v489
      %v491 = vpop.xlane.xlu0 %490
      %v492 = vmax.f32 %v474, %v475
      %493 = vmax.xlane.f32.xlu0 %v492
      %v494 = vpop.xlane.xlu0 %493
      %v495 = vmax.f32 %v476, %v477
      %496 = vmax.xlane.f32.xlu0 %v495
      %v497 = vpop.xlane.xlu0 %496
      %v498 = vmax.f32 %v478, %v479
      %499 = vmax.xlane.f32.xlu0 %v498
      %v500 = vpop.xlane.xlu0 %499
      %v501 = vmax.f32 %v480, %v481
      %502 = vmax.xlane.f32.xlu0 %v501
      %v503 = vpop.xlane.xlu0 %502
      %v504 = vmax.f32 %v482, %v483
      %505 = vmax.xlane.f32.xlu0 %v504
      %v506 = vpop.xlane.xlu0 %505
      %v507 = vmax.f32 %v484, %v485
      %508 = vmax.xlane.f32.xlu0 %v507
      %v509 = vpop.xlane.xlu0 %508
      %v510 = vsub.f32 %v470, %v488
      %v511 = vsub.f32 %v471, %v488
      %v512 = vsub.f32 %v472, %v491
      %v513 = vsub.f32 %v473, %v491
      %v514 = vsub.f32 %v474, %v494
      %v515 = vsub.f32 %v475, %v494
      %v516 = vsub.f32 %v476, %v497
      %v517 = vsub.f32 %v477, %v497
      %v518 = vsub.f32 %v478, %v500
      %v519 = vsub.f32 %v479, %v500
      %v520 = vsub.f32 %v480, %v503
      %v521 = vsub.f32 %v481, %v503
      %v522 = vsub.f32 %v482, %v506
      %v523 = vsub.f32 %v483, %v506
      %v524 = vsub.f32 %v484, %v509
      %v525 = vsub.f32 %v485, %v509
      %v526 = vmul.f32 %v510, 1.442695
      %v527 = vpow.pop %v526
      %v528 = vmul.f32 %v511, 1.442695
      %v529 = vpow.pop %v528
      %v530 = vmul.f32 %v512, 1.442695
      %v531 = vpow.pop %v530
      %v532 = vmul.f32 %v513, 1.442695
      %v533 = vpow.pop %v532
      %v534 = vmul.f32 %v514, 1.442695
      %v535 = vpow.pop %v534
      %v536 = vmul.f32 %v515, 1.442695
      %v537 = vpow.pop %v536
      %v538 = vmul.f32 %v516, 1.442695
      %v539 = vpow.pop %v538
      %v540 = vmul.f32 %v517, 1.442695
      %v541 = vpow.pop %v540
      %v542 = vmul.f32 %v518, 1.442695
      %v543 = vpow.pop %v542
      %v544 = vmul.f32 %v519, 1.442695
      %v545 = vpow.pop %v544
      %v546 = vmul.f32 %v520, 1.442695
      %v547 = vpow.pop %v546
      %v548 = vmul.f32 %v521, 1.442695
      %v549 = vpow.pop %v548
      %v550 = vmul.f32 %v522, 1.442695
      %v551 = vpow.pop %v550
      %v552 = vmul.f32 %v523, 1.442695
      %v553 = vpow.pop %v552
      %v554 = vmul.f32 %v524, 1.442695
      %v555 = vpow.pop %v554
      %v556 = vmul.f32 %v525, 1.442695
      %v557 = vpow.pop %v556
      %v558 = vadd.f32 %v527, %v529
      %559 = vadd.xlane.f32.xlu0 %v558
      %v560 = vpop.xlane.xlu0 %559
      %v561 = vadd.f32 %v531, %v533
      %562 = vadd.xlane.f32.xlu0 %v561
      %v563 = vpop.xlane.xlu0 %562
      %v564 = vadd.f32 %v535, %v537
      %565 = vadd.xlane.f32.xlu0 %v564
      %v566 = vpop.xlane.xlu0 %565
      %v567 = vadd.f32 %v539, %v541
      %568 = vadd.xlane.f32.xlu0 %v567
      %v569 = vpop.xlane.xlu0 %568
      %v570 = vadd.f32 %v543, %v545
      %571 = vadd.xlane.f32.xlu0 %v570
      %v572 = vpop.xlane.xlu0 %571
      %v573 = vadd.f32 %v547, %v549
      %574 = vadd.xlane.f32.xlu0 %v573
      %v575 = vpop.xlane.xlu0 %574
      %v576 = vadd.f32 %v551, %v553
      %577 = vadd.xlane.f32.xlu0 %v576
      %v578 = vpop.xlane.xlu0 %577
      %v579 = vadd.f32 %v555, %v557
      %580 = vadd.xlane.f32.xlu0 %v579
      %v581 = vpop.xlane.xlu0 %580
      %v582 = vrcp.pop %v560
      %v583 = vrcp.pop %v563
      %v584 = vrcp.pop %v566
      %v585 = vrcp.pop %v569
      %v586 = vrcp.pop %v572
      %v587 = vrcp.pop %v575
      %v588 = vrcp.pop %v578
      %v589 = vrcp.pop %v581
      %v590 = vmul.f32 %v527, %v582
      %v591 = vmul.f32 %v529, %v582
      %v592 = vmul.f32 %v531, %v583
      %v593 = vmul.f32 %v533, %v583
      %v594 = vmul.f32 %v535, %v584
      %v595 = vmul.f32 %v537, %v584
      %v596 = vmul.f32 %v539, %v585
      %v597 = vmul.f32 %v541, %v585
      %v598 = vmul.f32 %v543, %v586
      %v599 = vmul.f32 %v545, %v586
      %v600 = vmul.f32 %v547, %v587
      %v601 = vmul.f32 %v549, %v587
      %v602 = vmul.f32 %v551, %v588
      %v603 = vmul.f32 %v553, %v588
      %v604 = vmul.f32 %v555, %v589
      %v605 = vmul.f32 %v557, %v589
      %v606 = vpack.c.bf16 %v592, %v590
      %v607 = vpack.c.bf16 %v593, %v591
      %v608 = vpack.c.bf16 %v596, %v594
      %v609 = vpack.c.bf16 %v597, %v595
      %v610 = vpack.c.bf16 %v600, %v598
      %v611 = vpack.c.bf16 %v601, %v599
      %v612 = vpack.c.bf16 %v604, %v602
      %v613 = vpack.c.bf16 %v605, %v603
      %v646 = vunpack.c.l.b16 %v315
      %v647 = vunpack.c.l.b16 %v316
      %v648 = vunpack.c.l.b16 %v317
      %v649 = vunpack.c.l.b16 %v318
      %v650 = vunpack.c.l.b16 %v319
      %v651 = vunpack.c.l.b16 %v320
      %v652 = vunpack.c.l.b16 %v321
      %v653 = vunpack.c.l.b16 %v322
      %v654 = vunpack.c.l.b16 %v323
      %v655 = vunpack.c.l.b16 %v324
      %v656 = vunpack.c.l.b16 %v325
      %v657 = vunpack.c.l.b16 %v326
      %v658 = vunpack.c.l.b16 %v327
      %v659 = vunpack.c.l.b16 %v328
      %v660 = vunpack.c.l.b16 %v329
      %v661 = vunpack.c.l.b16 %v330
      %v662 = vunpack.c.l.b16 %v331
      %v663 = vunpack.c.l.b16 %v332
      %v664 = vunpack.c.l.b16 %v333
      %v665 = vunpack.c.l.b16 %v334
      %v666 = vunpack.c.l.b16 %v335
      %v667 = vunpack.c.l.b16 %v336
      %v668 = vunpack.c.l.b16 %v337
      %v669 = vunpack.c.l.b16 %v338
      %v670 = vunpack.c.l.b16 %v339
      %v671 = vunpack.c.l.b16 %v340
      %v672 = vunpack.c.l.b16 %v341
      %v673 = vunpack.c.l.b16 %v342
      %v674 = vunpack.c.l.b16 %v343
      %v675 = vunpack.c.l.b16 %v344
      %v676 = vunpack.c.l.b16 %v345
      %v677 = vunpack.c.l.b16 %v346
      %v678 = vpack.c.b16 %v647, %v646
      %v679 = vpack.c.b16 %v649, %v648
      %v680 = vpack.c.b16 %v651, %v650
      %v681 = vpack.c.b16 %v653, %v652
      %v682 = vpack.c.b16 %v655, %v654
      %v683 = vpack.c.b16 %v657, %v656
      %v684 = vpack.c.b16 %v659, %v658
      %v685 = vpack.c.b16 %v661, %v660
      %v686 = vpack.c.b16 %v663, %v662
      %v687 = vpack.c.b16 %v665, %v664
      %v688 = vpack.c.b16 %v667, %v666
      %v689 = vpack.c.b16 %v669, %v668
      %v690 = vpack.c.b16 %v671, %v670
      %v691 = vpack.c.b16 %v673, %v672
      %v692 = vpack.c.b16 %v675, %v674
      %v693 = vpack.c.b16 %v677, %v676
      %710 = vmatprep.subr.bf16.mxu0 0
      %711 = vmatpush1.bf16.msra.mxu0 %v678
      %712 = vmatprep.subr.bf16.mxu0 0
      %713 = vmatpush1.bf16.msra.mxu0 %v679
      %714 = vmatprep.subr.bf16.mxu0 0
      %715 = vmatpush1.bf16.msra.mxu0 %v680
      %716 = vmatprep.subr.bf16.mxu0 0
      %717 = vmatpush1.bf16.msra.mxu0 %v681
      %718 = vmatprep.subr.bf16.mxu0 0
      %719 = vmatpush1.bf16.msra.mxu0 %v682
      %720 = vmatprep.subr.bf16.mxu0 0
      %721 = vmatpush1.bf16.msra.mxu0 %v683
      %722 = vmatprep.subr.bf16.mxu0 0
      %723 = vmatpush1.bf16.msra.mxu0 %v684
      %724 = vmatprep.subr.bf16.mxu0 0
      %725 = vmatpush1.bf16.msra.mxu0 %v685
      %726 = vmatprep.subr.bf16.mxu0 0
      %727 = vmatpush1.bf16.msra.mxu0 %v686
      %728 = vmatprep.subr.bf16.mxu0 0
      %729 = vmatpush1.bf16.msra.mxu0 %v687
      %730 = vmatprep.subr.bf16.mxu0 0
      %731 = vmatpush1.bf16.msra.mxu0 %v688
      %732 = vmatprep.subr.bf16.mxu0 0
      %733 = vmatpush1.bf16.msra.mxu0 %v689
      %734 = vmatprep.subr.bf16.mxu0 0
      %735 = vmatpush1.bf16.msra.mxu0 %v690
      %736 = vmatprep.subr.bf16.mxu0 0
      %737 = vmatpush1.bf16.msra.mxu0 %v691
      %738 = vmatprep.subr.bf16.mxu0 0
      %739 = vmatpush1.bf16.msra.mxu0 %v692
      %740 = vmatprep.subr.bf16.mxu0 0
      %741 = vmatpush1.bf16.msra.mxu0 %v693
      %742 = vmatprep.mubr.bf16.mxu0 %v607
      %743 = vmatmul.mubr.bf16.gmra.mrb[0].mxu0 %v606
      %v744 = vpop.f32.mrb[0].mxu0
      %v745 = vadd.f32 0.0, %v744
      %v746 = vpop.f32.mrb[0].mxu0
      %v747 = vpop.f32.mrb[0].mxu0
      %v748 = vadd.f32 0.0, %v747
      %v749 = vpop.f32.mrb[0].mxu0
      %750 = vmatprep.mubr.bf16.mxu0 %v609
      %751 = vmatmul.mubr.bf16.gmra.mrb[0].mxu0 %v608
      %v752 = vpop.f32.mrb[0].mxu0
      %v753 = vadd.f32 0.0, %v752
      %v754 = vpop.f32.mrb[0].mxu0
      %v755 = vpop.f32.mrb[0].mxu0
      %v756 = vadd.f32 0.0, %v755
      %v757 = vpop.f32.mrb[0].mxu0
      %758 = vmatprep.mubr.bf16.mxu0 %v611
      %759 = vmatmul.mubr.bf16.gmra.mrb[0].mxu0 %v610
      %v760 = vpop.f32.mrb[0].mxu0
      %v761 = vadd.f32 0.0, %v760
      %v762 = vpop.f32.mrb[0].mxu0
      %v763 = vpop.f32.mrb[0].mxu0
      %v764 = vadd.f32 0.0, %v763
      %v765 = vpop.f32.mrb[0].mxu0
      %766 = vmatprep.mubr.bf16.mxu0 %v613
      %767 = vmatmul.mubr.bf16.gmra.mrb[0].mxu0 %v612
      %v768 = vpop.f32.mrb[0].mxu0
      %v769 = vadd.f32 0.0, %v768
      %v770 = vpop.f32.mrb[0].mxu0
      %v771 = vpop.f32.mrb[0].mxu0
      %v772 = vadd.f32 0.0, %v771
      %v773 = vpop.f32.mrb[0].mxu0
      %774 = vdwg.mxu0
      %vm775 = vcmp.gt.f32.partialorder %v745, 0.0
      %vm776 = vcmp.gt.f32.partialorder %v748, 0.0
      %vm777 = vcmp.gt.f32.partialorder %v753, 0.0
      %vm778 = vcmp.gt.f32.partialorder %v756, 0.0
      %vm779 = vcmp.gt.f32.partialorder %v761, 0.0
      %vm780 = vcmp.gt.f32.partialorder %v764, 0.0
      %vm781 = vcmp.gt.f32.partialorder %v769, 0.0
      %vm782 = vcmp.gt.f32.partialorder %v772, 0.0
      %v783 = vmul.f32 %v745, 0.2
      %v784 = vmul.f32 %v748, 0.2
      %v785 = vmul.f32 %v753, 0.2
      %v786 = vmul.f32 %v756, 0.2
      %v787 = vmul.f32 %v761, 0.2
      %v788 = vmul.f32 %v764, 0.2
      %v789 = vmul.f32 %v769, 0.2
      %v790 = vmul.f32 %v772, 0.2
      %v791 = vsel %vm775, %v745, %v783
      %v792 = vsel %vm776, %v748, %v784
      %v793 = vsel %vm777, %v753, %v785
      %v794 = vsel %vm778, %v756, %v786
      %v795 = vsel %vm779, %v761, %v787
      %v796 = vsel %vm780, %v764, %v788
      %v797 = vsel %vm781, %v769, %v789
      %v798 = vsel %vm782, %v772, %v790
      %v799 = vmul.f32 %v791, %v791
      %v800 = vmul.f32 %v792, %v792
      %v801 = vmul.f32 %v793, %v793
      %v802 = vmul.f32 %v794, %v794
      %v803 = vmul.f32 %v795, %v795
      %v804 = vmul.f32 %v796, %v796
      %v805 = vmul.f32 %v797, %v797
      %v806 = vmul.f32 %v798, %v798
      %vm807 = vcmask 130048
      %v808 = vsel %vm807, %v799, 0.0
      %809 = vadd.xlane.f32.xlu0 %v808
      %v810 = vpop.xlane.xlu0 %809
      %v811 = vsel %vm807, %v800, 0.0
      %812 = vadd.xlane.f32.xlu0 %v811
      %v813 = vpop.xlane.xlu0 %812
      %v814 = vsel %vm807, %v801, 0.0
      %815 = vadd.xlane.f32.xlu0 %v814
      %v816 = vpop.xlane.xlu0 %815
      %v817 = vsel %vm807, %v802, 0.0
      %818 = vadd.xlane.f32.xlu0 %v817
      %v819 = vpop.xlane.xlu0 %818
      %v820 = vsel %vm807, %v803, 0.0
      %821 = vadd.xlane.f32.xlu0 %v820
      %v822 = vpop.xlane.xlu0 %821
      %v823 = vsel %vm807, %v804, 0.0
      %824 = vadd.xlane.f32.xlu0 %v823
      %v825 = vpop.xlane.xlu0 %824
      %v826 = vsel %vm807, %v805, 0.0
      %827 = vadd.xlane.f32.xlu0 %v826
      %v828 = vpop.xlane.xlu0 %827
      %v829 = vsel %vm807, %v806, 0.0
      %830 = vadd.xlane.f32.xlu0 %v829
      %v831 = vpop.xlane.xlu0 %830
      %v832 = vrsqrt.pop %v810
      %v833 = vmul.f32 %v810, %v832
      %vm834 = vcmp.eq.f32.partialorder %v810, inf
      %v835 = vsel %vm834, %v810, %v833
      %vm836 = vcmp.eq.f32.partialorder %v810, 0.0
      %v837 = vand.u32 %v810, 2147483648
      %v838 = vsel %vm836, %v837, %v835
      %v839 = vrsqrt.pop %v813
      %v840 = vmul.f32 %v813, %v839
      %vm841 = vcmp.eq.f32.partialorder %v813, inf
      %v842 = vsel %vm841, %v813, %v840
      %vm843 = vcmp.eq.f32.partialorder %v813, 0.0
      %v844 = vand.u32 %v813, 2147483648
      %v845 = vsel %vm843, %v844, %v842
      %v846 = vrsqrt.pop %v816
      %v847 = vmul.f32 %v816, %v846
      %vm848 = vcmp.eq.f32.partialorder %v816, inf
      %v849 = vsel %vm848, %v816, %v847
      %vm850 = vcmp.eq.f32.partialorder %v816, 0.0
      %v851 = vand.u32 %v816, 2147483648
      %v852 = vsel %vm850, %v851, %v849
      %v853 = vrsqrt.pop %v819
      %v854 = vmul.f32 %v819, %v853
      %vm855 = vcmp.eq.f32.partialorder %v819, inf
      %v856 = vsel %vm855, %v819, %v854
      %vm857 = vcmp.eq.f32.partialorder %v819, 0.0
      %v858 = vand.u32 %v819, 2147483648
      %v859 = vsel %vm857, %v858, %v856
      %v860 = vrsqrt.pop %v822
      %v861 = vmul.f32 %v822, %v860
      %vm862 = vcmp.eq.f32.partialorder %v822, inf
      %v863 = vsel %vm862, %v822, %v861
      %vm864 = vcmp.eq.f32.partialorder %v822, 0.0
      %v865 = vand.u32 %v822, 2147483648
      %v866 = vsel %vm864, %v865, %v863
      %v867 = vrsqrt.pop %v825
      %v868 = vmul.f32 %v825, %v867
      %vm869 = vcmp.eq.f32.partialorder %v825, inf
      %v870 = vsel %vm869, %v825, %v868
      %vm871 = vcmp.eq.f32.partialorder %v825, 0.0
      %v872 = vand.u32 %v825, 2147483648
      %v873 = vsel %vm871, %v872, %v870
      %v874 = vrsqrt.pop %v828
      %v875 = vmul.f32 %v828, %v874
      %vm876 = vcmp.eq.f32.partialorder %v828, inf
      %v877 = vsel %vm876, %v828, %v875
      %vm878 = vcmp.eq.f32.partialorder %v828, 0.0
      %v879 = vand.u32 %v828, 2147483648
      %v880 = vsel %vm878, %v879, %v877
      %v881 = vrsqrt.pop %v831
      %v882 = vmul.f32 %v831, %v881
      %vm883 = vcmp.eq.f32.partialorder %v831, inf
      %v884 = vsel %vm883, %v831, %v882
      %vm885 = vcmp.eq.f32.partialorder %v831, 0.0
      %v886 = vand.u32 %v831, 2147483648
      %v887 = vsel %vm885, %v886, %v884
      %v888 = vmax.f32 %v838, 1e-12
      %v889 = vmax.f32 %v845, 1e-12
      %v890 = vmax.f32 %v852, 1e-12
      %v891 = vmax.f32 %v859, 1e-12
      %v892 = vmax.f32 %v866, 1e-12
      %v893 = vmax.f32 %v873, 1e-12
      %v894 = vmax.f32 %v880, 1e-12
      %v895 = vmax.f32 %v887, 1e-12
      %v896 = vrcp.pop %v888
      %v897 = vrcp.pop %v889
      %v898 = vrcp.pop %v890
      %v899 = vrcp.pop %v891
      %v900 = vrcp.pop %v892
      %v901 = vrcp.pop %v893
      %v902 = vrcp.pop %v894
      %v903 = vrcp.pop %v895
      %v904 = vmul.f32 %v791, %v896
      %v905 = vmul.f32 %v792, %v897
      %v906 = vmul.f32 %v793, %v898
      %v907 = vmul.f32 %v794, %v899
      %v908 = vmul.f32 %v795, %v900
      %v909 = vmul.f32 %v796, %v901
      %v910 = vmul.f32 %v797, %v902
      %v911 = vmul.f32 %v798, %v903
      %s912 = scalar_lea.vmem %s1, 128
      %v913 = vld [vmem:[%s912] sm:$0xf]
      %v914 = vld [vmem:[%s912 + $0x4] sm:$0xf]
      %v915 = vld [vmem:[%s912 + $0x8] sm:$0xf]
      %v916 = vld [vmem:[%s912 + $0xc] sm:$0xf]
      %v917 = vld [vmem:[%s912 + $0x10] sm:$0xf]
      %v918 = vld [vmem:[%s912 + $0x14] sm:$0xf]
      %v919 = vld [vmem:[%s912 + $0x18] sm:$0xf]
      %v920 = vld [vmem:[%s912 + $0x1c] sm:$0xf]
      %v921 = vld [vmem:[%s912 + $0x20] sm:$0xf]
      %v922 = vld [vmem:[%s912 + $0x24] sm:$0xf]
      %v923 = vld [vmem:[%s912 + $0x28] sm:$0xf]
      %v924 = vld [vmem:[%s912 + $0x2c] sm:$0xf]
      %v925 = vld [vmem:[%s912 + $0x30] sm:$0xf]
      %v926 = vld [vmem:[%s912 + $0x34] sm:$0xf]
      %v927 = vld [vmem:[%s912 + $0x38] sm:$0xf]
      %v928 = vld [vmem:[%s912 + $0x3c] sm:$0xf]
      %v929 = vld [vmem:[%s912 + $0x40] sm:$0xf]
      %v930 = vld [vmem:[%s912 + $0x44] sm:$0xf]
      %v931 = vld [vmem:[%s912 + $0x48] sm:$0xf]
      %v932 = vld [vmem:[%s912 + $0x4c] sm:$0xf]
      %v933 = vld [vmem:[%s912 + $0x50] sm:$0xf]
      %v934 = vld [vmem:[%s912 + $0x54] sm:$0xf]
      %v935 = vld [vmem:[%s912 + $0x58] sm:$0xf]
      %v936 = vld [vmem:[%s912 + $0x5c] sm:$0xf]
      %v937 = vld [vmem:[%s912 + $0x60] sm:$0xf]
      %v938 = vld [vmem:[%s912 + $0x64] sm:$0xf]
      %v939 = vld [vmem:[%s912 + $0x68] sm:$0xf]
      %v940 = vld [vmem:[%s912 + $0x6c] sm:$0xf]
      %v941 = vld [vmem:[%s912 + $0x70] sm:$0xf]
      %v942 = vld [vmem:[%s912 + $0x74] sm:$0xf]
      %v943 = vld [vmem:[%s912 + $0x78] sm:$0xf]
      %v944 = vld [vmem:[%s912 + $0x7c] sm:$0xf]
      %945 = vset.pattern.permute.xlu0 1
      %946 = vperm.xlu0 %945, %v306
      %v947 = vpop.permute.xlu0 %946
      %949 = vset.pattern.permute.xlu0 1
      %950 = vperm.xlu0 %949, %v307
      %v951 = vpop.permute.xlu0 %950
      %953 = vset.pattern.permute.xlu0 1
      %954 = vperm.xlu0 %953, %v308
      %v955 = vpop.permute.xlu0 %954
      %957 = vset.pattern.permute.xlu0 1
      %958 = vperm.xlu0 %957, %v309
      %v959 = vpop.permute.xlu0 %958
      %961 = vset.pattern.permute.xlu0 1
      %962 = vperm.xlu0 %961, %v310
      %v963 = vpop.permute.xlu0 %962
      %965 = vset.pattern.permute.xlu0 1
      %966 = vperm.xlu0 %965, %v311
      %v967 = vpop.permute.xlu0 %966
      %969 = vset.pattern.permute.xlu0 1
      %970 = vperm.xlu0 %969, %v312
      %v971 = vpop.permute.xlu0 %970
      %973 = vset.pattern.permute.xlu0 1
      %974 = vperm.xlu0 %973, %v313
      %v975 = vpop.permute.xlu0 %974
      %v977 = vlaneseq
      %v978 = vshrl.u32 %v977, 7
      %v979 = vsub.s32 1, %v978
      %v980 = vrot.slane %v314, %v979
      %v981 = vlaneseq
      %v982 = vshrl.u32 %v981, 7
      %v983 = vsub.s32 3, %v982
      %v984 = vrot.slane %v314, %v983
      %v987 = vlaneseq
      %v988 = vshrl.u32 %v987, 7
      %v989 = vsub.s32 1, %v988
      %v990 = vrot.slane %v980, %v989
      %v991 = vlaneseq
      %v992 = vshrl.u32 %v991, 7
      %v993 = vsub.s32 1, %v992
      %v994 = vrot.slane %v984, %v993
      %v995 = vadd.f32 %v947, %v990
      %v996 = vadd.f32 %v947, %v994
      %v997 = vadd.f32 %v951, %v990
      %v998 = vadd.f32 %v951, %v994
      %v999 = vadd.f32 %v955, %v990
      %v1000 = vadd.f32 %v955, %v994
      %v1001 = vadd.f32 %v959, %v990
      %v1002 = vadd.f32 %v959, %v994
      %v1003 = vadd.f32 %v963, %v990
      %v1004 = vadd.f32 %v963, %v994
      %v1005 = vadd.f32 %v967, %v990
      %v1006 = vadd.f32 %v967, %v994
      %v1007 = vadd.f32 %v971, %v990
      %v1008 = vadd.f32 %v971, %v994
      %v1009 = vadd.f32 %v975, %v990
      %v1010 = vadd.f32 %v975, %v994
      %vm1011 = vcmp.gt.f32.partialorder %v995, 0.0
      %vm1012 = vcmp.gt.f32.partialorder %v996, 0.0
      %vm1013 = vcmp.gt.f32.partialorder %v997, 0.0
      %vm1014 = vcmp.gt.f32.partialorder %v998, 0.0
      %vm1015 = vcmp.gt.f32.partialorder %v999, 0.0
      %vm1016 = vcmp.gt.f32.partialorder %v1000, 0.0
      %vm1017 = vcmp.gt.f32.partialorder %v1001, 0.0
      %vm1018 = vcmp.gt.f32.partialorder %v1002, 0.0
      %vm1019 = vcmp.gt.f32.partialorder %v1003, 0.0
      %vm1020 = vcmp.gt.f32.partialorder %v1004, 0.0
      %vm1021 = vcmp.gt.f32.partialorder %v1005, 0.0
      %vm1022 = vcmp.gt.f32.partialorder %v1006, 0.0
      %vm1023 = vcmp.gt.f32.partialorder %v1007, 0.0
      %vm1024 = vcmp.gt.f32.partialorder %v1008, 0.0
      %vm1025 = vcmp.gt.f32.partialorder %v1009, 0.0
      %vm1026 = vcmp.gt.f32.partialorder %v1010, 0.0
      %v1027 = vmul.f32 %v995, 0.2
      %v1028 = vmul.f32 %v996, 0.2
      %v1029 = vmul.f32 %v997, 0.2
      %v1030 = vmul.f32 %v998, 0.2
      %v1031 = vmul.f32 %v999, 0.2
      %v1032 = vmul.f32 %v1000, 0.2
      %v1033 = vmul.f32 %v1001, 0.2
      %v1034 = vmul.f32 %v1002, 0.2
      %v1035 = vmul.f32 %v1003, 0.2
      %v1036 = vmul.f32 %v1004, 0.2
      %v1037 = vmul.f32 %v1005, 0.2
      %v1038 = vmul.f32 %v1006, 0.2
      %v1039 = vmul.f32 %v1007, 0.2
      %v1040 = vmul.f32 %v1008, 0.2
      %v1041 = vmul.f32 %v1009, 0.2
      %v1042 = vmul.f32 %v1010, 0.2
      %v1043 = vsel %vm1011, %v995, %v1027
      %v1044 = vsel %vm1012, %v996, %v1028
      %v1045 = vsel %vm1013, %v997, %v1029
      %v1046 = vsel %vm1014, %v998, %v1030
      %v1047 = vsel %vm1015, %v999, %v1031
      %v1048 = vsel %vm1016, %v1000, %v1032
      %v1049 = vsel %vm1017, %v1001, %v1033
      %v1050 = vsel %vm1018, %v1002, %v1034
      %v1051 = vsel %vm1019, %v1003, %v1035
      %v1052 = vsel %vm1020, %v1004, %v1036
      %v1053 = vsel %vm1021, %v1005, %v1037
      %v1054 = vsel %vm1022, %v1006, %v1038
      %v1055 = vsel %vm1023, %v1007, %v1039
      %v1056 = vsel %vm1024, %v1008, %v1040
      %v1057 = vsel %vm1025, %v1009, %v1041
      %v1058 = vsel %vm1026, %v1010, %v1042
      %v1059 = vsel %vm290, %v1043, -9e+15
      %v1060 = vsel %vm291, %v1044, -9e+15
      %v1061 = vsel %vm292, %v1045, -9e+15
      %v1062 = vsel %vm293, %v1046, -9e+15
      %v1063 = vsel %vm294, %v1047, -9e+15
      %v1064 = vsel %vm295, %v1048, -9e+15
      %v1065 = vsel %vm296, %v1049, -9e+15
      %v1066 = vsel %vm297, %v1050, -9e+15
      %v1067 = vsel %vm298, %v1051, -9e+15
      %v1068 = vsel %vm299, %v1052, -9e+15
      %v1069 = vsel %vm300, %v1053, -9e+15
      %v1070 = vsel %vm301, %v1054, -9e+15
      %v1071 = vsel %vm302, %v1055, -9e+15
      %v1072 = vsel %vm303, %v1056, -9e+15
      %v1073 = vsel %vm304, %v1057, -9e+15
      %v1074 = vsel %vm305, %v1058, -9e+15
      %v1075 = vmax.f32 %v1059, %v1060
      %1076 = vmax.xlane.f32.xlu0 %v1075
      %v1077 = vpop.xlane.xlu0 %1076
      %v1078 = vmax.f32 %v1061, %v1062
      %1079 = vmax.xlane.f32.xlu0 %v1078
      %v1080 = vpop.xlane.xlu0 %1079
      %v1081 = vmax.f32 %v1063, %v1064
      %1082 = vmax.xlane.f32.xlu0 %v1081
      %v1083 = vpop.xlane.xlu0 %1082
      %v1084 = vmax.f32 %v1065, %v1066
      %1085 = vmax.xlane.f32.xlu0 %v1084
      %v1086 = vpop.xlane.xlu0 %1085
      %v1087 = vmax.f32 %v1067, %v1068
      %1088 = vmax.xlane.f32.xlu0 %v1087
      %v1089 = vpop.xlane.xlu0 %1088
      %v1090 = vmax.f32 %v1069, %v1070
      %1091 = vmax.xlane.f32.xlu0 %v1090
      %v1092 = vpop.xlane.xlu0 %1091
      %v1093 = vmax.f32 %v1071, %v1072
      %1094 = vmax.xlane.f32.xlu0 %v1093
      %v1095 = vpop.xlane.xlu0 %1094
      %v1096 = vmax.f32 %v1073, %v1074
      %1097 = vmax.xlane.f32.xlu0 %v1096
      %v1098 = vpop.xlane.xlu0 %1097
      %v1099 = vsub.f32 %v1059, %v1077
      %v1100 = vsub.f32 %v1060, %v1077
      %v1101 = vsub.f32 %v1061, %v1080
      %v1102 = vsub.f32 %v1062, %v1080
      %v1103 = vsub.f32 %v1063, %v1083
      %v1104 = vsub.f32 %v1064, %v1083
      %v1105 = vsub.f32 %v1065, %v1086
      %v1106 = vsub.f32 %v1066, %v1086
      %v1107 = vsub.f32 %v1067, %v1089
      %v1108 = vsub.f32 %v1068, %v1089
      %v1109 = vsub.f32 %v1069, %v1092
      %v1110 = vsub.f32 %v1070, %v1092
      %v1111 = vsub.f32 %v1071, %v1095
      %v1112 = vsub.f32 %v1072, %v1095
      %v1113 = vsub.f32 %v1073, %v1098
      %v1114 = vsub.f32 %v1074, %v1098
      %v1115 = vmul.f32 %v1099, 1.442695
      %v1116 = vpow.pop %v1115
      %v1117 = vmul.f32 %v1100, 1.442695
      %v1118 = vpow.pop %v1117
      %v1119 = vmul.f32 %v1101, 1.442695
      %v1120 = vpow.pop %v1119
      %v1121 = vmul.f32 %v1102, 1.442695
      %v1122 = vpow.pop %v1121
      %v1123 = vmul.f32 %v1103, 1.442695
      %v1124 = vpow.pop %v1123
      %v1125 = vmul.f32 %v1104, 1.442695
      %v1126 = vpow.pop %v1125
      %v1127 = vmul.f32 %v1105, 1.442695
      %v1128 = vpow.pop %v1127
      %v1129 = vmul.f32 %v1106, 1.442695
      %v1130 = vpow.pop %v1129
      %v1131 = vmul.f32 %v1107, 1.442695
      %v1132 = vpow.pop %v1131
      %v1133 = vmul.f32 %v1108, 1.442695
      %v1134 = vpow.pop %v1133
      %v1135 = vmul.f32 %v1109, 1.442695
      %v1136 = vpow.pop %v1135
      %v1137 = vmul.f32 %v1110, 1.442695
      %v1138 = vpow.pop %v1137
      %v1139 = vmul.f32 %v1111, 1.442695
      %v1140 = vpow.pop %v1139
      %v1141 = vmul.f32 %v1112, 1.442695
      %v1142 = vpow.pop %v1141
      %v1143 = vmul.f32 %v1113, 1.442695
      %v1144 = vpow.pop %v1143
      %v1145 = vmul.f32 %v1114, 1.442695
      %v1146 = vpow.pop %v1145
      %v1147 = vadd.f32 %v1116, %v1118
      %1148 = vadd.xlane.f32.xlu0 %v1147
      %v1149 = vpop.xlane.xlu0 %1148
      %v1150 = vadd.f32 %v1120, %v1122
      %1151 = vadd.xlane.f32.xlu0 %v1150
      %v1152 = vpop.xlane.xlu0 %1151
      %v1153 = vadd.f32 %v1124, %v1126
      %1154 = vadd.xlane.f32.xlu0 %v1153
      %v1155 = vpop.xlane.xlu0 %1154
      %v1156 = vadd.f32 %v1128, %v1130
      %1157 = vadd.xlane.f32.xlu0 %v1156
      %v1158 = vpop.xlane.xlu0 %1157
      %v1159 = vadd.f32 %v1132, %v1134
      %1160 = vadd.xlane.f32.xlu0 %v1159
      %v1161 = vpop.xlane.xlu0 %1160
      %v1162 = vadd.f32 %v1136, %v1138
      %1163 = vadd.xlane.f32.xlu0 %v1162
      %v1164 = vpop.xlane.xlu0 %1163
      %v1165 = vadd.f32 %v1140, %v1142
      %1166 = vadd.xlane.f32.xlu0 %v1165
      %v1167 = vpop.xlane.xlu0 %1166
      %v1168 = vadd.f32 %v1144, %v1146
      %1169 = vadd.xlane.f32.xlu0 %v1168
      %v1170 = vpop.xlane.xlu0 %1169
      %v1171 = vrcp.pop %v1149
      %v1172 = vrcp.pop %v1152
      %v1173 = vrcp.pop %v1155
      %v1174 = vrcp.pop %v1158
      %v1175 = vrcp.pop %v1161
      %v1176 = vrcp.pop %v1164
      %v1177 = vrcp.pop %v1167
      %v1178 = vrcp.pop %v1170
      %v1179 = vmul.f32 %v1116, %v1171
      %v1180 = vmul.f32 %v1118, %v1171
      %v1181 = vmul.f32 %v1120, %v1172
      %v1182 = vmul.f32 %v1122, %v1172
      %v1183 = vmul.f32 %v1124, %v1173
      %v1184 = vmul.f32 %v1126, %v1173
      %v1185 = vmul.f32 %v1128, %v1174
      %v1186 = vmul.f32 %v1130, %v1174
      %v1187 = vmul.f32 %v1132, %v1175
      %v1188 = vmul.f32 %v1134, %v1175
      %v1189 = vmul.f32 %v1136, %v1176
      %v1190 = vmul.f32 %v1138, %v1176
      %v1191 = vmul.f32 %v1140, %v1177
      %v1192 = vmul.f32 %v1142, %v1177
      %v1193 = vmul.f32 %v1144, %v1178
      %v1194 = vmul.f32 %v1146, %v1178
      %v1195 = vpack.c.bf16 %v1181, %v1179
      %v1196 = vpack.c.bf16 %v1182, %v1180
      %v1197 = vpack.c.bf16 %v1185, %v1183
      %v1198 = vpack.c.bf16 %v1186, %v1184
      %v1199 = vpack.c.bf16 %v1189, %v1187
      %v1200 = vpack.c.bf16 %v1190, %v1188
      %v1201 = vpack.c.bf16 %v1193, %v1191
      %v1202 = vpack.c.bf16 %v1194, %v1192
      %v1235 = vunpack.c.l.b16 %v913
      %v1236 = vunpack.c.l.b16 %v914
      %v1237 = vunpack.c.l.b16 %v915
      %v1238 = vunpack.c.l.b16 %v916
      %v1239 = vunpack.c.l.b16 %v917
      %v1240 = vunpack.c.l.b16 %v918
      %v1241 = vunpack.c.l.b16 %v919
      %v1242 = vunpack.c.l.b16 %v920
      %v1243 = vunpack.c.l.b16 %v921
      %v1244 = vunpack.c.l.b16 %v922
      %v1245 = vunpack.c.l.b16 %v923
      %v1246 = vunpack.c.l.b16 %v924
      %v1247 = vunpack.c.l.b16 %v925
      %v1248 = vunpack.c.l.b16 %v926
      %v1249 = vunpack.c.l.b16 %v927
      %v1250 = vunpack.c.l.b16 %v928
      %v1251 = vunpack.c.l.b16 %v929
      %v1252 = vunpack.c.l.b16 %v930
      %v1253 = vunpack.c.l.b16 %v931
      %v1254 = vunpack.c.l.b16 %v932
      %v1255 = vunpack.c.l.b16 %v933
      %v1256 = vunpack.c.l.b16 %v934
      %v1257 = vunpack.c.l.b16 %v935
      %v1258 = vunpack.c.l.b16 %v936
      %v1259 = vunpack.c.l.b16 %v937
      %v1260 = vunpack.c.l.b16 %v938
      %v1261 = vunpack.c.l.b16 %v939
      %v1262 = vunpack.c.l.b16 %v940
      %v1263 = vunpack.c.l.b16 %v941
      %v1264 = vunpack.c.l.b16 %v942
      %v1265 = vunpack.c.l.b16 %v943
      %v1266 = vunpack.c.l.b16 %v944
      %v1267 = vpack.c.b16 %v1236, %v1235
      %v1268 = vpack.c.b16 %v1238, %v1237
      %v1269 = vpack.c.b16 %v1240, %v1239
      %v1270 = vpack.c.b16 %v1242, %v1241
      %v1271 = vpack.c.b16 %v1244, %v1243
      %v1272 = vpack.c.b16 %v1246, %v1245
      %v1273 = vpack.c.b16 %v1248, %v1247
      %v1274 = vpack.c.b16 %v1250, %v1249
      %v1275 = vpack.c.b16 %v1252, %v1251
      %v1276 = vpack.c.b16 %v1254, %v1253
      %v1277 = vpack.c.b16 %v1256, %v1255
      %v1278 = vpack.c.b16 %v1258, %v1257
      %v1279 = vpack.c.b16 %v1260, %v1259
      %v1280 = vpack.c.b16 %v1262, %v1261
      %v1281 = vpack.c.b16 %v1264, %v1263
      %v1282 = vpack.c.b16 %v1266, %v1265
      %1299 = vmatprep.subr.bf16.mxu0 0
      %1300 = vmatpush1.bf16.msra.mxu0 %v1267
      %1301 = vmatprep.subr.bf16.mxu0 0
      %1302 = vmatpush1.bf16.msra.mxu0 %v1268
      %1303 = vmatprep.subr.bf16.mxu0 0
      %1304 = vmatpush1.bf16.msra.mxu0 %v1269
      %1305 = vmatprep.subr.bf16.mxu0 0
      %1306 = vmatpush1.bf16.msra.mxu0 %v1270
      %1307 = vmatprep.subr.bf16.mxu0 0
      %1308 = vmatpush1.bf16.msra.mxu0 %v1271
      %1309 = vmatprep.subr.bf16.mxu0 0
      %1310 = vmatpush1.bf16.msra.mxu0 %v1272
      %1311 = vmatprep.subr.bf16.mxu0 0
      %1312 = vmatpush1.bf16.msra.mxu0 %v1273
      %1313 = vmatprep.subr.bf16.mxu0 0
      %1314 = vmatpush1.bf16.msra.mxu0 %v1274
      %1315 = vmatprep.subr.bf16.mxu0 0
      %1316 = vmatpush1.bf16.msra.mxu0 %v1275
      %1317 = vmatprep.subr.bf16.mxu0 0
      %1318 = vmatpush1.bf16.msra.mxu0 %v1276
      %1319 = vmatprep.subr.bf16.mxu0 0
      %1320 = vmatpush1.bf16.msra.mxu0 %v1277
      %1321 = vmatprep.subr.bf16.mxu0 0
      %1322 = vmatpush1.bf16.msra.mxu0 %v1278
      %1323 = vmatprep.subr.bf16.mxu0 0
      %1324 = vmatpush1.bf16.msra.mxu0 %v1279
      %1325 = vmatprep.subr.bf16.mxu0 0
      %1326 = vmatpush1.bf16.msra.mxu0 %v1280
      %1327 = vmatprep.subr.bf16.mxu0 0
      %1328 = vmatpush1.bf16.msra.mxu0 %v1281
      %1329 = vmatprep.subr.bf16.mxu0 0
      %1330 = vmatpush1.bf16.msra.mxu0 %v1282
      %1331 = vmatprep.mubr.bf16.mxu0 %v1196
      %1332 = vmatmul.mubr.bf16.gmra.mrb[0].mxu0 %v1195
      %v1333 = vpop.f32.mrb[0].mxu0
      %v1334 = vadd.f32 0.0, %v1333
      %v1335 = vpop.f32.mrb[0].mxu0
      %v1336 = vpop.f32.mrb[0].mxu0
      %v1337 = vadd.f32 0.0, %v1336
      %v1338 = vpop.f32.mrb[0].mxu0
      %1339 = vmatprep.mubr.bf16.mxu0 %v1198
      %1340 = vmatmul.mubr.bf16.gmra.mrb[0].mxu0 %v1197
      %v1341 = vpop.f32.mrb[0].mxu0
      %v1342 = vadd.f32 0.0, %v1341
      %v1343 = vpop.f32.mrb[0].mxu0
      %v1344 = vpop.f32.mrb[0].mxu0
      %v1345 = vadd.f32 0.0, %v1344
      %v1346 = vpop.f32.mrb[0].mxu0
      %1347 = vmatprep.mubr.bf16.mxu0 %v1200
      %1348 = vmatmul.mubr.bf16.gmra.mrb[0].mxu0 %v1199
      %v1349 = vpop.f32.mrb[0].mxu0
      %v1350 = vadd.f32 0.0, %v1349
      %v1351 = vpop.f32.mrb[0].mxu0
      %v1352 = vpop.f32.mrb[0].mxu0
      %v1353 = vadd.f32 0.0, %v1352
      %v1354 = vpop.f32.mrb[0].mxu0
      %1355 = vmatprep.mubr.bf16.mxu0 %v1202
      %1356 = vmatmul.mubr.bf16.gmra.mrb[0].mxu0 %v1201
      %v1357 = vpop.f32.mrb[0].mxu0
      %v1358 = vadd.f32 0.0, %v1357
      %v1359 = vpop.f32.mrb[0].mxu0
      %v1360 = vpop.f32.mrb[0].mxu0
      %v1361 = vadd.f32 0.0, %v1360
      %v1362 = vpop.f32.mrb[0].mxu0
      %1363 = vdwg.mxu0
      %vm1364 = vcmp.gt.f32.partialorder %v1334, 0.0
      %vm1365 = vcmp.gt.f32.partialorder %v1337, 0.0
      %vm1366 = vcmp.gt.f32.partialorder %v1342, 0.0
      %vm1367 = vcmp.gt.f32.partialorder %v1345, 0.0
      %vm1368 = vcmp.gt.f32.partialorder %v1350, 0.0
      %vm1369 = vcmp.gt.f32.partialorder %v1353, 0.0
      %vm1370 = vcmp.gt.f32.partialorder %v1358, 0.0
      %vm1371 = vcmp.gt.f32.partialorder %v1361, 0.0
      %v1372 = vmul.f32 %v1334, 0.2
      %v1373 = vmul.f32 %v1337, 0.2
      %v1374 = vmul.f32 %v1342, 0.2
      %v1375 = vmul.f32 %v1345, 0.2
      %v1376 = vmul.f32 %v1350, 0.2
      %v1377 = vmul.f32 %v1353, 0.2
      %v1378 = vmul.f32 %v1358, 0.2
      %v1379 = vmul.f32 %v1361, 0.2
      %v1380 = vsel %vm1364, %v1334, %v1372
      %v1381 = vsel %vm1365, %v1337, %v1373
      %v1382 = vsel %vm1366, %v1342, %v1374
      %v1383 = vsel %vm1367, %v1345, %v1375
      %v1384 = vsel %vm1368, %v1350, %v1376
      %v1385 = vsel %vm1369, %v1353, %v1377
      %v1386 = vsel %vm1370, %v1358, %v1378
      %v1387 = vsel %vm1371, %v1361, %v1379
      %v1388 = vmul.f32 %v1380, %v1380
      %v1389 = vmul.f32 %v1381, %v1381
      %v1390 = vmul.f32 %v1382, %v1382
      %v1391 = vmul.f32 %v1383, %v1383
      %v1392 = vmul.f32 %v1384, %v1384
      %v1393 = vmul.f32 %v1385, %v1385
      %v1394 = vmul.f32 %v1386, %v1386
      %v1395 = vmul.f32 %v1387, %v1387
      %v1396 = vsel %vm807, %v1388, 0.0
      %1397 = vadd.xlane.f32.xlu0 %v1396
      %v1398 = vpop.xlane.xlu0 %1397
      %v1399 = vsel %vm807, %v1389, 0.0
      %1400 = vadd.xlane.f32.xlu0 %v1399
      %v1401 = vpop.xlane.xlu0 %1400
      %v1402 = vsel %vm807, %v1390, 0.0
      %1403 = vadd.xlane.f32.xlu0 %v1402
      %v1404 = vpop.xlane.xlu0 %1403
      %v1405 = vsel %vm807, %v1391, 0.0
      %1406 = vadd.xlane.f32.xlu0 %v1405
      %v1407 = vpop.xlane.xlu0 %1406
      %v1408 = vsel %vm807, %v1392, 0.0
      %1409 = vadd.xlane.f32.xlu0 %v1408
      %v1410 = vpop.xlane.xlu0 %1409
      %v1411 = vsel %vm807, %v1393, 0.0
      %1412 = vadd.xlane.f32.xlu0 %v1411
      %v1413 = vpop.xlane.xlu0 %1412
      %v1414 = vsel %vm807, %v1394, 0.0
      %1415 = vadd.xlane.f32.xlu0 %v1414
      %v1416 = vpop.xlane.xlu0 %1415
      %v1417 = vsel %vm807, %v1395, 0.0
      %1418 = vadd.xlane.f32.xlu0 %v1417
      %v1419 = vpop.xlane.xlu0 %1418
      %v1420 = vrsqrt.pop %v1398
      %v1421 = vmul.f32 %v1398, %v1420
      %vm1422 = vcmp.eq.f32.partialorder %v1398, inf
      %v1423 = vsel %vm1422, %v1398, %v1421
      %vm1424 = vcmp.eq.f32.partialorder %v1398, 0.0
      %v1425 = vand.u32 %v1398, 2147483648
      %v1426 = vsel %vm1424, %v1425, %v1423
      %v1427 = vrsqrt.pop %v1401
      %v1428 = vmul.f32 %v1401, %v1427
      %vm1429 = vcmp.eq.f32.partialorder %v1401, inf
      %v1430 = vsel %vm1429, %v1401, %v1428
      %vm1431 = vcmp.eq.f32.partialorder %v1401, 0.0
      %v1432 = vand.u32 %v1401, 2147483648
      %v1433 = vsel %vm1431, %v1432, %v1430
      %v1434 = vrsqrt.pop %v1404
      %v1435 = vmul.f32 %v1404, %v1434
      %vm1436 = vcmp.eq.f32.partialorder %v1404, inf
      %v1437 = vsel %vm1436, %v1404, %v1435
      %vm1438 = vcmp.eq.f32.partialorder %v1404, 0.0
      %v1439 = vand.u32 %v1404, 2147483648
      %v1440 = vsel %vm1438, %v1439, %v1437
      %v1441 = vrsqrt.pop %v1407
      %v1442 = vmul.f32 %v1407, %v1441
      %vm1443 = vcmp.eq.f32.partialorder %v1407, inf
      %v1444 = vsel %vm1443, %v1407, %v1442
      %vm1445 = vcmp.eq.f32.partialorder %v1407, 0.0
      %v1446 = vand.u32 %v1407, 2147483648
      %v1447 = vsel %vm1445, %v1446, %v1444
      %v1448 = vrsqrt.pop %v1410
      %v1449 = vmul.f32 %v1410, %v1448
      %vm1450 = vcmp.eq.f32.partialorder %v1410, inf
      %v1451 = vsel %vm1450, %v1410, %v1449
      %vm1452 = vcmp.eq.f32.partialorder %v1410, 0.0
      %v1453 = vand.u32 %v1410, 2147483648
      %v1454 = vsel %vm1452, %v1453, %v1451
      %v1455 = vrsqrt.pop %v1413
      %v1456 = vmul.f32 %v1413, %v1455
      %vm1457 = vcmp.eq.f32.partialorder %v1413, inf
      %v1458 = vsel %vm1457, %v1413, %v1456
      %vm1459 = vcmp.eq.f32.partialorder %v1413, 0.0
      %v1460 = vand.u32 %v1413, 2147483648
      %v1461 = vsel %vm1459, %v1460, %v1458
      %v1462 = vrsqrt.pop %v1416
      %v1463 = vmul.f32 %v1416, %v1462
      %vm1464 = vcmp.eq.f32.partialorder %v1416, inf
      %v1465 = vsel %vm1464, %v1416, %v1463
      %vm1466 = vcmp.eq.f32.partialorder %v1416, 0.0
      %v1467 = vand.u32 %v1416, 2147483648
      %v1468 = vsel %vm1466, %v1467, %v1465
      %v1469 = vrsqrt.pop %v1419
      %v1470 = vmul.f32 %v1419, %v1469
      %vm1471 = vcmp.eq.f32.partialorder %v1419, inf
      %v1472 = vsel %vm1471, %v1419, %v1470
      %vm1473 = vcmp.eq.f32.partialorder %v1419, 0.0
      %v1474 = vand.u32 %v1419, 2147483648
      %v1475 = vsel %vm1473, %v1474, %v1472
      %v1476 = vmax.f32 %v1426, 1e-12
      %v1477 = vmax.f32 %v1433, 1e-12
      %v1478 = vmax.f32 %v1440, 1e-12
      %v1479 = vmax.f32 %v1447, 1e-12
      %v1480 = vmax.f32 %v1454, 1e-12
      %v1481 = vmax.f32 %v1461, 1e-12
      %v1482 = vmax.f32 %v1468, 1e-12
      %v1483 = vmax.f32 %v1475, 1e-12
      %v1484 = vrcp.pop %v1476
      %v1485 = vrcp.pop %v1477
      %v1486 = vrcp.pop %v1478
      %v1487 = vrcp.pop %v1479
      %v1488 = vrcp.pop %v1480
      %v1489 = vrcp.pop %v1481
      %v1490 = vrcp.pop %v1482
      %v1491 = vrcp.pop %v1483
      %v1492 = vmul.f32 %v1380, %v1484
      %v1493 = vmul.f32 %v1381, %v1485
      %v1494 = vmul.f32 %v1382, %v1486
      %v1495 = vmul.f32 %v1383, %v1487
      %v1496 = vmul.f32 %v1384, %v1488
      %v1497 = vmul.f32 %v1385, %v1489
      %v1498 = vmul.f32 %v1386, %v1490
      %v1499 = vmul.f32 %v1387, %v1491
      %v1500 = vadd.f32 %v904, %v1492
      %v1501 = vadd.f32 %v905, %v1493
      %v1502 = vadd.f32 %v906, %v1494
      %v1503 = vadd.f32 %v907, %v1495
      %v1504 = vadd.f32 %v908, %v1496
      %v1505 = vadd.f32 %v909, %v1497
      %v1506 = vadd.f32 %v910, %v1498
      %v1507 = vadd.f32 %v911, %v1499
      %v1508 = vmul.f32 %v1500, 0.5
      %v1509 = vmul.f32 %v1501, 0.5
      %v1510 = vmul.f32 %v1502, 0.5
      %v1511 = vmul.f32 %v1503, 0.5
      %v1512 = vmul.f32 %v1504, 0.5
      %v1513 = vmul.f32 %v1505, 0.5
      %v1514 = vmul.f32 %v1506, 0.5
      %v1515 = vmul.f32 %v1507, 0.5
      %v1516 = vld [vmem:[%s4] sm:$0x1]
      %v1518 = vlaneseq
      %v1519 = vshrl.u32 %v1518, 7
      %v1520 = vsub.s32 0, %v1519
      %v1521 = vrot.slane %v1516, %v1520
      %v1523 = vadd.f32 %v1508, %v1521
      %v1524 = vadd.f32 %v1509, %v1521
      %v1525 = vadd.f32 %v1510, %v1521
      %v1526 = vadd.f32 %v1511, %v1521
      %v1527 = vadd.f32 %v1512, %v1521
      %v1528 = vadd.f32 %v1513, %v1521
      %v1529 = vadd.f32 %v1514, %v1521
      %v1530 = vadd.f32 %v1515, %v1521
      %vm1531 = vcmp.gt.f32.partialorder %v1523, 0.0
      %vm1532 = vcmp.gt.f32.partialorder %v1524, 0.0
      %vm1533 = vcmp.gt.f32.partialorder %v1525, 0.0
      %vm1534 = vcmp.gt.f32.partialorder %v1526, 0.0
      %vm1535 = vcmp.gt.f32.partialorder %v1527, 0.0
      %vm1536 = vcmp.gt.f32.partialorder %v1528, 0.0
      %vm1537 = vcmp.gt.f32.partialorder %v1529, 0.0
      %vm1538 = vcmp.gt.f32.partialorder %v1530, 0.0
      %v1539 = vmin.f32 %v1523, 0.0
      %v1540 = vmin.f32 %v1524, 0.0
      %v1541 = vmin.f32 %v1525, 0.0
      %v1542 = vmin.f32 %v1526, 0.0
      %v1543 = vmin.f32 %v1527, 0.0
      %v1544 = vmin.f32 %v1528, 0.0
      %v1545 = vmin.f32 %v1529, 0.0
      %v1546 = vmin.f32 %v1530, 0.0
      %v1547 = vmul.f32 %v1539, 1.442695
      %v1548 = vpow.pop %v1547
      %v1549 = vmul.f32 %v1540, 1.442695
      %v1550 = vpow.pop %v1549
      %v1551 = vmul.f32 %v1541, 1.442695
      %v1552 = vpow.pop %v1551
      %v1553 = vmul.f32 %v1542, 1.442695
      %v1554 = vpow.pop %v1553
      %v1555 = vmul.f32 %v1543, 1.442695
      %v1556 = vpow.pop %v1555
      %v1557 = vmul.f32 %v1544, 1.442695
      %v1558 = vpow.pop %v1557
      %v1559 = vmul.f32 %v1545, 1.442695
      %v1560 = vpow.pop %v1559
      %v1561 = vmul.f32 %v1546, 1.442695
      %v1562 = vpow.pop %v1561
      %v1563 = vsub.f32 %v1548, 1.0
      %v1564 = vsub.f32 %v1550, 1.0
      %v1565 = vsub.f32 %v1552, 1.0
      %v1566 = vsub.f32 %v1554, 1.0
      %v1567 = vsub.f32 %v1556, 1.0
      %v1568 = vsub.f32 %v1558, 1.0
      %v1569 = vsub.f32 %v1560, 1.0
      %v1570 = vsub.f32 %v1562, 1.0
      %v1571 = vsel %vm1531, %v1523, %v1563
      %v1572 = vsel %vm1532, %v1524, %v1564
      %v1573 = vsel %vm1533, %v1525, %v1565
      %v1574 = vsel %vm1534, %v1526, %v1566
      %v1575 = vsel %vm1535, %v1527, %v1567
      %v1576 = vsel %vm1536, %v1528, %v1568
      %v1577 = vsel %vm1537, %v1529, %v1569
      %v1578 = vsel %vm1538, %v1530, %v1570
      %1579 = vst.msk [vmem:[%s251] sm:$0xff] %vm807, %v1571
      %1580 = vst.msk [vmem:[%s251 + $0x8] sm:$0xff] %vm807, %v1572
      %1581 = vst.msk [vmem:[%s251 + $0x10] sm:$0xff] %vm807, %v1573
      %1582 = vst.msk [vmem:[%s251 + $0x18] sm:$0xff] %vm807, %v1574
      %1583 = vst.msk [vmem:[%s251 + $0x20] sm:$0xff] %vm807, %v1575
      %1584 = vst.msk [vmem:[%s251 + $0x28] sm:$0xff] %vm807, %v1576
      %1585 = vst.msk [vmem:[%s251 + $0x30] sm:$0xff] %vm807, %v1577
      %1586 = vst.msk [vmem:[%s251 + $0x38] sm:$0xff] %vm807, %v1578
      %s1587 = smul.u32 8, %s16
      %p1588 = scmp.lt.s32.totalorder %s1587, 31
      %s1589 = scalar_select %p1588, %s1587, 31
      %s1590 = smul.addr %s1589, 8
      %s1591 = scalar_lea.vmem %s5, %s1590
      // Predicated region
      $region41: #{forward.6} parent=39 // pred_check
        %p1592 = pneg %p149
      $region42: #{forward.6} parent=39 // pred_check_branch
        %1594 = sbr.rel (%p1592) target = $region44
      $region43: #{forward.6} parent=39 // pred_region
        %s1595 = smul.u32 8, %s16
      $region44: #{forward.6} parent=39 // pred_fallthru
        _
    $region40: #{forward.6} parent=5 // pred_fallthru
      _
    %p1596 = scmp.le.s32.totalorder 2, %s11
    // Predicated region
    $region45: #{forward.6} parent=5 // pred_check
      %p1597 = pneg %p1596
    $region46: #{forward.6} parent=5 // pred_check_branch
      %1599 = sbr.rel (%p1597) target = $region48
    $region47: #{forward.6} parent=5 // pred_region
      %s1600 = ssub.s32 %s11, 2
      // Predicated region
      $region49: #{forward.6} parent=47 // pred_check
        %p1601 = pneg %p155
      $region50: #{forward.6} parent=47 // pred_check_branch
        %1603 = sbr.rel (%p1601) target = $region52
      $region51: #{forward.6} parent=47 // pred_region
        %s1604 = smul.u32 8, %s17
        %p1605 = scmp.lt.s32.totalorder %s1604, 31
        %s1606 = scalar_select %p1605, %s1604, 31
        %s1607 = smul.addr %s1606, 8
        %s1608 = scalar_lea.vmem %s5, %s1607
      $region52: #{forward.6} parent=47 // pred_fallthru
        _
    $region48: #{forward.6} parent=5 // pred_fallthru
      _
  $region6: #{forward.6} parent=0 // loop_footer
    %s15 = sadd.s32 1, %s11
  $region7: #{forward.6} parent=0 // loop_footer_branch
    %10 = sbr.rel target = $region3
  $region8: #{forward.6} parent=0 // loop_exit
    _

// kernel: forward.9
$region0: #{forward.9}
  #allocation0 [shape = 'u32[]', space=smem, size = 0x4, offset = 0x4, fixed_abs, tag = 'smem constant byte address 0x4 - core index']
  #allocation1 [shape = 'u32[144,128]{1,0:T(1,128)}', space=vmem, size = 0x12000, scoped, tag = 'internal scratch']
  %s0 = inlined_call_operand.vmem [shape: f32[256,16], index: 0, kind: input, shape index: {}]
  %s1 = inlined_call_operand.vmem [shape: f32[16,32], index: 1, kind: input, shape index: {}]
  %s2 = inlined_call_operand.vmem [shape: f32[1,32], index: 2, kind: input, shape index: {}]
  %s3 = inlined_call_operand.vmem [shape: f32[32,16], index: 3, kind: input, shape index: {}]
  %s4 = inlined_call_operand.vmem [shape: f32[1,16], index: 4, kind: input, shape index: {}]
  %s5 = inlined_call_operand.vmem [shape: f32[256,16], index: 5, kind: output, shape index: {}]
  %s6 = sld [smem:[#allocation0]]
  $region53: #{forward.9} parent=0
    _
  %s8 = ssub.s32 1, %s6
  %s9 = scalar_select 0, %s8, %s6
  loop: start=0, step=1, limit=6
  $region2: #{forward.9} parent=0 // loop_pre_header
    _
  $region3: #{forward.9} parent=0 // loop_header
    %s11 = sphi 0, %s15
    %p12 = scmp.ge.s32.totalorder %s11, 6
    %s21 = sphi 0, %s23
    %s24 = sphi 0, %s21
    %s25 = sphi 0, %s24
    %s41 = sphi 0, %s25
    %s45 = sphi 0, %s45
    %s47 = sphi 0, %s45
    %s48 = sphi 0, %s47
    %s62 = sphi 0, %s48
    %s66 = sphi 0, %s66
    %s68 = sphi 0, %s66
    %s69 = sphi 0, %s68
    %s83 = sphi 0, %s69
    %s87 = sphi 0, %s87
    %s89 = sphi 0, %s87
    %s90 = sphi 0, %s89
    %s104 = sphi 0, %s90
    %s108 = sphi 0, %s108
    %s110 = sphi 0, %s108
    %s111 = sphi 0, %s110
    %s125 = sphi 0, %s111
    %s131 = sphi 0, %s133
    %s134 = sphi 0, %s131
    %s135 = sphi 0, %s134
    %s151 = sphi 0, %s135
  $region4: #{forward.9} parent=0 // loop_header_branch
    %14 = sbr.rel (%p12) target = $region8
  $region5: #{forward.9} parent=0 // loop_body
    %s16 = ssub.s32 %s11, 1
    %s17 = ssub.s32 %s11, 2
    %s18 = sadd.s32 %s11, 1
    %s19 = ssub.s32 %s11, %s18
    %p20 = scmp.eq.s32.totalorder %s19, 0
    %s22 = sadd.s32 %s21, 1
    %s23 = scalar_select %p20, %s21, %s22
    %p26 = pneg %p20
    %p27 = scmp.eq.s32.totalorder %s11, 3
    %p28 = por %p26, %p27
    %p29 = scmp.ne.s32.totalorder %s21, %s24
    %p30 = scmp.eq.s32.totalorder %s11, 0
    %p31 = por %p29, %p30
    %p32 = scmp.ne.s32.totalorder %s21, %s24
    %p33 = scmp.eq.s32.totalorder %s16, 3
    %p34 = por %p32, %p33
    %p35 = scmp.ne.s32.totalorder %s24, %s25
    %p36 = scmp.eq.s32.totalorder %s16, 0
    %p37 = por %p35, %p36
    %p38 = scmp.ne.s32.totalorder %s24, %s25
    %p39 = scmp.eq.s32.totalorder %s17, 3
    %p40 = por %p38, %p39
    %p42 = scmp.ne.s32.totalorder %s25, %s41
    %p43 = scmp.eq.s32.totalorder %s17, 0
    %p44 = por %p42, %p43
    %s46 = sadd.s32 %s45, 1
    %p49 = scmp.eq.s32.totalorder %s11, 3
    %p50 = scmp.ne.s32.totalorder %s45, %s47
    %p51 = scmp.eq.s32.totalorder %s11, 0
    %p52 = por %p50, %p51
    %p53 = scmp.ne.s32.totalorder %s45, %s47
    %p54 = scmp.eq.s32.totalorder %s16, 3
    %p55 = por %p53, %p54
    %p56 = scmp.ne.s32.totalorder %s47, %s48
    %p57 = scmp.eq.s32.totalorder %s16, 0
    %p58 = por %p56, %p57
    %p59 = scmp.ne.s32.totalorder %s47, %s48
    %p60 = scmp.eq.s32.totalorder %s17, 3
    %p61 = por %p59, %p60
    %p63 = scmp.ne.s32.totalorder %s48, %s62
    %p64 = scmp.eq.s32.totalorder %s17, 0
    %p65 = por %p63, %p64
    %s67 = sadd.s32 %s66, 1
    %p70 = scmp.eq.s32.totalorder %s11, 3
    %p71 = scmp.ne.s32.totalorder %s66, %s68
    %p72 = scmp.eq.s32.totalorder %s11, 0
    %p73 = por %p71, %p72
    %p74 = scmp.ne.s32.totalorder %s66, %s68
    %p75 = scmp.eq.s32.totalorder %s16, 3
    %p76 = por %p74, %p75
    %p77 = scmp.ne.s32.totalorder %s68, %s69
    %p78 = scmp.eq.s32.totalorder %s16, 0
    %p79 = por %p77, %p78
    %p80 = scmp.ne.s32.totalorder %s68, %s69
    %p81 = scmp.eq.s32.totalorder %s17, 3
    %p82 = por %p80, %p81
    %p84 = scmp.ne.s32.totalorder %s69, %s83
    %p85 = scmp.eq.s32.totalorder %s17, 0
    %p86 = por %p84, %p85
    %s88 = sadd.s32 %s87, 1
    %p91 = scmp.eq.s32.totalorder %s11, 3
    %p92 = scmp.ne.s32.totalorder %s87, %s89
    %p93 = scmp.eq.s32.totalorder %s11, 0
    %p94 = por %p92, %p93
    %p95 = scmp.ne.s32.totalorder %s87, %s89
    %p96 = scmp.eq.s32.totalorder %s16, 3
    %p97 = por %p95, %p96
    %p98 = scmp.ne.s32.totalorder %s89, %s90
    %p99 = scmp.eq.s32.totalorder %s16, 0
    %p100 = por %p98, %p99
    %p101 = scmp.ne.s32.totalorder %s89, %s90
    %p102 = scmp.eq.s32.totalorder %s17, 3
    %p103 = por %p101, %p102
    %p105 = scmp.ne.s32.totalorder %s90, %s104
    %p106 = scmp.eq.s32.totalorder %s17, 0
    %p107 = por %p105, %p106
    %s109 = sadd.s32 %s108, 1
    %p112 = scmp.eq.s32.totalorder %s11, 3
    %p113 = scmp.ne.s32.totalorder %s108, %s110
    %p114 = scmp.eq.s32.totalorder %s11, 0
    %p115 = por %p113, %p114
    %p116 = scmp.ne.s32.totalorder %s108, %s110
    %p117 = scmp.eq.s32.totalorder %s16, 3
    %p118 = por %p116, %p117
    %p119 = scmp.ne.s32.totalorder %s110, %s111
    %p120 = scmp.eq.s32.totalorder %s16, 0
    %p121 = por %p119, %p120
    %p122 = scmp.ne.s32.totalorder %s110, %s111
    %p123 = scmp.eq.s32.totalorder %s17, 3
    %p124 = por %p122, %p123
    %p126 = scmp.ne.s32.totalorder %s111, %s125
    %p127 = scmp.eq.s32.totalorder %s17, 0
    %p128 = por %p126, %p127
    %s129 = ssub.s32 %s11, %s18
    %p130 = scmp.eq.s32.totalorder %s129, 0
    %s132 = sadd.s32 %s131, 1
    %s133 = scalar_select %p130, %s131, %s132
    %p136 = pneg %p130
    %p137 = scmp.eq.s32.totalorder %s11, 3
    %p138 = por %p136, %p137
    %p139 = scmp.ne.s32.totalorder %s131, %s134
    %p140 = scmp.eq.s32.totalorder %s11, 0
    %p141 = por %p139, %p140
    %p142 = scmp.ne.s32.totalorder %s131, %s134
    %p143 = scmp.eq.s32.totalorder %s16, 3
    %p144 = por %p142, %p143
    %p145 = scmp.ne.s32.totalorder %s134, %s135
    %p146 = scmp.eq.s32.totalorder %s16, 0
    %p147 = por %p145, %p146
    %p148 = scmp.ne.s32.totalorder %s134, %s135
    %p149 = scmp.eq.s32.totalorder %s17, 3
    %p150 = por %p148, %p149
    %p152 = scmp.ne.s32.totalorder %s135, %s151
    %p153 = scmp.eq.s32.totalorder %s17, 0
    %p154 = por %p152, %p153
    %p155 = scmp.le.s32.totalorder 1, %s11
    %p156 = scmp.lt.s32.totalorder %s11, 5
    %p157 = pnand %p155, %p156
    %p158 = pneg %p157
    // Predicated region
    $region9: #{forward.9} parent=5 // pred_check
      _
    $region10: #{forward.9} parent=5 // pred_check_branch
      %160 = sbr.rel (%p157) target = $region12
    $region11: #{forward.9} parent=5 // pred_region
      %s161 = ssub.s32 %s11, 1
      // Predicated region
      $region13: #{forward.9} parent=11 // pred_check
        %p162 = pneg %p58
      $region14: #{forward.9} parent=11 // pred_check_branch
        %164 = sbr.rel (%p162) target = $region16
      $region15: #{forward.9} parent=11 // pred_region
        _
      $region16: #{forward.9} parent=11 // pred_fallthru
        _
      // Predicated region
      $region17: #{forward.9} parent=11 // pred_check
        %p165 = pneg %p79
      $region18: #{forward.9} parent=11 // pred_check_branch
        %167 = sbr.rel (%p165) target = $region20
      $region19: #{forward.9} parent=11 // pred_region
        _
      $region20: #{forward.9} parent=11 // pred_fallthru
        _
      // Predicated region
      $region21: #{forward.9} parent=11 // pred_check
        %p168 = pneg %p100
      $region22: #{forward.9} parent=11 // pred_check_branch
        %170 = sbr.rel (%p168) target = $region24
      $region23: #{forward.9} parent=11 // pred_region
        _
      $region24: #{forward.9} parent=11 // pred_fallthru
        _
      // Predicated region
      $region25: #{forward.9} parent=11 // pred_check
        %p171 = pneg %p121
      $region26: #{forward.9} parent=11 // pred_check_branch
        %173 = sbr.rel (%p171) target = $region28
      $region27: #{forward.9} parent=11 // pred_region
        _
      $region28: #{forward.9} parent=11 // pred_fallthru
        _
    $region12: #{forward.9} parent=5 // pred_fallthru
      _
    %p174 = scmp.lt.s32.totalorder %s11, 4
    // Predicated region
    $region29: #{forward.9} parent=5 // pred_check
      %p175 = pneg %p174
    $region30: #{forward.9} parent=5 // pred_check_branch
      %177 = sbr.rel (%p175) target = $region32
    $region31: #{forward.9} parent=5 // pred_region
      // Predicated region
      $region33: #{forward.9} parent=31 // pred_check
        %p178 = pneg %p31
      $region34: #{forward.9} parent=31 // pred_check_branch
        %180 = sbr.rel (%p178) target = $region36
      $region35: #{forward.9} parent=31 // pred_region
        %s181 = smul.u32 8, %s11
        %p182 = scmp.lt.s32.totalorder %s181, 31
        %s183 = scalar_select %p182, %s181, 31
        %s184 = smul.addr %s183, 8
        %s185 = scalar_lea.vmem %s0, %s184
        %s186 = smul.u32 8, %s11
      $region36: #{forward.9} parent=31 // pred_fallthru
        _
    $region32: #{forward.9} parent=5 // pred_fallthru
      _
    %p187 = scmp.le.s32.totalorder 1, %s11
    %p188 = scmp.lt.s32.totalorder %s11, 5
    %p189 = pnand %p187, %p188
    %p190 = pneg %p189
    // Predicated region
    $region37: #{forward.9} parent=5 // pred_check
      _
    $region38: #{forward.9} parent=5 // pred_check_branch
      %192 = sbr.rel (%p189) target = $region40
    $region39: #{forward.9} parent=5 // pred_region
      %s193 = ssub.s32 %s11, 1
      %s194 = smul.u32 8, %s16
      %p195 = scmp.lt.s32.totalorder %s194, 31
      %s196 = scalar_select %p195, %s194, 31
      %s197 = smul.addr %s196, 8
      %s198 = scalar_lea.vmem %s0, %s197
      %p199 = pneg %p37
      %p200 = pneg %p34
      %p201 = pneg %p58
      %p202 = pneg %p55
      %p203 = pneg %p79
      %p204 = pneg %p76
      %p205 = pneg %p100
      %p206 = pneg %p97
      %p207 = pneg %p121
      %p208 = pneg %p118
      %p209 = pneg %p147
      %p210 = pneg %p144
      %s211 = smul.u32 8, %s16
      %p212 = scmp.lt.s32.totalorder %s211, 31
      %s213 = scalar_select %p212, %s211, 31
      %s214 = smul.addr %s213, 8
      %s215 = scalar_lea.vmem %s5, %s214
      %s216 = smul.u32 8, %s16
      %p217 = scmp.lt.s32.totalorder %s216, 31
      %s218 = scalar_select %p217, %s216, 31
      %s219 = smul.addr %s218, 8
      %s220 = scalar_lea.vmem %s0, %s219
      %s221 = smul.u32 8, %s16
      %s222 = smul.u32 8, %s16
      %p223 = scmp.lt.s32.totalorder %s222, 31
      %s224 = scalar_select %p223, %s222, 31
      %s225 = smul.addr %s224, 8
      %s226 = scalar_lea.vmem %s5, %s225
      %s227 = smul.u32 8, %s16
      %v228 = vld [vmem:[%s220] sm:$0xff]
      %v229 = vld [vmem:[%s220 + $0x8] sm:$0xff]
      %v230 = vld [vmem:[%s220 + $0x10] sm:$0xff]
      %v231 = vld [vmem:[%s220 + $0x18] sm:$0xff]
      %v232 = vld [vmem:[%s220 + $0x20] sm:$0xff]
      %v233 = vld [vmem:[%s220 + $0x28] sm:$0xff]
      %v234 = vld [vmem:[%s220 + $0x30] sm:$0xff]
      %v235 = vld [vmem:[%s220 + $0x38] sm:$0xff]
      %v236 = vld [vmem:[%s1] sm:$0xff]
      %v237 = vld [vmem:[%s1 + $0x8] sm:$0xff]
      %v238 = vld [vmem:[%s2] sm:$0x1]
      %v240 = vlaneseq
      %v241 = vshrl.u32 %v240, 7
      %v242 = vsub.s32 0, %v241
      %v243 = vrot.slane %v238, %v242
      %vm245 = vcmask 130048
      %v247 = vsel %vm245, %v228, 0
      %v250 = vsel %vm245, %v229, 0
      %v253 = vsel %vm245, %v230, 0
      %v256 = vsel %vm245, %v231, 0
      %v259 = vsel %vm245, %v232, 0
      %v262 = vsel %vm245, %v233, 0
      %v265 = vsel %vm245, %v234, 0
      %v268 = vsel %vm245, %v235, 0
      %270 = vmatprep.subr.mxu0 0.0
      %271 = vmatpush1.msra.mxu0 %v236
      %272 = vmatprep.subr.mxu0 0.0
      %273 = vmatpush1.msra.mxu0 %v237
      %274 = vmatprep.subr.mxu0 0.0
      %275 = vmatpush1.msra.mxu0 0.0
      %276 = vmatprep.subr.mxu0 0.0
      %277 = vmatpush1.msra.mxu0 0.0
      %278 = vmatprep.subr.mxu0 0.0
      %279 = vmatpush1.msra.mxu0 0.0
      %280 = vmatprep.subr.mxu0 0.0
      %281 = vmatpush1.msra.mxu0 0.0
      %282 = vmatprep.subr.mxu0 0.0
      %283 = vmatpush1.msra.mxu0 0.0
      %284 = vmatprep.subr.mxu0 0.0
      %285 = vmatpush1.msra.mxu0 0.0
      %286 = vmatprep.subr.mxu0 0.0
      %287 = vmatpush1.msra.mxu0 0.0
      %288 = vmatprep.subr.mxu0 0.0
      %289 = vmatpush1.msra.mxu0 0.0
      %290 = vmatprep.subr.mxu0 0.0
      %291 = vmatpush1.msra.mxu0 0.0
      %292 = vmatprep.subr.mxu0 0.0
      %293 = vmatpush1.msra.mxu0 0.0
      %294 = vmatprep.subr.mxu0 0.0
      %295 = vmatpush1.msra.mxu0 0.0
      %296 = vmatprep.subr.mxu0 0.0
      %297 = vmatpush1.msra.mxu0 0.0
      %298 = vmatprep.subr.mxu0 0.0
      %299 = vmatpush1.msra.mxu0 0.0
      %300 = vmatprep.subr.mxu0 0.0
      %301 = vmatpush1.msra.mxu0 0.0
      %302 = vmatprep.subr.mxu0 0.0
      %303 = vmatpush1.msra.mxu0 0.0
      %304 = vmatprep.subr.mxu0 0.0
      %305 = vmatpush1.msra.mxu0 0.0
      %306 = vmatprep.subr.mxu0 0.0
      %307 = vmatpush1.msra.mxu0 0.0
      %308 = vmatprep.subr.mxu0 0.0
      %309 = vmatpush1.msra.mxu0 0.0
      %310 = vmatprep.subr.mxu0 0.0
      %311 = vmatpush1.msra.mxu0 0.0
      %312 = vmatprep.subr.mxu0 0.0
      %313 = vmatpush1.msra.mxu0 0.0
      %314 = vmatprep.subr.mxu0 0.0
      %315 = vmatpush1.msra.mxu0 0.0
      %316 = vmatprep.subr.mxu0 0.0
      %317 = vmatpush1.msra.mxu0 0.0
      %318 = vmatprep.subr.mxu0 0.0
      %319 = vmatpush1.msra.mxu0 0.0
      %320 = vmatprep.subr.mxu0 0.0
      %321 = vmatpush1.msra.mxu0 0.0
      %322 = vmatprep.subr.mxu0 0.0
      %323 = vmatpush1.msra.mxu0 0.0
      %324 = vmatprep.subr.mxu0 0.0
      %325 = vmatpush1.msra.mxu0 0.0
      %326 = vmatprep.subr.mxu0 0.0
      %327 = vmatpush1.msra.mxu0 0.0
      %328 = vmatprep.subr.mxu0 0.0
      %329 = vmatpush1.msra.mxu0 0.0
      %330 = vmatprep.subr.mxu0 0.0
      %331 = vmatpush1.msra.mxu0 0.0
      %332 = vmatprep.subr.mxu0 0.0
      %333 = vmatpush1.msra.mxu0 0.0
      %334 = vmatprep.mubr.f32.mxu0 0.0
      %335 = vmatmul.mubr.f32.gmra.mrb[0].mxu0 %v247
      %v336 = vpop.f32.mrb[0].mxu0
      %v337 = vadd.f32 %v243, %v336
      %v338 = vpop.f32.mrb[0].mxu0
      %339 = vmatprep.mubr.f32.mxu0 0.0
      %340 = vmatmul.mubr.f32.gmra.mrb[0].mxu0 %v250
      %v341 = vpop.f32.mrb[0].mxu0
      %v342 = vadd.f32 %v243, %v341
      %v343 = vpop.f32.mrb[0].mxu0
      %344 = vmatprep.mubr.f32.mxu0 0.0
      %345 = vmatmul.mubr.f32.gmra.mrb[0].mxu0 %v253
      %v346 = vpop.f32.mrb[0].mxu0
      %v347 = vadd.f32 %v243, %v346
      %v348 = vpop.f32.mrb[0].mxu0
      %349 = vmatprep.mubr.f32.mxu0 0.0
      %350 = vmatmul.mubr.f32.gmra.mrb[0].mxu0 %v256
      %v351 = vpop.f32.mrb[0].mxu0
      %v352 = vadd.f32 %v243, %v351
      %v353 = vpop.f32.mrb[0].mxu0
      %354 = vmatprep.mubr.f32.mxu0 0.0
      %355 = vmatmul.mubr.f32.gmra.mrb[0].mxu0 %v259
      %v356 = vpop.f32.mrb[0].mxu0
      %v357 = vadd.f32 %v243, %v356
      %v358 = vpop.f32.mrb[0].mxu0
      %359 = vmatprep.mubr.f32.mxu0 0.0
      %360 = vmatmul.mubr.f32.gmra.mrb[0].mxu0 %v262
      %v361 = vpop.f32.mrb[0].mxu0
      %v362 = vadd.f32 %v243, %v361
      %v363 = vpop.f32.mrb[0].mxu0
      %364 = vmatprep.mubr.f32.mxu0 0.0
      %365 = vmatmul.mubr.f32.gmra.mrb[0].mxu0 %v265
      %v366 = vpop.f32.mrb[0].mxu0
      %v367 = vadd.f32 %v243, %v366
      %v368 = vpop.f32.mrb[0].mxu0
      %369 = vmatprep.mubr.f32.mxu0 0.0
      %370 = vmatmul.mubr.f32.gmra.mrb[0].mxu0 %v268
      %v371 = vpop.f32.mrb[0].mxu0
      %v372 = vadd.f32 %v243, %v371
      %v373 = vpop.f32.mrb[0].mxu0
      %374 = vdwg.mxu0
      %vm375 = vcmp.gt.f32.partialorder %v337, 0.0
      %vm376 = vcmp.gt.f32.partialorder %v342, 0.0
      %vm377 = vcmp.gt.f32.partialorder %v347, 0.0
      %vm378 = vcmp.gt.f32.partialorder %v352, 0.0
      %vm379 = vcmp.gt.f32.partialorder %v357, 0.0
      %vm380 = vcmp.gt.f32.partialorder %v362, 0.0
      %vm381 = vcmp.gt.f32.partialorder %v367, 0.0
      %vm382 = vcmp.gt.f32.partialorder %v372, 0.0
      %v383 = vmul.f32 %v337, 0.01
      %v384 = vmul.f32 %v342, 0.01
      %v385 = vmul.f32 %v347, 0.01
      %v386 = vmul.f32 %v352, 0.01
      %v387 = vmul.f32 %v357, 0.01
      %v388 = vmul.f32 %v362, 0.01
      %v389 = vmul.f32 %v367, 0.01
      %v390 = vmul.f32 %v372, 0.01
      %v391 = vsel %vm375, %v337, %v383
      %v392 = vsel %vm376, %v342, %v384
      %v393 = vsel %vm377, %v347, %v385
      %v394 = vsel %vm378, %v352, %v386
      %v395 = vsel %vm379, %v357, %v387
      %v396 = vsel %vm380, %v362, %v388
      %v397 = vsel %vm381, %v367, %v389
      %v398 = vsel %vm382, %v372, %v390
      %v399 = vld [vmem:[%s3] sm:$0xff]
      %v400 = vld [vmem:[%s3 + $0x8] sm:$0xff]
      %v401 = vld [vmem:[%s3 + $0x10] sm:$0xff]
      %v402 = vld [vmem:[%s3 + $0x18] sm:$0xff]
      %v403 = vld [vmem:[%s4] sm:$0x1]
      %v405 = vlaneseq
      %v406 = vshrl.u32 %v405, 7
      %v407 = vsub.s32 0, %v406
      %v408 = vrot.slane %v403, %v407
      %vm410 = vcmask 261120
      %v412 = vsel %vm410, %v391, 0
      %v415 = vsel %vm410, %v392, 0
      %v418 = vsel %vm410, %v393, 0
      %v421 = vsel %vm410, %v394, 0
      %v424 = vsel %vm410, %v395, 0
      %v427 = vsel %vm410, %v396, 0
      %v430 = vsel %vm410, %v397, 0
      %v433 = vsel %vm410, %v398, 0
      %435 = vmatprep.subr.mxu0 0.0
      %436 = vmatpush1.msra.mxu0 %v399
      %437 = vmatprep.subr.mxu0 0.0
      %438 = vmatpush1.msra.mxu0 %v400
      %439 = vmatprep.subr.mxu0 0.0
      %440 = vmatpush1.msra.mxu0 %v401
      %441 = vmatprep.subr.mxu0 0.0
      %442 = vmatpush1.msra.mxu0 %v402
      %443 = vmatprep.subr.mxu0 0.0
      %444 = vmatpush1.msra.mxu0 0.0
      %445 = vmatprep.subr.mxu0 0.0
      %446 = vmatpush1.msra.mxu0 0.0
      %447 = vmatprep.subr.mxu0 0.0
      %448 = vmatpush1.msra.mxu0 0.0
      %449 = vmatprep.subr.mxu0 0.0
      %450 = vmatpush1.msra.mxu0 0.0
      %451 = vmatprep.subr.mxu0 0.0
      %452 = vmatpush1.msra.mxu0 0.0
      %453 = vmatprep.subr.mxu0 0.0
      %454 = vmatpush1.msra.mxu0 0.0
      %455 = vmatprep.subr.mxu0 0.0
      %456 = vmatpush1.msra.mxu0 0.0
      %457 = vmatprep.subr.mxu0 0.0
      %458 = vmatpush1.msra.mxu0 0.0
      %459 = vmatprep.subr.mxu0 0.0
      %460 = vmatpush1.msra.mxu0 0.0
      %461 = vmatprep.subr.mxu0 0.0
      %462 = vmatpush1.msra.mxu0 0.0
      %463 = vmatprep.subr.mxu0 0.0
      %464 = vmatpush1.msra.mxu0 0.0
      %465 = vmatprep.subr.mxu0 0.0
      %466 = vmatpush1.msra.mxu0 0.0
      %467 = vmatprep.subr.mxu0 0.0
      %468 = vmatpush1.msra.mxu0 0.0
      %469 = vmatprep.subr.mxu0 0.0
      %470 = vmatpush1.msra.mxu0 0.0
      %471 = vmatprep.subr.mxu0 0.0
      %472 = vmatpush1.msra.mxu0 0.0
      %473 = vmatprep.subr.mxu0 0.0
      %474 = vmatpush1.msra.mxu0 0.0
      %475 = vmatprep.subr.mxu0 0.0
      %476 = vmatpush1.msra.mxu0 0.0
      %477 = vmatprep.subr.mxu0 0.0
      %478 = vmatpush1.msra.mxu0 0.0
      %479 = vmatprep.subr.mxu0 0.0
      %480 = vmatpush1.msra.mxu0 0.0
      %481 = vmatprep.subr.mxu0 0.0
      %482 = vmatpush1.msra.mxu0 0.0
      %483 = vmatprep.subr.mxu0 0.0
      %484 = vmatpush1.msra.mxu0 0.0
      %485 = vmatprep.subr.mxu0 0.0
      %486 = vmatpush1.msra.mxu0 0.0
      %487 = vmatprep.subr.mxu0 0.0
      %488 = vmatpush1.msra.mxu0 0.0
      %489 = vmatprep.subr.mxu0 0.0
      %490 = vmatpush1.msra.mxu0 0.0
      %491 = vmatprep.subr.mxu0 0.0
      %492 = vmatpush1.msra.mxu0 0.0
      %493 = vmatprep.subr.mxu0 0.0
      %494 = vmatpush1.msra.mxu0 0.0
      %495 = vmatprep.subr.mxu0 0.0
      %496 = vmatpush1.msra.mxu0 0.0
      %497 = vmatprep.subr.mxu0 0.0
      %498 = vmatpush1.msra.mxu0 0.0
      %499 = vmatprep.mubr.f32.mxu0 0.0
      %500 = vmatmul.mubr.f32.gmra.mrb[0].mxu0 %v412
      %v501 = vpop.f32.mrb[0].mxu0
      %v502 = vadd.f32 %v408, %v501
      %v503 = vpop.f32.mrb[0].mxu0
      %504 = vmatprep.mubr.f32.mxu0 0.0
      %505 = vmatmul.mubr.f32.gmra.mrb[0].mxu0 %v415
      %v506 = vpop.f32.mrb[0].mxu0
      %v507 = vadd.f32 %v408, %v506
      %v508 = vpop.f32.mrb[0].mxu0
      %509 = vmatprep.mubr.f32.mxu0 0.0
      %510 = vmatmul.mubr.f32.gmra.mrb[0].mxu0 %v418
      %v511 = vpop.f32.mrb[0].mxu0
      %v512 = vadd.f32 %v408, %v511
      %v513 = vpop.f32.mrb[0].mxu0
      %514 = vmatprep.mubr.f32.mxu0 0.0
      %515 = vmatmul.mubr.f32.gmra.mrb[0].mxu0 %v421
      %v516 = vpop.f32.mrb[0].mxu0
      %v517 = vadd.f32 %v408, %v516
      %v518 = vpop.f32.mrb[0].mxu0
      %519 = vmatprep.mubr.f32.mxu0 0.0
      %520 = vmatmul.mubr.f32.gmra.mrb[0].mxu0 %v424
      %v521 = vpop.f32.mrb[0].mxu0
      %v522 = vadd.f32 %v408, %v521
      %v523 = vpop.f32.mrb[0].mxu0
      %524 = vmatprep.mubr.f32.mxu0 0.0
      %525 = vmatmul.mubr.f32.gmra.mrb[0].mxu0 %v427
      %v526 = vpop.f32.mrb[0].mxu0
      %v527 = vadd.f32 %v408, %v526
      %v528 = vpop.f32.mrb[0].mxu0
      %529 = vmatprep.mubr.f32.mxu0 0.0
      %530 = vmatmul.mubr.f32.gmra.mrb[0].mxu0 %v430
      %v531 = vpop.f32.mrb[0].mxu0
      %v532 = vadd.f32 %v408, %v531
      %v533 = vpop.f32.mrb[0].mxu0
      %534 = vmatprep.mubr.f32.mxu0 0.0
      %535 = vmatmul.mubr.f32.gmra.mrb[0].mxu0 %v433
      %v536 = vpop.f32.mrb[0].mxu0
      %v537 = vadd.f32 %v408, %v536
      %v538 = vpop.f32.mrb[0].mxu0
      %539 = vdwg.mxu0
      %vm540 = vcmp.gt.f32.partialorder %v502, 0.0
      %vm541 = vcmp.gt.f32.partialorder %v507, 0.0
      %vm542 = vcmp.gt.f32.partialorder %v512, 0.0
      %vm543 = vcmp.gt.f32.partialorder %v517, 0.0
      %vm544 = vcmp.gt.f32.partialorder %v522, 0.0
      %vm545 = vcmp.gt.f32.partialorder %v527, 0.0
      %vm546 = vcmp.gt.f32.partialorder %v532, 0.0
      %vm547 = vcmp.gt.f32.partialorder %v537, 0.0
      %v548 = vmul.f32 %v502, 0.01
      %v549 = vmul.f32 %v507, 0.01
      %v550 = vmul.f32 %v512, 0.01
      %v551 = vmul.f32 %v517, 0.01
      %v552 = vmul.f32 %v522, 0.01
      %v553 = vmul.f32 %v527, 0.01
      %v554 = vmul.f32 %v532, 0.01
      %v555 = vmul.f32 %v537, 0.01
      %v556 = vsel %vm540, %v502, %v548
      %v557 = vsel %vm541, %v507, %v549
      %v558 = vsel %vm542, %v512, %v550
      %v559 = vsel %vm543, %v517, %v551
      %v560 = vsel %vm544, %v522, %v552
      %v561 = vsel %vm545, %v527, %v553
      %v562 = vsel %vm546, %v532, %v554
      %v563 = vsel %vm547, %v537, %v555
      %564 = vst.msk [vmem:[%s226] sm:$0xff] %vm245, %v556
      %565 = vst.msk [vmem:[%s226 + $0x8] sm:$0xff] %vm245, %v557
      %566 = vst.msk [vmem:[%s226 + $0x10] sm:$0xff] %vm245, %v558
      %567 = vst.msk [vmem:[%s226 + $0x18] sm:$0xff] %vm245, %v559
      %568 = vst.msk [vmem:[%s226 + $0x20] sm:$0xff] %vm245, %v560
      %569 = vst.msk [vmem:[%s226 + $0x28] sm:$0xff] %vm245, %v561
      %570 = vst.msk [vmem:[%s226 + $0x30] sm:$0xff] %vm245, %v562
      %571 = vst.msk [vmem:[%s226 + $0x38] sm:$0xff] %vm245, %v563
      %s572 = smul.u32 8, %s16
      %p573 = scmp.lt.s32.totalorder %s572, 31
      %s574 = scalar_select %p573, %s572, 31
      %s575 = smul.addr %s574, 8
      %s576 = scalar_lea.vmem %s5, %s575
      // Predicated region
      $region41: #{forward.9} parent=39 // pred_check
        %p577 = pneg %p144
      $region42: #{forward.9} parent=39 // pred_check_branch
        %579 = sbr.rel (%p577) target = $region44
      $region43: #{forward.9} parent=39 // pred_region
        %s580 = smul.u32 8, %s16
      $region44: #{forward.9} parent=39 // pred_fallthru
        _
    $region40: #{forward.9} parent=5 // pred_fallthru
      _
    %p581 = scmp.le.s32.totalorder 2, %s11
    // Predicated region
    $region45: #{forward.9} parent=5 // pred_check
      %p582 = pneg %p581
    $region46: #{forward.9} parent=5 // pred_check_branch
      %584 = sbr.rel (%p582) target = $region48
    $region47: #{forward.9} parent=5 // pred_region
      %s585 = ssub.s32 %s11, 2
      // Predicated region
      $region49: #{forward.9} parent=47 // pred_check
        %p586 = pneg %p150
      $region50: #{forward.9} parent=47 // pred_check_branch
        %588 = sbr.rel (%p586) target = $region52
      $region51: #{forward.9} parent=47 // pred_region
        %s589 = smul.u32 8, %s17
        %p590 = scmp.lt.s32.totalorder %s589, 31
        %s591 = scalar_select %p590, %s589, 31
        %s592 = smul.addr %s591, 8
        %s593 = scalar_lea.vmem %s5, %s592
      $region52: #{forward.9} parent=47 // pred_fallthru
        _
    $region48: #{forward.9} parent=5 // pred_fallthru
      _
  $region6: #{forward.9} parent=0 // loop_footer
    %s15 = sadd.s32 1, %s11
  $region7: #{forward.9} parent=0 // loop_footer_branch
    %10 = sbr.rel target = $region3
  $region8: #{forward.9} parent=0 // loop_exit
    _

// kernel: forward.8
$region0: #{forward.8}
  #allocation0 [shape = 'u32[]', space=smem, size = 0x4, offset = 0x4, fixed_abs, tag = 'smem constant byte address 0x4 - core index']
  #allocation1 [shape = 'u32[144,128]{1,0:T(1,128)}', space=vmem, size = 0x12000, scoped, tag = 'internal scratch']
  %s0 = inlined_call_operand.vmem [shape: s8[256,256], index: 0, kind: input, shape index: {}]
  %s1 = inlined_call_operand.vmem [shape: bf16[2,256,16], index: 1, kind: input, shape index: {}]
  %s2 = inlined_call_operand.vmem [shape: f32[256,2], index: 2, kind: input, shape index: {}]
  %s3 = inlined_call_operand.vmem [shape: f32[2,256], index: 3, kind: input, shape index: {}]
  %s4 = inlined_call_operand.vmem [shape: f32[1,16], index: 4, kind: input, shape index: {}]
  %s5 = inlined_call_operand.vmem [shape: f32[256,16], index: 5, kind: output, shape index: {}]
  %s6 = sld [smem:[#allocation0]]
  $region53: #{forward.8} parent=0
    _
  %s8 = ssub.s32 1, %s6
  %s9 = scalar_select 0, %s8, %s6
  loop: start=0, step=1, limit=6
  $region2: #{forward.8} parent=0 // loop_pre_header
    _
  $region3: #{forward.8} parent=0 // loop_header
    %s11 = sphi 0, %s15
    %p12 = scmp.ge.s32.totalorder %s11, 6
    %s21 = sphi 0, %s23
    %s24 = sphi 0, %s21
    %s25 = sphi 0, %s24
    %s41 = sphi 0, %s25
    %s45 = sphi 0, %s45
    %s47 = sphi 0, %s45
    %s48 = sphi 0, %s47
    %s62 = sphi 0, %s48
    %s68 = sphi 0, %s70
    %s71 = sphi 0, %s68
    %s72 = sphi 0, %s71
    %s88 = sphi 0, %s72
    %s92 = sphi 0, %s92
    %s94 = sphi 0, %s92
    %s95 = sphi 0, %s94
    %s109 = sphi 0, %s95
    %s113 = sphi 0, %s113
    %s115 = sphi 0, %s113
    %s116 = sphi 0, %s115
    %s130 = sphi 0, %s116
    %s136 = sphi 0, %s138
    %s139 = sphi 0, %s136
    %s140 = sphi 0, %s139
    %s156 = sphi 0, %s140
  $region4: #{forward.8} parent=0 // loop_header_branch
    %14 = sbr.rel (%p12) target = $region8
  $region5: #{forward.8} parent=0 // loop_body
    %s16 = ssub.s32 %s11, 1
    %s17 = ssub.s32 %s11, 2
    %s18 = sadd.s32 %s11, 1
    %s19 = ssub.s32 %s11, %s18
    %p20 = scmp.eq.s32.totalorder %s19, 0
    %s22 = sadd.s32 %s21, 1
    %s23 = scalar_select %p20, %s21, %s22
    %p26 = pneg %p20
    %p27 = scmp.eq.s32.totalorder %s11, 3
    %p28 = por %p26, %p27
    %p29 = scmp.ne.s32.totalorder %s21, %s24
    %p30 = scmp.eq.s32.totalorder %s11, 0
    %p31 = por %p29, %p30
    %p32 = scmp.ne.s32.totalorder %s21, %s24
    %p33 = scmp.eq.s32.totalorder %s16, 3
    %p34 = por %p32, %p33
    %p35 = scmp.ne.s32.totalorder %s24, %s25
    %p36 = scmp.eq.s32.totalorder %s16, 0
    %p37 = por %p35, %p36
    %p38 = scmp.ne.s32.totalorder %s24, %s25
    %p39 = scmp.eq.s32.totalorder %s17, 3
    %p40 = por %p38, %p39
    %p42 = scmp.ne.s32.totalorder %s25, %s41
    %p43 = scmp.eq.s32.totalorder %s17, 0
    %p44 = por %p42, %p43
    %s46 = sadd.s32 %s45, 1
    %p49 = scmp.eq.s32.totalorder %s11, 3
    %p50 = scmp.ne.s32.totalorder %s45, %s47
    %p51 = scmp.eq.s32.totalorder %s11, 0
    %p52 = por %p50, %p51
    %p53 = scmp.ne.s32.totalorder %s45, %s47
    %p54 = scmp.eq.s32.totalorder %s16, 3
    %p55 = por %p53, %p54
    %p56 = scmp.ne.s32.totalorder %s47, %s48
    %p57 = scmp.eq.s32.totalorder %s16, 0
    %p58 = por %p56, %p57
    %p59 = scmp.ne.s32.totalorder %s47, %s48
    %p60 = scmp.eq.s32.totalorder %s17, 3
    %p61 = por %p59, %p60
    %p63 = scmp.ne.s32.totalorder %s48, %s62
    %p64 = scmp.eq.s32.totalorder %s17, 0
    %p65 = por %p63, %p64
    %s66 = ssub.s32 %s11, %s18
    %p67 = scmp.eq.s32.totalorder %s66, 0
    %s69 = sadd.s32 %s68, 1
    %s70 = scalar_select %p67, %s68, %s69
    %p73 = pneg %p67
    %p74 = scmp.eq.s32.totalorder %s11, 3
    %p75 = por %p73, %p74
    %p76 = scmp.ne.s32.totalorder %s68, %s71
    %p77 = scmp.eq.s32.totalorder %s11, 0
    %p78 = por %p76, %p77
    %p79 = scmp.ne.s32.totalorder %s68, %s71
    %p80 = scmp.eq.s32.totalorder %s16, 3
    %p81 = por %p79, %p80
    %p82 = scmp.ne.s32.totalorder %s71, %s72
    %p83 = scmp.eq.s32.totalorder %s16, 0
    %p84 = por %p82, %p83
    %p85 = scmp.ne.s32.totalorder %s71, %s72
    %p86 = scmp.eq.s32.totalorder %s17, 3
    %p87 = por %p85, %p86
    %p89 = scmp.ne.s32.totalorder %s72, %s88
    %p90 = scmp.eq.s32.totalorder %s17, 0
    %p91 = por %p89, %p90
    %s93 = sadd.s32 %s92, 1
    %p96 = scmp.eq.s32.totalorder %s11, 3
    %p97 = scmp.ne.s32.totalorder %s92, %s94
    %p98 = scmp.eq.s32.totalorder %s11, 0
    %p99 = por %p97, %p98
    %p100 = scmp.ne.s32.totalorder %s92, %s94
    %p101 = scmp.eq.s32.totalorder %s16, 3
    %p102 = por %p100, %p101
    %p103 = scmp.ne.s32.totalorder %s94, %s95
    %p104 = scmp.eq.s32.totalorder %s16, 0
    %p105 = por %p103, %p104
    %p106 = scmp.ne.s32.totalorder %s94, %s95
    %p107 = scmp.eq.s32.totalorder %s17, 3
    %p108 = por %p106, %p107
    %p110 = scmp.ne.s32.totalorder %s95, %s109
    %p111 = scmp.eq.s32.totalorder %s17, 0
    %p112 = por %p110, %p111
    %s114 = sadd.s32 %s113, 1
    %p117 = scmp.eq.s32.totalorder %s11, 3
    %p118 = scmp.ne.s32.totalorder %s113, %s115
    %p119 = scmp.eq.s32.totalorder %s11, 0
    %p120 = por %p118, %p119
    %p121 = scmp.ne.s32.totalorder %s113, %s115
    %p122 = scmp.eq.s32.totalorder %s16, 3
    %p123 = por %p121, %p122
    %p124 = scmp.ne.s32.totalorder %s115, %s116
    %p125 = scmp.eq.s32.totalorder %s16, 0
    %p126 = por %p124, %p125
    %p127 = scmp.ne.s32.totalorder %s115, %s116
    %p128 = scmp.eq.s32.totalorder %s17, 3
    %p129 = por %p127, %p128
    %p131 = scmp.ne.s32.totalorder %s116, %s130
    %p132 = scmp.eq.s32.totalorder %s17, 0
    %p133 = por %p131, %p132
    %s134 = ssub.s32 %s11, %s18
    %p135 = scmp.eq.s32.totalorder %s134, 0
    %s137 = sadd.s32 %s136, 1
    %s138 = scalar_select %p135, %s136, %s137
    %p141 = pneg %p135
    %p142 = scmp.eq.s32.totalorder %s11, 3
    %p143 = por %p141, %p142
    %p144 = scmp.ne.s32.totalorder %s136, %s139
    %p145 = scmp.eq.s32.totalorder %s11, 0
    %p146 = por %p144, %p145
    %p147 = scmp.ne.s32.totalorder %s136, %s139
    %p148 = scmp.eq.s32.totalorder %s16, 3
    %p149 = por %p147, %p148
    %p150 = scmp.ne.s32.totalorder %s139, %s140
    %p151 = scmp.eq.s32.totalorder %s16, 0
    %p152 = por %p150, %p151
    %p153 = scmp.ne.s32.totalorder %s139, %s140
    %p154 = scmp.eq.s32.totalorder %s17, 3
    %p155 = por %p153, %p154
    %p157 = scmp.ne.s32.totalorder %s140, %s156
    %p158 = scmp.eq.s32.totalorder %s17, 0
    %p159 = por %p157, %p158
    %p160 = scmp.le.s32.totalorder 1, %s11
    %p161 = scmp.lt.s32.totalorder %s11, 5
    %p162 = pnand %p160, %p161
    %p163 = pneg %p162
    // Predicated region
    $region9: #{forward.8} parent=5 // pred_check
      _
    $region10: #{forward.8} parent=5 // pred_check_branch
      %165 = sbr.rel (%p162) target = $region12
    $region11: #{forward.8} parent=5 // pred_region
      %s166 = ssub.s32 %s11, 1
      // Predicated region
      $region13: #{forward.8} parent=11 // pred_check
        %p167 = pneg %p58
      $region14: #{forward.8} parent=11 // pred_check_branch
        %169 = sbr.rel (%p167) target = $region16
      $region15: #{forward.8} parent=11 // pred_region
        _
      $region16: #{forward.8} parent=11 // pred_fallthru
        _
      // Predicated region
      $region17: #{forward.8} parent=11 // pred_check
        %p170 = pneg %p105
      $region18: #{forward.8} parent=11 // pred_check_branch
        %172 = sbr.rel (%p170) target = $region20
      $region19: #{forward.8} parent=11 // pred_region
        _
      $region20: #{forward.8} parent=11 // pred_fallthru
        _
      // Predicated region
      $region21: #{forward.8} parent=11 // pred_check
        %p173 = pneg %p126
      $region22: #{forward.8} parent=11 // pred_check_branch
        %175 = sbr.rel (%p173) target = $region24
      $region23: #{forward.8} parent=11 // pred_region
        _
      $region24: #{forward.8} parent=11 // pred_fallthru
        _
    $region12: #{forward.8} parent=5 // pred_fallthru
      _
    %p176 = scmp.lt.s32.totalorder %s11, 4
    // Predicated region
    $region25: #{forward.8} parent=5 // pred_check
      %p177 = pneg %p176
    $region26: #{forward.8} parent=5 // pred_check_branch
      %179 = sbr.rel (%p177) target = $region28
    $region27: #{forward.8} parent=5 // pred_region
      // Predicated region
      $region29: #{forward.8} parent=27 // pred_check
        %p180 = pneg %p31
      $region30: #{forward.8} parent=27 // pred_check_branch
        %182 = sbr.rel (%p180) target = $region32
      $region31: #{forward.8} parent=27 // pred_region
        %s183 = smul.u32 2, %s11
        %p184 = scmp.lt.s32.totalorder %s183, 7
        %s185 = scalar_select %p184, %s183, 7
        %s186 = smul.addr %s185, 2
        %s187 = smul.addr %s186, 8
        %s188 = scalar_lea.vmem %s0, %s187
        %s189 = smul.u32 2, %s11
      $region32: #{forward.8} parent=27 // pred_fallthru
        _
      // Predicated region
      $region33: #{forward.8} parent=27 // pred_check
        %p190 = pneg %p78
      $region34: #{forward.8} parent=27 // pred_check_branch
        %192 = sbr.rel (%p190) target = $region36
      $region35: #{forward.8} parent=27 // pred_region
        %s193 = smul.u32 8, %s11
        %p194 = scmp.lt.s32.totalorder %s193, 31
        %s195 = scalar_select %p194, %s193, 31
        %s196 = smul.addr %s195, 8
        %s197 = scalar_lea.vmem %s2, %s196
        %s198 = smul.u32 8, %s11
      $region36: #{forward.8} parent=27 // pred_fallthru
        _
    $region28: #{forward.8} parent=5 // pred_fallthru
      _
    %p199 = scmp.le.s32.totalorder 1, %s11
    %p200 = scmp.lt.s32.totalorder %s11, 5
    %p201 = pnand %p199, %p200
    %p202 = pneg %p201
    // Predicated region
    $region37: #{forward.8} parent=5 // pred_check
      _
    $region38: #{forward.8} parent=5 // pred_check_branch
      %204 = sbr.rel (%p201) target = $region40
    $region39: #{forward.8} parent=5 // pred_region
      %s205 = ssub.s32 %s11, 1
      %s206 = smul.u32 2, %s16
      %p207 = scmp.lt.s32.totalorder %s206, 7
      %s208 = scalar_select %p207, %s206, 7
      %s209 = smul.addr %s208, 2
      %s210 = smul.addr %s209, 8
      %s211 = scalar_lea.vmem %s0, %s210
      %p212 = pneg %p37
      %p213 = pneg %p34
      %p214 = pneg %p58
      %p215 = pneg %p55
      %s216 = smul.u32 8, %s16
      %p217 = scmp.lt.s32.totalorder %s216, 31
      %s218 = scalar_select %p217, %s216, 31
      %s219 = smul.addr %s218, 8
      %s220 = scalar_lea.vmem %s2, %s219
      %p221 = pneg %p84
      %p222 = pneg %p81
      %p223 = pneg %p105
      %p224 = pneg %p102
      %p225 = pneg %p126
      %p226 = pneg %p123
      %p227 = pneg %p152
      %p228 = pneg %p149
      %s229 = smul.u32 8, %s16
      %p230 = scmp.lt.s32.totalorder %s229, 31
      %s231 = scalar_select %p230, %s229, 31
      %s232 = smul.addr %s231, 8
      %s233 = scalar_lea.vmem %s5, %s232
      %s234 = smul.u32 2, %s16
      %p235 = scmp.lt.s32.totalorder %s234, 7
      %s236 = scalar_select %p235, %s234, 7
      %s237 = smul.addr %s236, 2
      %s238 = smul.addr %s237, 8
      %s239 = scalar_lea.vmem %s0, %s238
      %s240 = smul.u32 2, %s16
      %s241 = smul.u32 8, %s16
      %p242 = scmp.lt.s32.totalorder %s241, 31
      %s243 = scalar_select %p242, %s241, 31
      %s244 = smul.addr %s243, 8
      %s245 = scalar_lea.vmem %s2, %s244
      %s246 = smul.u32 8, %s16
      %s247 = smul.u32 8, %s16
      %p248 = scmp.lt.s32.totalorder %s247, 31
      %s249 = scalar_select %p248, %s247, 31
      %s250 = smul.addr %s249, 8
      %s251 = scalar_lea.vmem %s5, %s250
      %s252 = smul.u32 8, %s16
      %v254 = vld [vmem:[%s239] sm:$0xff]
      %v255 = vld [vmem:[%s239 + $0x8] sm:$0xff]
      %v256 = vld [vmem:[%s239 + $0x10] sm:$0xff]
      %v257 = vld [vmem:[%s239 + $0x18] sm:$0xff]
      %v258 = vunpack.c.0.s8 %v254
      %v259 = vunpack.c.0.s8 %v255
      %v260 = vunpack.c.1.s8 %v254
      %v261 = vunpack.c.1.s8 %v255
      %v262 = vunpack.c.2.s8 %v254
      %v263 = vunpack.c.2.s8 %v255
      %v264 = vunpack.c.3.s8 %v254
      %v265 = vunpack.c.3.s8 %v255
      %v266 = vunpack.c.0.s8 %v256
      %v267 = vunpack.c.0.s8 %v257
      %v268 = vunpack.c.1.s8 %v256
      %v269 = vunpack.c.1.s8 %v257
      %v270 = vunpack.c.2.s8 %v256
      %v271 = vunpack.c.2.s8 %v257
      %v272 = vunpack.c.3.s8 %v256
      %v273 = vunpack.c.3.s8 %v257
      %v274 = vcvt.s32.f32 %v258
      %v275 = vcvt.s32.f32 %v259
      %v276 = vcvt.s32.f32 %v260
      %v277 = vcvt.s32.f32 %v261
      %v278 = vcvt.s32.f32 %v262
      %v279 = vcvt.s32.f32 %v263
      %v280 = vcvt.s32.f32 %v264
      %v281 = vcvt.s32.f32 %v265
      %v282 = vcvt.s32.f32 %v266
      %v283 = vcvt.s32.f32 %v267
      %v284 = vcvt.s32.f32 %v268
      %v285 = vcvt.s32.f32 %v269
      %v286 = vcvt.s32.f32 %v270
      %v287 = vcvt.s32.f32 %v271
      %v288 = vcvt.s32.f32 %v272
      %v289 = vcvt.s32.f32 %v273
      %vm290 = vcmp.gt.f32.partialorder %v274, 0.0
      %vm291 = vcmp.gt.f32.partialorder %v275, 0.0
      %vm292 = vcmp.gt.f32.partialorder %v276, 0.0
      %vm293 = vcmp.gt.f32.partialorder %v277, 0.0
      %vm294 = vcmp.gt.f32.partialorder %v278, 0.0
      %vm295 = vcmp.gt.f32.partialorder %v279, 0.0
      %vm296 = vcmp.gt.f32.partialorder %v280, 0.0
      %vm297 = vcmp.gt.f32.partialorder %v281, 0.0
      %vm298 = vcmp.gt.f32.partialorder %v282, 0.0
      %vm299 = vcmp.gt.f32.partialorder %v283, 0.0
      %vm300 = vcmp.gt.f32.partialorder %v284, 0.0
      %vm301 = vcmp.gt.f32.partialorder %v285, 0.0
      %vm302 = vcmp.gt.f32.partialorder %v286, 0.0
      %vm303 = vcmp.gt.f32.partialorder %v287, 0.0
      %vm304 = vcmp.gt.f32.partialorder %v288, 0.0
      %vm305 = vcmp.gt.f32.partialorder %v289, 0.0
      %v306 = vld [vmem:[%s245] sm:$0xff]
      %v307 = vld [vmem:[%s245 + $0x8] sm:$0xff]
      %v308 = vld [vmem:[%s245 + $0x10] sm:$0xff]
      %v309 = vld [vmem:[%s245 + $0x18] sm:$0xff]
      %v310 = vld [vmem:[%s245 + $0x20] sm:$0xff]
      %v311 = vld [vmem:[%s245 + $0x28] sm:$0xff]
      %v312 = vld [vmem:[%s245 + $0x30] sm:$0xff]
      %v313 = vld [vmem:[%s245 + $0x38] sm:$0xff]
      %v314 = vld [vmem:[%s3] sm:$0xf]
      %v315 = vld [vmem:[%s1] sm:$0xf]
      %v316 = vld [vmem:[%s1 + $0x4] sm:$0xf]
      %v317 = vld [vmem:[%s1 + $0x8] sm:$0xf]
      %v318 = vld [vmem:[%s1 + $0xc] sm:$0xf]
      %v319 = vld [vmem:[%s1 + $0x10] sm:$0xf]
      %v320 = vld [vmem:[%s1 + $0x14] sm:$0xf]
      %v321 = vld [vmem:[%s1 + $0x18] sm:$0xf]
      %v322 = vld [vmem:[%s1 + $0x1c] sm:$0xf]
      %v323 = vld [vmem:[%s1 + $0x20] sm:$0xf]
      %v324 = vld [vmem:[%s1 + $0x24] sm:$0xf]
      %v325 = vld [vmem:[%s1 + $0x28] sm:$0xf]
      %v326 = vld [vmem:[%s1 + $0x2c] sm:$0xf]
      %v327 = vld [vmem:[%s1 + $0x30] sm:$0xf]
      %v328 = vld [vmem:[%s1 + $0x34] sm:$0xf]
      %v329 = vld [vmem:[%s1 + $0x38] sm:$0xf]
      %v330 = vld [vmem:[%s1 + $0x3c] sm:$0xf]
      %v331 = vld [vmem:[%s1 + $0x40] sm:$0xf]
      %v332 = vld [vmem:[%s1 + $0x44] sm:$0xf]
      %v333 = vld [vmem:[%s1 + $0x48] sm:$0xf]
      %v334 = vld [vmem:[%s1 + $0x4c] sm:$0xf]
      %v335 = vld [vmem:[%s1 + $0x50] sm:$0xf]
      %v336 = vld [vmem:[%s1 + $0x54] sm:$0xf]
      %v337 = vld [vmem:[%s1 + $0x58] sm:$0xf]
      %v338 = vld [vmem:[%s1 + $0x5c] sm:$0xf]
      %v339 = vld [vmem:[%s1 + $0x60] sm:$0xf]
      %v340 = vld [vmem:[%s1 + $0x64] sm:$0xf]
      %v341 = vld [vmem:[%s1 + $0x68] sm:$0xf]
      %v342 = vld [vmem:[%s1 + $0x6c] sm:$0xf]
      %v343 = vld [vmem:[%s1 + $0x70] sm:$0xf]
      %v344 = vld [vmem:[%s1 + $0x74] sm:$0xf]
      %v345 = vld [vmem:[%s1 + $0x78] sm:$0xf]
      %v346 = vld [vmem:[%s1 + $0x7c] sm:$0xf]
      %348 = vset.pattern.permute.xlu0 0
      %349 = vperm.xlu0 %348, %v306
      %v350 = vpop.permute.xlu0 %349
      %353 = vset.pattern.permute.xlu0 0
      %354 = vperm.xlu0 %353, %v307
      %v355 = vpop.permute.xlu0 %354
      %358 = vset.pattern.permute.xlu0 0
      %359 = vperm.xlu0 %358, %v308
      %v360 = vpop.permute.xlu0 %359
      %363 = vset.pattern.permute.xlu0 0
      %364 = vperm.xlu0 %363, %v309
      %v365 = vpop.permute.xlu0 %364
      %368 = vset.pattern.permute.xlu0 0
      %369 = vperm.xlu0 %368, %v310
      %v370 = vpop.permute.xlu0 %369
      %373 = vset.pattern.permute.xlu0 0
      %374 = vperm.xlu0 %373, %v311
      %v375 = vpop.permute.xlu0 %374
      %378 = vset.pattern.permute.xlu0 0
      %379 = vperm.xlu0 %378, %v312
      %v380 = vpop.permute.xlu0 %379
      %383 = vset.pattern.permute.xlu0 0
      %384 = vperm.xlu0 %383, %v313
      %v385 = vpop.permute.xlu0 %384
      %v388 = vlaneseq
      %v389 = vshrl.u32 %v388, 7
      %v390 = vsub.s32 0, %v389
      %v391 = vrot.slane %v314, %v390
      %v392 = vlaneseq
      %v393 = vshrl.u32 %v392, 7
      %v394 = vsub.s32 2, %v393
      %v395 = vrot.slane %v314, %v394
      %v398 = vlaneseq
      %v399 = vshrl.u32 %v398, 7
      %v400 = vsub.s32 0, %v399
      %v401 = vrot.slane %v391, %v400
      %v402 = vlaneseq
      %v403 = vshrl.u32 %v402, 7
      %v404 = vsub.s32 0, %v403
      %v405 = vrot.slane %v395, %v404
      %v406 = vadd.f32 %v350, %v401
      %v407 = vadd.f32 %v350, %v405
      %v408 = vadd.f32 %v355, %v401
      %v409 = vadd.f32 %v355, %v405
      %v410 = vadd.f32 %v360, %v401
      %v411 = vadd.f32 %v360, %v405
      %v412 = vadd.f32 %v365, %v401
      %v413 = vadd.f32 %v365, %v405
      %v414 = vadd.f32 %v370, %v401
      %v415 = vadd.f32 %v370, %v405
      %v416 = vadd.f32 %v375, %v401
      %v417 = vadd.f32 %v375, %v405
      %v418 = vadd.f32 %v380, %v401
      %v419 = vadd.f32 %v380, %v405
      %v420 = vadd.f32 %v385, %v401
      %v421 = vadd.f32 %v385, %v405
      %vm422 = vcmp.gt.f32.partialorder %v406, 0.0
      %vm423 = vcmp.gt.f32.partialorder %v407, 0.0
      %vm424 = vcmp.gt.f32.partialorder %v408, 0.0
      %vm425 = vcmp.gt.f32.partialorder %v409, 0.0
      %vm426 = vcmp.gt.f32.partialorder %v410, 0.0
      %vm427 = vcmp.gt.f32.partialorder %v411, 0.0
      %vm428 = vcmp.gt.f32.partialorder %v412, 0.0
      %vm429 = vcmp.gt.f32.partialorder %v413, 0.0
      %vm430 = vcmp.gt.f32.partialorder %v414, 0.0
      %vm431 = vcmp.gt.f32.partialorder %v415, 0.0
      %vm432 = vcmp.gt.f32.partialorder %v416, 0.0
      %vm433 = vcmp.gt.f32.partialorder %v417, 0.0
      %vm434 = vcmp.gt.f32.partialorder %v418, 0.0
      %vm435 = vcmp.gt.f32.partialorder %v419, 0.0
      %vm436 = vcmp.gt.f32.partialorder %v420, 0.0
      %vm437 = vcmp.gt.f32.partialorder %v421, 0.0
      %v438 = vmul.f32 %v406, 0.2
      %v439 = vmul.f32 %v407, 0.2
      %v440 = vmul.f32 %v408, 0.2
      %v441 = vmul.f32 %v409, 0.2
      %v442 = vmul.f32 %v410, 0.2
      %v443 = vmul.f32 %v411, 0.2
      %v444 = vmul.f32 %v412, 0.2
      %v445 = vmul.f32 %v413, 0.2
      %v446 = vmul.f32 %v414, 0.2
      %v447 = vmul.f32 %v415, 0.2
      %v448 = vmul.f32 %v416, 0.2
      %v449 = vmul.f32 %v417, 0.2
      %v450 = vmul.f32 %v418, 0.2
      %v451 = vmul.f32 %v419, 0.2
      %v452 = vmul.f32 %v420, 0.2
      %v453 = vmul.f32 %v421, 0.2
      %v454 = vsel %vm422, %v406, %v438
      %v455 = vsel %vm423, %v407, %v439
      %v456 = vsel %vm424, %v408, %v440
      %v457 = vsel %vm425, %v409, %v441
      %v458 = vsel %vm426, %v410, %v442
      %v459 = vsel %vm427, %v411, %v443
      %v460 = vsel %vm428, %v412, %v444
      %v461 = vsel %vm429, %v413, %v445
      %v462 = vsel %vm430, %v414, %v446
      %v463 = vsel %vm431, %v415, %v447
      %v464 = vsel %vm432, %v416, %v448
      %v465 = vsel %vm433, %v417, %v449
      %v466 = vsel %vm434, %v418, %v450
      %v467 = vsel %vm435, %v419, %v451
      %v468 = vsel %vm436, %v420, %v452
      %v469 = vsel %vm437, %v421, %v453
      %v470 = vsel %vm290, %v454, -9e+15
      %v471 = vsel %vm291, %v455, -9e+15
      %v472 = vsel %vm292, %v456, -9e+15
      %v473 = vsel %vm293, %v457, -9e+15
      %v474 = vsel %vm294, %v458, -9e+15
      %v475 = vsel %vm295, %v459, -9e+15
      %v476 = vsel %vm296, %v460, -9e+15
      %v477 = vsel %vm297, %v461, -9e+15
      %v478 = vsel %vm298, %v462, -9e+15
      %v479 = vsel %vm299, %v463, -9e+15
      %v480 = vsel %vm300, %v464, -9e+15
      %v481 = vsel %vm301, %v465, -9e+15
      %v482 = vsel %vm302, %v466, -9e+15
      %v483 = vsel %vm303, %v467, -9e+15
      %v484 = vsel %vm304, %v468, -9e+15
      %v485 = vsel %vm305, %v469, -9e+15
      %v486 = vmax.f32 %v470, %v471
      %487 = vmax.xlane.f32.xlu0 %v486
      %v488 = vpop.xlane.xlu0 %487
      %v489 = vmax.f32 %v472, %v473
      %490 = vmax.xlane.f32.xlu0 %v489
      %v491 = vpop.xlane.xlu0 %490
      %v492 = vmax.f32 %v474, %v475
      %493 = vmax.xlane.f32.xlu0 %v492
      %v494 = vpop.xlane.xlu0 %493
      %v495 = vmax.f32 %v476, %v477
      %496 = vmax.xlane.f32.xlu0 %v495
      %v497 = vpop.xlane.xlu0 %496
      %v498 = vmax.f32 %v478, %v479
      %499 = vmax.xlane.f32.xlu0 %v498
      %v500 = vpop.xlane.xlu0 %499
      %v501 = vmax.f32 %v480, %v481
      %502 = vmax.xlane.f32.xlu0 %v501
      %v503 = vpop.xlane.xlu0 %502
      %v504 = vmax.f32 %v482, %v483
      %505 = vmax.xlane.f32.xlu0 %v504
      %v506 = vpop.xlane.xlu0 %505
      %v507 = vmax.f32 %v484, %v485
      %508 = vmax.xlane.f32.xlu0 %v507
      %v509 = vpop.xlane.xlu0 %508
      %v510 = vsub.f32 %v470, %v488
      %v511 = vsub.f32 %v471, %v488
      %v512 = vsub.f32 %v472, %v491
      %v513 = vsub.f32 %v473, %v491
      %v514 = vsub.f32 %v474, %v494
      %v515 = vsub.f32 %v475, %v494
      %v516 = vsub.f32 %v476, %v497
      %v517 = vsub.f32 %v477, %v497
      %v518 = vsub.f32 %v478, %v500
      %v519 = vsub.f32 %v479, %v500
      %v520 = vsub.f32 %v480, %v503
      %v521 = vsub.f32 %v481, %v503
      %v522 = vsub.f32 %v482, %v506
      %v523 = vsub.f32 %v483, %v506
      %v524 = vsub.f32 %v484, %v509
      %v525 = vsub.f32 %v485, %v509
      %v526 = vmul.f32 %v510, 1.442695
      %v527 = vpow.pop %v526
      %v528 = vmul.f32 %v511, 1.442695
      %v529 = vpow.pop %v528
      %v530 = vmul.f32 %v512, 1.442695
      %v531 = vpow.pop %v530
      %v532 = vmul.f32 %v513, 1.442695
      %v533 = vpow.pop %v532
      %v534 = vmul.f32 %v514, 1.442695
      %v535 = vpow.pop %v534
      %v536 = vmul.f32 %v515, 1.442695
      %v537 = vpow.pop %v536
      %v538 = vmul.f32 %v516, 1.442695
      %v539 = vpow.pop %v538
      %v540 = vmul.f32 %v517, 1.442695
      %v541 = vpow.pop %v540
      %v542 = vmul.f32 %v518, 1.442695
      %v543 = vpow.pop %v542
      %v544 = vmul.f32 %v519, 1.442695
      %v545 = vpow.pop %v544
      %v546 = vmul.f32 %v520, 1.442695
      %v547 = vpow.pop %v546
      %v548 = vmul.f32 %v521, 1.442695
      %v549 = vpow.pop %v548
      %v550 = vmul.f32 %v522, 1.442695
      %v551 = vpow.pop %v550
      %v552 = vmul.f32 %v523, 1.442695
      %v553 = vpow.pop %v552
      %v554 = vmul.f32 %v524, 1.442695
      %v555 = vpow.pop %v554
      %v556 = vmul.f32 %v525, 1.442695
      %v557 = vpow.pop %v556
      %v558 = vadd.f32 %v527, %v529
      %559 = vadd.xlane.f32.xlu0 %v558
      %v560 = vpop.xlane.xlu0 %559
      %v561 = vadd.f32 %v531, %v533
      %562 = vadd.xlane.f32.xlu0 %v561
      %v563 = vpop.xlane.xlu0 %562
      %v564 = vadd.f32 %v535, %v537
      %565 = vadd.xlane.f32.xlu0 %v564
      %v566 = vpop.xlane.xlu0 %565
      %v567 = vadd.f32 %v539, %v541
      %568 = vadd.xlane.f32.xlu0 %v567
      %v569 = vpop.xlane.xlu0 %568
      %v570 = vadd.f32 %v543, %v545
      %571 = vadd.xlane.f32.xlu0 %v570
      %v572 = vpop.xlane.xlu0 %571
      %v573 = vadd.f32 %v547, %v549
      %574 = vadd.xlane.f32.xlu0 %v573
      %v575 = vpop.xlane.xlu0 %574
      %v576 = vadd.f32 %v551, %v553
      %577 = vadd.xlane.f32.xlu0 %v576
      %v578 = vpop.xlane.xlu0 %577
      %v579 = vadd.f32 %v555, %v557
      %580 = vadd.xlane.f32.xlu0 %v579
      %v581 = vpop.xlane.xlu0 %580
      %v582 = vrcp.pop %v560
      %v583 = vrcp.pop %v563
      %v584 = vrcp.pop %v566
      %v585 = vrcp.pop %v569
      %v586 = vrcp.pop %v572
      %v587 = vrcp.pop %v575
      %v588 = vrcp.pop %v578
      %v589 = vrcp.pop %v581
      %v590 = vmul.f32 %v527, %v582
      %v591 = vmul.f32 %v529, %v582
      %v592 = vmul.f32 %v531, %v583
      %v593 = vmul.f32 %v533, %v583
      %v594 = vmul.f32 %v535, %v584
      %v595 = vmul.f32 %v537, %v584
      %v596 = vmul.f32 %v539, %v585
      %v597 = vmul.f32 %v541, %v585
      %v598 = vmul.f32 %v543, %v586
      %v599 = vmul.f32 %v545, %v586
      %v600 = vmul.f32 %v547, %v587
      %v601 = vmul.f32 %v549, %v587
      %v602 = vmul.f32 %v551, %v588
      %v603 = vmul.f32 %v553, %v588
      %v604 = vmul.f32 %v555, %v589
      %v605 = vmul.f32 %v557, %v589
      %v606 = vpack.c.bf16 %v592, %v590
      %v607 = vpack.c.bf16 %v593, %v591
      %v608 = vpack.c.bf16 %v596, %v594
      %v609 = vpack.c.bf16 %v597, %v595
      %v610 = vpack.c.bf16 %v600, %v598
      %v611 = vpack.c.bf16 %v601, %v599
      %v612 = vpack.c.bf16 %v604, %v602
      %v613 = vpack.c.bf16 %v605, %v603
      %v646 = vunpack.c.l.b16 %v315
      %v647 = vunpack.c.l.b16 %v316
      %v648 = vunpack.c.l.b16 %v317
      %v649 = vunpack.c.l.b16 %v318
      %v650 = vunpack.c.l.b16 %v319
      %v651 = vunpack.c.l.b16 %v320
      %v652 = vunpack.c.l.b16 %v321
      %v653 = vunpack.c.l.b16 %v322
      %v654 = vunpack.c.l.b16 %v323
      %v655 = vunpack.c.l.b16 %v324
      %v656 = vunpack.c.l.b16 %v325
      %v657 = vunpack.c.l.b16 %v326
      %v658 = vunpack.c.l.b16 %v327
      %v659 = vunpack.c.l.b16 %v328
      %v660 = vunpack.c.l.b16 %v329
      %v661 = vunpack.c.l.b16 %v330
      %v662 = vunpack.c.l.b16 %v331
      %v663 = vunpack.c.l.b16 %v332
      %v664 = vunpack.c.l.b16 %v333
      %v665 = vunpack.c.l.b16 %v334
      %v666 = vunpack.c.l.b16 %v335
      %v667 = vunpack.c.l.b16 %v336
      %v668 = vunpack.c.l.b16 %v337
      %v669 = vunpack.c.l.b16 %v338
      %v670 = vunpack.c.l.b16 %v339
      %v671 = vunpack.c.l.b16 %v340
      %v672 = vunpack.c.l.b16 %v341
      %v673 = vunpack.c.l.b16 %v342
      %v674 = vunpack.c.l.b16 %v343
      %v675 = vunpack.c.l.b16 %v344
      %v676 = vunpack.c.l.b16 %v345
      %v677 = vunpack.c.l.b16 %v346
      %v678 = vpack.c.b16 %v647, %v646
      %v679 = vpack.c.b16 %v649, %v648
      %v680 = vpack.c.b16 %v651, %v650
      %v681 = vpack.c.b16 %v653, %v652
      %v682 = vpack.c.b16 %v655, %v654
      %v683 = vpack.c.b16 %v657, %v656
      %v684 = vpack.c.b16 %v659, %v658
      %v685 = vpack.c.b16 %v661, %v660
      %v686 = vpack.c.b16 %v663, %v662
      %v687 = vpack.c.b16 %v665, %v664
      %v688 = vpack.c.b16 %v667, %v666
      %v689 = vpack.c.b16 %v669, %v668
      %v690 = vpack.c.b16 %v671, %v670
      %v691 = vpack.c.b16 %v673, %v672
      %v692 = vpack.c.b16 %v675, %v674
      %v693 = vpack.c.b16 %v677, %v676
      %710 = vmatprep.subr.bf16.mxu0 0
      %711 = vmatpush1.bf16.msra.mxu0 %v678
      %712 = vmatprep.subr.bf16.mxu0 0
      %713 = vmatpush1.bf16.msra.mxu0 %v679
      %714 = vmatprep.subr.bf16.mxu0 0
      %715 = vmatpush1.bf16.msra.mxu0 %v680
      %716 = vmatprep.subr.bf16.mxu0 0
      %717 = vmatpush1.bf16.msra.mxu0 %v681
      %718 = vmatprep.subr.bf16.mxu0 0
      %719 = vmatpush1.bf16.msra.mxu0 %v682
      %720 = vmatprep.subr.bf16.mxu0 0
      %721 = vmatpush1.bf16.msra.mxu0 %v683
      %722 = vmatprep.subr.bf16.mxu0 0
      %723 = vmatpush1.bf16.msra.mxu0 %v684
      %724 = vmatprep.subr.bf16.mxu0 0
      %725 = vmatpush1.bf16.msra.mxu0 %v685
      %726 = vmatprep.subr.bf16.mxu0 0
      %727 = vmatpush1.bf16.msra.mxu0 %v686
      %728 = vmatprep.subr.bf16.mxu0 0
      %729 = vmatpush1.bf16.msra.mxu0 %v687
      %730 = vmatprep.subr.bf16.mxu0 0
      %731 = vmatpush1.bf16.msra.mxu0 %v688
      %732 = vmatprep.subr.bf16.mxu0 0
      %733 = vmatpush1.bf16.msra.mxu0 %v689
      %734 = vmatprep.subr.bf16.mxu0 0
      %735 = vmatpush1.bf16.msra.mxu0 %v690
      %736 = vmatprep.subr.bf16.mxu0 0
      %737 = vmatpush1.bf16.msra.mxu0 %v691
      %738 = vmatprep.subr.bf16.mxu0 0
      %739 = vmatpush1.bf16.msra.mxu0 %v692
      %740 = vmatprep.subr.bf16.mxu0 0
      %741 = vmatpush1.bf16.msra.mxu0 %v693
      %742 = vmatprep.mubr.bf16.mxu0 %v607
      %743 = vmatmul.mubr.bf16.gmra.mrb[0].mxu0 %v606
      %v744 = vpop.f32.mrb[0].mxu0
      %v745 = vadd.f32 0.0, %v744
      %v746 = vpop.f32.mrb[0].mxu0
      %v747 = vpop.f32.mrb[0].mxu0
      %v748 = vadd.f32 0.0, %v747
      %v749 = vpop.f32.mrb[0].mxu0
      %750 = vmatprep.mubr.bf16.mxu0 %v609
      %751 = vmatmul.mubr.bf16.gmra.mrb[0].mxu0 %v608
      %v752 = vpop.f32.mrb[0].mxu0
      %v753 = vadd.f32 0.0, %v752
      %v754 = vpop.f32.mrb[0].mxu0
      %v755 = vpop.f32.mrb[0].mxu0
      %v756 = vadd.f32 0.0, %v755
      %v757 = vpop.f32.mrb[0].mxu0
      %758 = vmatprep.mubr.bf16.mxu0 %v611
      %759 = vmatmul.mubr.bf16.gmra.mrb[0].mxu0 %v610
      %v760 = vpop.f32.mrb[0].mxu0
      %v761 = vadd.f32 0.0, %v760
      %v762 = vpop.f32.mrb[0].mxu0
      %v763 = vpop.f32.mrb[0].mxu0
      %v764 = vadd.f32 0.0, %v763
      %v765 = vpop.f32.mrb[0].mxu0
      %766 = vmatprep.mubr.bf16.mxu0 %v613
      %767 = vmatmul.mubr.bf16.gmra.mrb[0].mxu0 %v612
      %v768 = vpop.f32.mrb[0].mxu0
      %v769 = vadd.f32 0.0, %v768
      %v770 = vpop.f32.mrb[0].mxu0
      %v771 = vpop.f32.mrb[0].mxu0
      %v772 = vadd.f32 0.0, %v771
      %v773 = vpop.f32.mrb[0].mxu0
      %774 = vdwg.mxu0
      %vm775 = vcmp.gt.f32.partialorder %v745, 0.0
      %vm776 = vcmp.gt.f32.partialorder %v748, 0.0
      %vm777 = vcmp.gt.f32.partialorder %v753, 0.0
      %vm778 = vcmp.gt.f32.partialorder %v756, 0.0
      %vm779 = vcmp.gt.f32.partialorder %v761, 0.0
      %vm780 = vcmp.gt.f32.partialorder %v764, 0.0
      %vm781 = vcmp.gt.f32.partialorder %v769, 0.0
      %vm782 = vcmp.gt.f32.partialorder %v772, 0.0
      %v783 = vmul.f32 %v745, 0.2
      %v784 = vmul.f32 %v748, 0.2
      %v785 = vmul.f32 %v753, 0.2
      %v786 = vmul.f32 %v756, 0.2
      %v787 = vmul.f32 %v761, 0.2
      %v788 = vmul.f32 %v764, 0.2
      %v789 = vmul.f32 %v769, 0.2
      %v790 = vmul.f32 %v772, 0.2
      %v791 = vsel %vm775, %v745, %v783
      %v792 = vsel %vm776, %v748, %v784
      %v793 = vsel %vm777, %v753, %v785
      %v794 = vsel %vm778, %v756, %v786
      %v795 = vsel %vm779, %v761, %v787
      %v796 = vsel %vm780, %v764, %v788
      %v797 = vsel %vm781, %v769, %v789
      %v798 = vsel %vm782, %v772, %v790
      %v799 = vmul.f32 %v791, %v791
      %v800 = vmul.f32 %v792, %v792
      %v801 = vmul.f32 %v793, %v793
      %v802 = vmul.f32 %v794, %v794
      %v803 = vmul.f32 %v795, %v795
      %v804 = vmul.f32 %v796, %v796
      %v805 = vmul.f32 %v797, %v797
      %v806 = vmul.f32 %v798, %v798
      %vm807 = vcmask 130048
      %v808 = vsel %vm807, %v799, 0.0
      %809 = vadd.xlane.f32.xlu0 %v808
      %v810 = vpop.xlane.xlu0 %809
      %v811 = vsel %vm807, %v800, 0.0
      %812 = vadd.xlane.f32.xlu0 %v811
      %v813 = vpop.xlane.xlu0 %812
      %v814 = vsel %vm807, %v801, 0.0
      %815 = vadd.xlane.f32.xlu0 %v814
      %v816 = vpop.xlane.xlu0 %815
      %v817 = vsel %vm807, %v802, 0.0
      %818 = vadd.xlane.f32.xlu0 %v817
      %v819 = vpop.xlane.xlu0 %818
      %v820 = vsel %vm807, %v803, 0.0
      %821 = vadd.xlane.f32.xlu0 %v820
      %v822 = vpop.xlane.xlu0 %821
      %v823 = vsel %vm807, %v804, 0.0
      %824 = vadd.xlane.f32.xlu0 %v823
      %v825 = vpop.xlane.xlu0 %824
      %v826 = vsel %vm807, %v805, 0.0
      %827 = vadd.xlane.f32.xlu0 %v826
      %v828 = vpop.xlane.xlu0 %827
      %v829 = vsel %vm807, %v806, 0.0
      %830 = vadd.xlane.f32.xlu0 %v829
      %v831 = vpop.xlane.xlu0 %830
      %v832 = vrsqrt.pop %v810
      %v833 = vmul.f32 %v810, %v832
      %vm834 = vcmp.eq.f32.partialorder %v810, inf
      %v835 = vsel %vm834, %v810, %v833
      %vm836 = vcmp.eq.f32.partialorder %v810, 0.0
      %v837 = vand.u32 %v810, 2147483648
      %v838 = vsel %vm836, %v837, %v835
      %v839 = vrsqrt.pop %v813
      %v840 = vmul.f32 %v813, %v839
      %vm841 = vcmp.eq.f32.partialorder %v813, inf
      %v842 = vsel %vm841, %v813, %v840
      %vm843 = vcmp.eq.f32.partialorder %v813, 0.0
      %v844 = vand.u32 %v813, 2147483648
      %v845 = vsel %vm843, %v844, %v842
      %v846 = vrsqrt.pop %v816
      %v847 = vmul.f32 %v816, %v846
      %vm848 = vcmp.eq.f32.partialorder %v816, inf
      %v849 = vsel %vm848, %v816, %v847
      %vm850 = vcmp.eq.f32.partialorder %v816, 0.0
      %v851 = vand.u32 %v816, 2147483648
      %v852 = vsel %vm850, %v851, %v849
      %v853 = vrsqrt.pop %v819
      %v854 = vmul.f32 %v819, %v853
      %vm855 = vcmp.eq.f32.partialorder %v819, inf
      %v856 = vsel %vm855, %v819, %v854
      %vm857 = vcmp.eq.f32.partialorder %v819, 0.0
      %v858 = vand.u32 %v819, 2147483648
      %v859 = vsel %vm857, %v858, %v856
      %v860 = vrsqrt.pop %v822
      %v861 = vmul.f32 %v822, %v860
      %vm862 = vcmp.eq.f32.partialorder %v822, inf
      %v863 = vsel %vm862, %v822, %v861
      %vm864 = vcmp.eq.f32.partialorder %v822, 0.0
      %v865 = vand.u32 %v822, 2147483648
      %v866 = vsel %vm864, %v865, %v863
      %v867 = vrsqrt.pop %v825
      %v868 = vmul.f32 %v825, %v867
      %vm869 = vcmp.eq.f32.partialorder %v825, inf
      %v870 = vsel %vm869, %v825, %v868
      %vm871 = vcmp.eq.f32.partialorder %v825, 0.0
      %v872 = vand.u32 %v825, 2147483648
      %v873 = vsel %vm871, %v872, %v870
      %v874 = vrsqrt.pop %v828
      %v875 = vmul.f32 %v828, %v874
      %vm876 = vcmp.eq.f32.partialorder %v828, inf
      %v877 = vsel %vm876, %v828, %v875
      %vm878 = vcmp.eq.f32.partialorder %v828, 0.0
      %v879 = vand.u32 %v828, 2147483648
      %v880 = vsel %vm878, %v879, %v877
      %v881 = vrsqrt.pop %v831
      %v882 = vmul.f32 %v831, %v881
      %vm883 = vcmp.eq.f32.partialorder %v831, inf
      %v884 = vsel %vm883, %v831, %v882
      %vm885 = vcmp.eq.f32.partialorder %v831, 0.0
      %v886 = vand.u32 %v831, 2147483648
      %v887 = vsel %vm885, %v886, %v884
      %v888 = vmax.f32 %v838, 1e-12
      %v889 = vmax.f32 %v845, 1e-12
      %v890 = vmax.f32 %v852, 1e-12
      %v891 = vmax.f32 %v859, 1e-12
      %v892 = vmax.f32 %v866, 1e-12
      %v893 = vmax.f32 %v873, 1e-12
      %v894 = vmax.f32 %v880, 1e-12
      %v895 = vmax.f32 %v887, 1e-12
      %v896 = vrcp.pop %v888
      %v897 = vrcp.pop %v889
      %v898 = vrcp.pop %v890
      %v899 = vrcp.pop %v891
      %v900 = vrcp.pop %v892
      %v901 = vrcp.pop %v893
      %v902 = vrcp.pop %v894
      %v903 = vrcp.pop %v895
      %v904 = vmul.f32 %v791, %v896
      %v905 = vmul.f32 %v792, %v897
      %v906 = vmul.f32 %v793, %v898
      %v907 = vmul.f32 %v794, %v899
      %v908 = vmul.f32 %v795, %v900
      %v909 = vmul.f32 %v796, %v901
      %v910 = vmul.f32 %v797, %v902
      %v911 = vmul.f32 %v798, %v903
      %s912 = scalar_lea.vmem %s1, 128
      %v913 = vld [vmem:[%s912] sm:$0xf]
      %v914 = vld [vmem:[%s912 + $0x4] sm:$0xf]
      %v915 = vld [vmem:[%s912 + $0x8] sm:$0xf]
      %v916 = vld [vmem:[%s912 + $0xc] sm:$0xf]
      %v917 = vld [vmem:[%s912 + $0x10] sm:$0xf]
      %v918 = vld [vmem:[%s912 + $0x14] sm:$0xf]
      %v919 = vld [vmem:[%s912 + $0x18] sm:$0xf]
      %v920 = vld [vmem:[%s912 + $0x1c] sm:$0xf]
      %v921 = vld [vmem:[%s912 + $0x20] sm:$0xf]
      %v922 = vld [vmem:[%s912 + $0x24] sm:$0xf]
      %v923 = vld [vmem:[%s912 + $0x28] sm:$0xf]
      %v924 = vld [vmem:[%s912 + $0x2c] sm:$0xf]
      %v925 = vld [vmem:[%s912 + $0x30] sm:$0xf]
      %v926 = vld [vmem:[%s912 + $0x34] sm:$0xf]
      %v927 = vld [vmem:[%s912 + $0x38] sm:$0xf]
      %v928 = vld [vmem:[%s912 + $0x3c] sm:$0xf]
      %v929 = vld [vmem:[%s912 + $0x40] sm:$0xf]
      %v930 = vld [vmem:[%s912 + $0x44] sm:$0xf]
      %v931 = vld [vmem:[%s912 + $0x48] sm:$0xf]
      %v932 = vld [vmem:[%s912 + $0x4c] sm:$0xf]
      %v933 = vld [vmem:[%s912 + $0x50] sm:$0xf]
      %v934 = vld [vmem:[%s912 + $0x54] sm:$0xf]
      %v935 = vld [vmem:[%s912 + $0x58] sm:$0xf]
      %v936 = vld [vmem:[%s912 + $0x5c] sm:$0xf]
      %v937 = vld [vmem:[%s912 + $0x60] sm:$0xf]
      %v938 = vld [vmem:[%s912 + $0x64] sm:$0xf]
      %v939 = vld [vmem:[%s912 + $0x68] sm:$0xf]
      %v940 = vld [vmem:[%s912 + $0x6c] sm:$0xf]
      %v941 = vld [vmem:[%s912 + $0x70] sm:$0xf]
      %v942 = vld [vmem:[%s912 + $0x74] sm:$0xf]
      %v943 = vld [vmem:[%s912 + $0x78] sm:$0xf]
      %v944 = vld [vmem:[%s912 + $0x7c] sm:$0xf]
      %945 = vset.pattern.permute.xlu0 1
      %946 = vperm.xlu0 %945, %v306
      %v947 = vpop.permute.xlu0 %946
      %949 = vset.pattern.permute.xlu0 1
      %950 = vperm.xlu0 %949, %v307
      %v951 = vpop.permute.xlu0 %950
      %953 = vset.pattern.permute.xlu0 1
      %954 = vperm.xlu0 %953, %v308
      %v955 = vpop.permute.xlu0 %954
      %957 = vset.pattern.permute.xlu0 1
      %958 = vperm.xlu0 %957, %v309
      %v959 = vpop.permute.xlu0 %958
      %961 = vset.pattern.permute.xlu0 1
      %962 = vperm.xlu0 %961, %v310
      %v963 = vpop.permute.xlu0 %962
      %965 = vset.pattern.permute.xlu0 1
      %966 = vperm.xlu0 %965, %v311
      %v967 = vpop.permute.xlu0 %966
      %969 = vset.pattern.permute.xlu0 1
      %970 = vperm.xlu0 %969, %v312
      %v971 = vpop.permute.xlu0 %970
      %973 = vset.pattern.permute.xlu0 1
      %974 = vperm.xlu0 %973, %v313
      %v975 = vpop.permute.xlu0 %974
      %v977 = vlaneseq
      %v978 = vshrl.u32 %v977, 7
      %v979 = vsub.s32 1, %v978
      %v980 = vrot.slane %v314, %v979
      %v981 = vlaneseq
      %v982 = vshrl.u32 %v981, 7
      %v983 = vsub.s32 3, %v982
      %v984 = vrot.slane %v314, %v983
      %v987 = vlaneseq
      %v988 = vshrl.u32 %v987, 7
      %v989 = vsub.s32 1, %v988
      %v990 = vrot.slane %v980, %v989
      %v991 = vlaneseq
      %v992 = vshrl.u32 %v991, 7
      %v993 = vsub.s32 1, %v992
      %v994 = vrot.slane %v984, %v993
      %v995 = vadd.f32 %v947, %v990
      %v996 = vadd.f32 %v947, %v994
      %v997 = vadd.f32 %v951, %v990
      %v998 = vadd.f32 %v951, %v994
      %v999 = vadd.f32 %v955, %v990
      %v1000 = vadd.f32 %v955, %v994
      %v1001 = vadd.f32 %v959, %v990
      %v1002 = vadd.f32 %v959, %v994
      %v1003 = vadd.f32 %v963, %v990
      %v1004 = vadd.f32 %v963, %v994
      %v1005 = vadd.f32 %v967, %v990
      %v1006 = vadd.f32 %v967, %v994
      %v1007 = vadd.f32 %v971, %v990
      %v1008 = vadd.f32 %v971, %v994
      %v1009 = vadd.f32 %v975, %v990
      %v1010 = vadd.f32 %v975, %v994
      %vm1011 = vcmp.gt.f32.partialorder %v995, 0.0
      %vm1012 = vcmp.gt.f32.partialorder %v996, 0.0
      %vm1013 = vcmp.gt.f32.partialorder %v997, 0.0
      %vm1014 = vcmp.gt.f32.partialorder %v998, 0.0
      %vm1015 = vcmp.gt.f32.partialorder %v999, 0.0
      %vm1016 = vcmp.gt.f32.partialorder %v1000, 0.0
      %vm1017 = vcmp.gt.f32.partialorder %v1001, 0.0
      %vm1018 = vcmp.gt.f32.partialorder %v1002, 0.0
      %vm1019 = vcmp.gt.f32.partialorder %v1003, 0.0
      %vm1020 = vcmp.gt.f32.partialorder %v1004, 0.0
      %vm1021 = vcmp.gt.f32.partialorder %v1005, 0.0
      %vm1022 = vcmp.gt.f32.partialorder %v1006, 0.0
      %vm1023 = vcmp.gt.f32.partialorder %v1007, 0.0
      %vm1024 = vcmp.gt.f32.partialorder %v1008, 0.0
      %vm1025 = vcmp.gt.f32.partialorder %v1009, 0.0
      %vm1026 = vcmp.gt.f32.partialorder %v1010, 0.0
      %v1027 = vmul.f32 %v995, 0.2
      %v1028 = vmul.f32 %v996, 0.2
      %v1029 = vmul.f32 %v997, 0.2
      %v1030 = vmul.f32 %v998, 0.2
      %v1031 = vmul.f32 %v999, 0.2
      %v1032 = vmul.f32 %v1000, 0.2
      %v1033 = vmul.f32 %v1001, 0.2
      %v1034 = vmul.f32 %v1002, 0.2
      %v1035 = vmul.f32 %v1003, 0.2
      %v1036 = vmul.f32 %v1004, 0.2
      %v1037 = vmul.f32 %v1005, 0.2
      %v1038 = vmul.f32 %v1006, 0.2
      %v1039 = vmul.f32 %v1007, 0.2
      %v1040 = vmul.f32 %v1008, 0.2
      %v1041 = vmul.f32 %v1009, 0.2
      %v1042 = vmul.f32 %v1010, 0.2
      %v1043 = vsel %vm1011, %v995, %v1027
      %v1044 = vsel %vm1012, %v996, %v1028
      %v1045 = vsel %vm1013, %v997, %v1029
      %v1046 = vsel %vm1014, %v998, %v1030
      %v1047 = vsel %vm1015, %v999, %v1031
      %v1048 = vsel %vm1016, %v1000, %v1032
      %v1049 = vsel %vm1017, %v1001, %v1033
      %v1050 = vsel %vm1018, %v1002, %v1034
      %v1051 = vsel %vm1019, %v1003, %v1035
      %v1052 = vsel %vm1020, %v1004, %v1036
      %v1053 = vsel %vm1021, %v1005, %v1037
      %v1054 = vsel %vm1022, %v1006, %v1038
      %v1055 = vsel %vm1023, %v1007, %v1039
      %v1056 = vsel %vm1024, %v1008, %v1040
      %v1057 = vsel %vm1025, %v1009, %v1041
      %v1058 = vsel %vm1026, %v1010, %v1042
      %v1059 = vsel %vm290, %v1043, -9e+15
      %v1060 = vsel %vm291, %v1044, -9e+15
      %v1061 = vsel %vm292, %v1045, -9e+15
      %v1062 = vsel %vm293, %v1046, -9e+15
      %v1063 = vsel %vm294, %v1047, -9e+15
      %v1064 = vsel %vm295, %v1048, -9e+15
      %v1065 = vsel %vm296, %v1049, -9e+15
      %v1066 = vsel %vm297, %v1050, -9e+15
      %v1067 = vsel %vm298, %v1051, -9e+15
      %v1068 = vsel %vm299, %v1052, -9e+15
      %v1069 = vsel %vm300, %v1053, -9e+15
      %v1070 = vsel %vm301, %v1054, -9e+15
      %v1071 = vsel %vm302, %v1055, -9e+15
      %v1072 = vsel %vm303, %v1056, -9e+15
      %v1073 = vsel %vm304, %v1057, -9e+15
      %v1074 = vsel %vm305, %v1058, -9e+15
      %v1075 = vmax.f32 %v1059, %v1060
      %1076 = vmax.xlane.f32.xlu0 %v1075
      %v1077 = vpop.xlane.xlu0 %1076
      %v1078 = vmax.f32 %v1061, %v1062
      %1079 = vmax.xlane.f32.xlu0 %v1078
      %v1080 = vpop.xlane.xlu0 %1079
      %v1081 = vmax.f32 %v1063, %v1064
      %1082 = vmax.xlane.f32.xlu0 %v1081
      %v1083 = vpop.xlane.xlu0 %1082
      %v1084 = vmax.f32 %v1065, %v1066
      %1085 = vmax.xlane.f32.xlu0 %v1084
      %v1086 = vpop.xlane.xlu0 %1085
      %v1087 = vmax.f32 %v1067, %v1068
      %1088 = vmax.xlane.f32.xlu0 %v1087
      %v1089 = vpop.xlane.xlu0 %1088
      %v1090 = vmax.f32 %v1069, %v1070
      %1091 = vmax.xlane.f32.xlu0 %v1090
      %v1092 = vpop.xlane.xlu0 %1091
      %v1093 = vmax.f32 %v1071, %v1072
      %1094 = vmax.xlane.f32.xlu0 %v1093
      %v1095 = vpop.xlane.xlu0 %1094
      %v1096 = vmax.f32 %v1073, %v1074
      %1097 = vmax.xlane.f32.xlu0 %v1096
      %v1098 = vpop.xlane.xlu0 %1097
      %v1099 = vsub.f32 %v1059, %v1077
      %v1100 = vsub.f32 %v1060, %v1077
      %v1101 = vsub.f32 %v1061, %v1080
      %v1102 = vsub.f32 %v1062, %v1080
      %v1103 = vsub.f32 %v1063, %v1083
      %v1104 = vsub.f32 %v1064, %v1083
      %v1105 = vsub.f32 %v1065, %v1086
      %v1106 = vsub.f32 %v1066, %v1086
      %v1107 = vsub.f32 %v1067, %v1089
      %v1108 = vsub.f32 %v1068, %v1089
      %v1109 = vsub.f32 %v1069, %v1092
      %v1110 = vsub.f32 %v1070, %v1092
      %v1111 = vsub.f32 %v1071, %v1095
      %v1112 = vsub.f32 %v1072, %v1095
      %v1113 = vsub.f32 %v1073, %v1098
      %v1114 = vsub.f32 %v1074, %v1098
      %v1115 = vmul.f32 %v1099, 1.442695
      %v1116 = vpow.pop %v1115
      %v1117 = vmul.f32 %v1100, 1.442695
      %v1118 = vpow.pop %v1117
      %v1119 = vmul.f32 %v1101, 1.442695
      %v1120 = vpow.pop %v1119
      %v1121 = vmul.f32 %v1102, 1.442695
      %v1122 = vpow.pop %v1121
      %v1123 = vmul.f32 %v1103, 1.442695
      %v1124 = vpow.pop %v1123
      %v1125 = vmul.f32 %v1104, 1.442695
      %v1126 = vpow.pop %v1125
      %v1127 = vmul.f32 %v1105, 1.442695
      %v1128 = vpow.pop %v1127
      %v1129 = vmul.f32 %v1106, 1.442695
      %v1130 = vpow.pop %v1129
      %v1131 = vmul.f32 %v1107, 1.442695
      %v1132 = vpow.pop %v1131
      %v1133 = vmul.f32 %v1108, 1.442695
      %v1134 = vpow.pop %v1133
      %v1135 = vmul.f32 %v1109, 1.442695
      %v1136 = vpow.pop %v1135
      %v1137 = vmul.f32 %v1110, 1.442695
      %v1138 = vpow.pop %v1137
      %v1139 = vmul.f32 %v1111, 1.442695
      %v1140 = vpow.pop %v1139
      %v1141 = vmul.f32 %v1112, 1.442695
      %v1142 = vpow.pop %v1141
      %v1143 = vmul.f32 %v1113, 1.442695
      %v1144 = vpow.pop %v1143
      %v1145 = vmul.f32 %v1114, 1.442695
      %v1146 = vpow.pop %v1145
      %v1147 = vadd.f32 %v1116, %v1118
      %1148 = vadd.xlane.f32.xlu0 %v1147
      %v1149 = vpop.xlane.xlu0 %1148
      %v1150 = vadd.f32 %v1120, %v1122
      %1151 = vadd.xlane.f32.xlu0 %v1150
      %v1152 = vpop.xlane.xlu0 %1151
      %v1153 = vadd.f32 %v1124, %v1126
      %1154 = vadd.xlane.f32.xlu0 %v1153
      %v1155 = vpop.xlane.xlu0 %1154
      %v1156 = vadd.f32 %v1128, %v1130
      %1157 = vadd.xlane.f32.xlu0 %v1156
      %v1158 = vpop.xlane.xlu0 %1157
      %v1159 = vadd.f32 %v1132, %v1134
      %1160 = vadd.xlane.f32.xlu0 %v1159
      %v1161 = vpop.xlane.xlu0 %1160
      %v1162 = vadd.f32 %v1136, %v1138
      %1163 = vadd.xlane.f32.xlu0 %v1162
      %v1164 = vpop.xlane.xlu0 %1163
      %v1165 = vadd.f32 %v1140, %v1142
      %1166 = vadd.xlane.f32.xlu0 %v1165
      %v1167 = vpop.xlane.xlu0 %1166
      %v1168 = vadd.f32 %v1144, %v1146
      %1169 = vadd.xlane.f32.xlu0 %v1168
      %v1170 = vpop.xlane.xlu0 %1169
      %v1171 = vrcp.pop %v1149
      %v1172 = vrcp.pop %v1152
      %v1173 = vrcp.pop %v1155
      %v1174 = vrcp.pop %v1158
      %v1175 = vrcp.pop %v1161
      %v1176 = vrcp.pop %v1164
      %v1177 = vrcp.pop %v1167
      %v1178 = vrcp.pop %v1170
      %v1179 = vmul.f32 %v1116, %v1171
      %v1180 = vmul.f32 %v1118, %v1171
      %v1181 = vmul.f32 %v1120, %v1172
      %v1182 = vmul.f32 %v1122, %v1172
      %v1183 = vmul.f32 %v1124, %v1173
      %v1184 = vmul.f32 %v1126, %v1173
      %v1185 = vmul.f32 %v1128, %v1174
      %v1186 = vmul.f32 %v1130, %v1174
      %v1187 = vmul.f32 %v1132, %v1175
      %v1188 = vmul.f32 %v1134, %v1175
      %v1189 = vmul.f32 %v1136, %v1176
      %v1190 = vmul.f32 %v1138, %v1176
      %v1191 = vmul.f32 %v1140, %v1177
      %v1192 = vmul.f32 %v1142, %v1177
      %v1193 = vmul.f32 %v1144, %v1178
      %v1194 = vmul.f32 %v1146, %v1178
      %v1195 = vpack.c.bf16 %v1181, %v1179
      %v1196 = vpack.c.bf16 %v1182, %v1180
      %v1197 = vpack.c.bf16 %v1185, %v1183
      %v1198 = vpack.c.bf16 %v1186, %v1184
      %v1199 = vpack.c.bf16 %v1189, %v1187
      %v1200 = vpack.c.bf16 %v1190, %v1188
      %v1201 = vpack.c.bf16 %v1193, %v1191
      %v1202 = vpack.c.bf16 %v1194, %v1192
      %v1235 = vunpack.c.l.b16 %v913
      %v1236 = vunpack.c.l.b16 %v914
      %v1237 = vunpack.c.l.b16 %v915
      %v1238 = vunpack.c.l.b16 %v916
      %v1239 = vunpack.c.l.b16 %v917
      %v1240 = vunpack.c.l.b16 %v918
      %v1241 = vunpack.c.l.b16 %v919
      %v1242 = vunpack.c.l.b16 %v920
      %v1243 = vunpack.c.l.b16 %v921
      %v1244 = vunpack.c.l.b16 %v922
      %v1245 = vunpack.c.l.b16 %v923
      %v1246 = vunpack.c.l.b16 %v924
      %v1247 = vunpack.c.l.b16 %v925
      %v1248 = vunpack.c.l.b16 %v926
      %v1249 = vunpack.c.l.b16 %v927
      %v1250 = vunpack.c.l.b16 %v928
      %v1251 = vunpack.c.l.b16 %v929
      %v1252 = vunpack.c.l.b16 %v930
      %v1253 = vunpack.c.l.b16 %v931
      %v1254 = vunpack.c.l.b16 %v932
      %v1255 = vunpack.c.l.b16 %v933
      %v1256 = vunpack.c.l.b16 %v934
      %v1257 = vunpack.c.l.b16 %v935
      %v1258 = vunpack.c.l.b16 %v936
      %v1259 = vunpack.c.l.b16 %v937
      %v1260 = vunpack.c.l.b16 %v938
      %v1261 = vunpack.c.l.b16 %v939
      %v1262 = vunpack.c.l.b16 %v940
      %v1263 = vunpack.c.l.b16 %v941
      %v1264 = vunpack.c.l.b16 %v942
      %v1265 = vunpack.c.l.b16 %v943
      %v1266 = vunpack.c.l.b16 %v944
      %v1267 = vpack.c.b16 %v1236, %v1235
      %v1268 = vpack.c.b16 %v1238, %v1237
      %v1269 = vpack.c.b16 %v1240, %v1239
      %v1270 = vpack.c.b16 %v1242, %v1241
      %v1271 = vpack.c.b16 %v1244, %v1243
      %v1272 = vpack.c.b16 %v1246, %v1245
      %v1273 = vpack.c.b16 %v1248, %v1247
      %v1274 = vpack.c.b16 %v1250, %v1249
      %v1275 = vpack.c.b16 %v1252, %v1251
      %v1276 = vpack.c.b16 %v1254, %v1253
      %v1277 = vpack.c.b16 %v1256, %v1255
      %v1278 = vpack.c.b16 %v1258, %v1257
      %v1279 = vpack.c.b16 %v1260, %v1259
      %v1280 = vpack.c.b16 %v1262, %v1261
      %v1281 = vpack.c.b16 %v1264, %v1263
      %v1282 = vpack.c.b16 %v1266, %v1265
      %1299 = vmatprep.subr.bf16.mxu0 0
      %1300 = vmatpush1.bf16.msra.mxu0 %v1267
      %1301 = vmatprep.subr.bf16.mxu0 0
      %1302 = vmatpush1.bf16.msra.mxu0 %v1268
      %1303 = vmatprep.subr.bf16.mxu0 0
      %1304 = vmatpush1.bf16.msra.mxu0 %v1269
      %1305 = vmatprep.subr.bf16.mxu0 0
      %1306 = vmatpush1.bf16.msra.mxu0 %v1270
      %1307 = vmatprep.subr.bf16.mxu0 0
      %1308 = vmatpush1.bf16.msra.mxu0 %v1271
      %1309 = vmatprep.subr.bf16.mxu0 0
      %1310 = vmatpush1.bf16.msra.mxu0 %v1272
      %1311 = vmatprep.subr.bf16.mxu0 0
      %1312 = vmatpush1.bf16.msra.mxu0 %v1273
      %1313 = vmatprep.subr.bf16.mxu0 0
      %1314 = vmatpush1.bf16.msra.mxu0 %v1274
      %1315 = vmatprep.subr.bf16.mxu0 0
      %1316 = vmatpush1.bf16.msra.mxu0 %v1275
      %1317 = vmatprep.subr.bf16.mxu0 0
      %1318 = vmatpush1.bf16.msra.mxu0 %v1276
      %1319 = vmatprep.subr.bf16.mxu0 0
      %1320 = vmatpush1.bf16.msra.mxu0 %v1277
      %1321 = vmatprep.subr.bf16.mxu0 0
      %1322 = vmatpush1.bf16.msra.mxu0 %v1278
      %1323 = vmatprep.subr.bf16.mxu0 0
      %1324 = vmatpush1.bf16.msra.mxu0 %v1279
      %1325 = vmatprep.subr.bf16.mxu0 0
      %1326 = vmatpush1.bf16.msra.mxu0 %v1280
      %1327 = vmatprep.subr.bf16.mxu0 0
      %1328 = vmatpush1.bf16.msra.mxu0 %v1281
      %1329 = vmatprep.subr.bf16.mxu0 0
      %1330 = vmatpush1.bf16.msra.mxu0 %v1282
      %1331 = vmatprep.mubr.bf16.mxu0 %v1196
      %1332 = vmatmul.mubr.bf16.gmra.mrb[0].mxu0 %v1195
      %v1333 = vpop.f32.mrb[0].mxu0
      %v1334 = vadd.f32 0.0, %v1333
      %v1335 = vpop.f32.mrb[0].mxu0
      %v1336 = vpop.f32.mrb[0].mxu0
      %v1337 = vadd.f32 0.0, %v1336
      %v1338 = vpop.f32.mrb[0].mxu0
      %1339 = vmatprep.mubr.bf16.mxu0 %v1198
      %1340 = vmatmul.mubr.bf16.gmra.mrb[0].mxu0 %v1197
      %v1341 = vpop.f32.mrb[0].mxu0
      %v1342 = vadd.f32 0.0, %v1341
      %v1343 = vpop.f32.mrb[0].mxu0
      %v1344 = vpop.f32.mrb[0].mxu0
      %v1345 = vadd.f32 0.0, %v1344
      %v1346 = vpop.f32.mrb[0].mxu0
      %1347 = vmatprep.mubr.bf16.mxu0 %v1200
      %1348 = vmatmul.mubr.bf16.gmra.mrb[0].mxu0 %v1199
      %v1349 = vpop.f32.mrb[0].mxu0
      %v1350 = vadd.f32 0.0, %v1349
      %v1351 = vpop.f32.mrb[0].mxu0
      %v1352 = vpop.f32.mrb[0].mxu0
      %v1353 = vadd.f32 0.0, %v1352
      %v1354 = vpop.f32.mrb[0].mxu0
      %1355 = vmatprep.mubr.bf16.mxu0 %v1202
      %1356 = vmatmul.mubr.bf16.gmra.mrb[0].mxu0 %v1201
      %v1357 = vpop.f32.mrb[0].mxu0
      %v1358 = vadd.f32 0.0, %v1357
      %v1359 = vpop.f32.mrb[0].mxu0
      %v1360 = vpop.f32.mrb[0].mxu0
      %v1361 = vadd.f32 0.0, %v1360
      %v1362 = vpop.f32.mrb[0].mxu0
      %1363 = vdwg.mxu0
      %vm1364 = vcmp.gt.f32.partialorder %v1334, 0.0
      %vm1365 = vcmp.gt.f32.partialorder %v1337, 0.0
      %vm1366 = vcmp.gt.f32.partialorder %v1342, 0.0
      %vm1367 = vcmp.gt.f32.partialorder %v1345, 0.0
      %vm1368 = vcmp.gt.f32.partialorder %v1350, 0.0
      %vm1369 = vcmp.gt.f32.partialorder %v1353, 0.0
      %vm1370 = vcmp.gt.f32.partialorder %v1358, 0.0
      %vm1371 = vcmp.gt.f32.partialorder %v1361, 0.0
      %v1372 = vmul.f32 %v1334, 0.2
      %v1373 = vmul.f32 %v1337, 0.2
      %v1374 = vmul.f32 %v1342, 0.2
      %v1375 = vmul.f32 %v1345, 0.2
      %v1376 = vmul.f32 %v1350, 0.2
      %v1377 = vmul.f32 %v1353, 0.2
      %v1378 = vmul.f32 %v1358, 0.2
      %v1379 = vmul.f32 %v1361, 0.2
      %v1380 = vsel %vm1364, %v1334, %v1372
      %v1381 = vsel %vm1365, %v1337, %v1373
      %v1382 = vsel %vm1366, %v1342, %v1374
      %v1383 = vsel %vm1367, %v1345, %v1375
      %v1384 = vsel %vm1368, %v1350, %v1376
      %v1385 = vsel %vm1369, %v1353, %v1377
      %v1386 = vsel %vm1370, %v1358, %v1378
      %v1387 = vsel %vm1371, %v1361, %v1379
      %v1388 = vmul.f32 %v1380, %v1380
      %v1389 = vmul.f32 %v1381, %v1381
      %v1390 = vmul.f32 %v1382, %v1382
      %v1391 = vmul.f32 %v1383, %v1383
      %v1392 = vmul.f32 %v1384, %v1384
      %v1393 = vmul.f32 %v1385, %v1385
      %v1394 = vmul.f32 %v1386, %v1386
      %v1395 = vmul.f32 %v1387, %v1387
      %v1396 = vsel %vm807, %v1388, 0.0
      %1397 = vadd.xlane.f32.xlu0 %v1396
      %v1398 = vpop.xlane.xlu0 %1397
      %v1399 = vsel %vm807, %v1389, 0.0
      %1400 = vadd.xlane.f32.xlu0 %v1399
      %v1401 = vpop.xlane.xlu0 %1400
      %v1402 = vsel %vm807, %v1390, 0.0
      %1403 = vadd.xlane.f32.xlu0 %v1402
      %v1404 = vpop.xlane.xlu0 %1403
      %v1405 = vsel %vm807, %v1391, 0.0
      %1406 = vadd.xlane.f32.xlu0 %v1405
      %v1407 = vpop.xlane.xlu0 %1406
      %v1408 = vsel %vm807, %v1392, 0.0
      %1409 = vadd.xlane.f32.xlu0 %v1408
      %v1410 = vpop.xlane.xlu0 %1409
      %v1411 = vsel %vm807, %v1393, 0.0
      %1412 = vadd.xlane.f32.xlu0 %v1411
      %v1413 = vpop.xlane.xlu0 %1412
      %v1414 = vsel %vm807, %v1394, 0.0
      %1415 = vadd.xlane.f32.xlu0 %v1414
      %v1416 = vpop.xlane.xlu0 %1415
      %v1417 = vsel %vm807, %v1395, 0.0
      %1418 = vadd.xlane.f32.xlu0 %v1417
      %v1419 = vpop.xlane.xlu0 %1418
      %v1420 = vrsqrt.pop %v1398
      %v1421 = vmul.f32 %v1398, %v1420
      %vm1422 = vcmp.eq.f32.partialorder %v1398, inf
      %v1423 = vsel %vm1422, %v1398, %v1421
      %vm1424 = vcmp.eq.f32.partialorder %v1398, 0.0
      %v1425 = vand.u32 %v1398, 2147483648
      %v1426 = vsel %vm1424, %v1425, %v1423
      %v1427 = vrsqrt.pop %v1401
      %v1428 = vmul.f32 %v1401, %v1427
      %vm1429 = vcmp.eq.f32.partialorder %v1401, inf
      %v1430 = vsel %vm1429, %v1401, %v1428
      %vm1431 = vcmp.eq.f32.partialorder %v1401, 0.0
      %v1432 = vand.u32 %v1401, 2147483648
      %v1433 = vsel %vm1431, %v1432, %v1430
      %v1434 = vrsqrt.pop %v1404
      %v1435 = vmul.f32 %v1404, %v1434
      %vm1436 = vcmp.eq.f32.partialorder %v1404, inf
      %v1437 = vsel %vm1436, %v1404, %v1435
      %vm1438 = vcmp.eq.f32.partialorder %v1404, 0.0
      %v1439 = vand.u32 %v1404, 2147483648
      %v1440 = vsel %vm1438, %v1439, %v1437
      %v1441 = vrsqrt.pop %v1407
      %v1442 = vmul.f32 %v1407, %v1441
      %vm1443 = vcmp.eq.f32.partialorder %v1407, inf
      %v1444 = vsel %vm1443, %v1407, %v1442
      %vm1445 = vcmp.eq.f32.partialorder %v1407, 0.0
      %v1446 = vand.u32 %v1407, 2147483648
      %v1447 = vsel %vm1445, %v1446, %v1444
      %v1448 = vrsqrt.pop %v1410
      %v1449 = vmul.f32 %v1410, %v1448
      %vm1450 = vcmp.eq.f32.partialorder %v1410, inf
      %v1451 = vsel %vm1450, %v1410, %v1449
      %vm1452 = vcmp.eq.f32.partialorder %v1410, 0.0
      %v1453 = vand.u32 %v1410, 2147483648
      %v1454 = vsel %vm1452, %v1453, %v1451
      %v1455 = vrsqrt.pop %v1413
      %v1456 = vmul.f32 %v1413, %v1455
      %vm1457 = vcmp.eq.f32.partialorder %v1413, inf
      %v1458 = vsel %vm1457, %v1413, %v1456
      %vm1459 = vcmp.eq.f32.partialorder %v1413, 0.0
      %v1460 = vand.u32 %v1413, 2147483648
      %v1461 = vsel %vm1459, %v1460, %v1458
      %v1462 = vrsqrt.pop %v1416
      %v1463 = vmul.f32 %v1416, %v1462
      %vm1464 = vcmp.eq.f32.partialorder %v1416, inf
      %v1465 = vsel %vm1464, %v1416, %v1463
      %vm1466 = vcmp.eq.f32.partialorder %v1416, 0.0
      %v1467 = vand.u32 %v1416, 2147483648
      %v1468 = vsel %vm1466, %v1467, %v1465
      %v1469 = vrsqrt.pop %v1419
      %v1470 = vmul.f32 %v1419, %v1469
      %vm1471 = vcmp.eq.f32.partialorder %v1419, inf
      %v1472 = vsel %vm1471, %v1419, %v1470
      %vm1473 = vcmp.eq.f32.partialorder %v1419, 0.0
      %v1474 = vand.u32 %v1419, 2147483648
      %v1475 = vsel %vm1473, %v1474, %v1472
      %v1476 = vmax.f32 %v1426, 1e-12
      %v1477 = vmax.f32 %v1433, 1e-12
      %v1478 = vmax.f32 %v1440, 1e-12
      %v1479 = vmax.f32 %v1447, 1e-12
      %v1480 = vmax.f32 %v1454, 1e-12
      %v1481 = vmax.f32 %v1461, 1e-12
      %v1482 = vmax.f32 %v1468, 1e-12
      %v1483 = vmax.f32 %v1475, 1e-12
      %v1484 = vrcp.pop %v1476
      %v1485 = vrcp.pop %v1477
      %v1486 = vrcp.pop %v1478
      %v1487 = vrcp.pop %v1479
      %v1488 = vrcp.pop %v1480
      %v1489 = vrcp.pop %v1481
      %v1490 = vrcp.pop %v1482
      %v1491 = vrcp.pop %v1483
      %v1492 = vmul.f32 %v1380, %v1484
      %v1493 = vmul.f32 %v1381, %v1485
      %v1494 = vmul.f32 %v1382, %v1486
      %v1495 = vmul.f32 %v1383, %v1487
      %v1496 = vmul.f32 %v1384, %v1488
      %v1497 = vmul.f32 %v1385, %v1489
      %v1498 = vmul.f32 %v1386, %v1490
      %v1499 = vmul.f32 %v1387, %v1491
      %v1500 = vadd.f32 %v904, %v1492
      %v1501 = vadd.f32 %v905, %v1493
      %v1502 = vadd.f32 %v906, %v1494
      %v1503 = vadd.f32 %v907, %v1495
      %v1504 = vadd.f32 %v908, %v1496
      %v1505 = vadd.f32 %v909, %v1497
      %v1506 = vadd.f32 %v910, %v1498
      %v1507 = vadd.f32 %v911, %v1499
      %v1508 = vmul.f32 %v1500, 0.5
      %v1509 = vmul.f32 %v1501, 0.5
      %v1510 = vmul.f32 %v1502, 0.5
      %v1511 = vmul.f32 %v1503, 0.5
      %v1512 = vmul.f32 %v1504, 0.5
      %v1513 = vmul.f32 %v1505, 0.5
      %v1514 = vmul.f32 %v1506, 0.5
      %v1515 = vmul.f32 %v1507, 0.5
      %v1516 = vld [vmem:[%s4] sm:$0x1]
      %v1518 = vlaneseq
      %v1519 = vshrl.u32 %v1518, 7
      %v1520 = vsub.s32 0, %v1519
      %v1521 = vrot.slane %v1516, %v1520
      %v1523 = vadd.f32 %v1508, %v1521
      %v1524 = vadd.f32 %v1509, %v1521
      %v1525 = vadd.f32 %v1510, %v1521
      %v1526 = vadd.f32 %v1511, %v1521
      %v1527 = vadd.f32 %v1512, %v1521
      %v1528 = vadd.f32 %v1513, %v1521
      %v1529 = vadd.f32 %v1514, %v1521
      %v1530 = vadd.f32 %v1515, %v1521
      %1531 = vst.msk [vmem:[%s251] sm:$0xff] %vm807, %v1523
      %1532 = vst.msk [vmem:[%s251 + $0x8] sm:$0xff] %vm807, %v1524
      %1533 = vst.msk [vmem:[%s251 + $0x10] sm:$0xff] %vm807, %v1525
      %1534 = vst.msk [vmem:[%s251 + $0x18] sm:$0xff] %vm807, %v1526
      %1535 = vst.msk [vmem:[%s251 + $0x20] sm:$0xff] %vm807, %v1527
      %1536 = vst.msk [vmem:[%s251 + $0x28] sm:$0xff] %vm807, %v1528
      %1537 = vst.msk [vmem:[%s251 + $0x30] sm:$0xff] %vm807, %v1529
      %1538 = vst.msk [vmem:[%s251 + $0x38] sm:$0xff] %vm807, %v1530
      %s1539 = smul.u32 8, %s16
      %p1540 = scmp.lt.s32.totalorder %s1539, 31
      %s1541 = scalar_select %p1540, %s1539, 31
      %s1542 = smul.addr %s1541, 8
      %s1543 = scalar_lea.vmem %s5, %s1542
      // Predicated region
      $region41: #{forward.8} parent=39 // pred_check
        %p1544 = pneg %p149
      $region42: #{forward.8} parent=39 // pred_check_branch
        %1546 = sbr.rel (%p1544) target = $region44
      $region43: #{forward.8} parent=39 // pred_region
        %s1547 = smul.u32 8, %s16
      $region44: #{forward.8} parent=39 // pred_fallthru
        _
    $region40: #{forward.8} parent=5 // pred_fallthru
      _
    %p1548 = scmp.le.s32.totalorder 2, %s11
    // Predicated region
    $region45: #{forward.8} parent=5 // pred_check
      %p1549 = pneg %p1548
    $region46: #{forward.8} parent=5 // pred_check_branch
      %1551 = sbr.rel (%p1549) target = $region48
    $region47: #{forward.8} parent=5 // pred_region
      %s1552 = ssub.s32 %s11, 2
      // Predicated region
      $region49: #{forward.8} parent=47 // pred_check
        %p1553 = pneg %p155
      $region50: #{forward.8} parent=47 // pred_check_branch
        %1555 = sbr.rel (%p1553) target = $region52
      $region51: #{forward.8} parent=47 // pred_region
        %s1556 = smul.u32 8, %s17
        %p1557 = scmp.lt.s32.totalorder %s1556, 31
        %s1558 = scalar_select %p1557, %s1556, 31
        %s1559 = smul.addr %s1558, 8
        %s1560 = scalar_lea.vmem %s5, %s1559
      $region52: #{forward.8} parent=47 // pred_fallthru
        _
    $region48: #{forward.8} parent=5 // pred_fallthru
      _
  $region6: #{forward.8} parent=0 // loop_footer
    %s15 = sadd.s32 1, %s11
  $region7: #{forward.8} parent=0 // loop_footer_branch
    %10 = sbr.rel target = $region3
  $region8: #{forward.8} parent=0 // loop_exit
    _

</llo_original>
